<compile_context>
chip_gen: v7x
topology: tpu7x:2x2x1
jax: 0.10.0
libtpu: 0.0.40
codegen_flags: <defaults>
</compile_context>

<pallas_src>
import functools
import math

import jax
import jax.numpy as jnp
from jax.experimental import pallas as pl
from jax.experimental.pallas import tpu as pltpu

# ----- small hyper-parameters consistent with the module (scaled down) -----
VOCAB = 65           # tiny-shakespeare style vocab
VOCAB_PAD = 128      # lane-dense padded lm_head width
N_EMBD = 32          # d_model
N_LAYER = 2
BLOCK_SIZE = 8       # T
BATCH = 2
D_STATE = 16
D_CONV = 4
EXPAND = 2
D_INNER = EXPAND * N_EMBD
DT_RANK = math.ceil(N_EMBD / 16)


def _silu(x):
    # x * sigmoid(x); sigmoid expressed via tanh -> transcendental goes to the EUP slot.
    return x * (0.5 * (jnp.tanh(0.5 * x) + 1.0))


def _softplus(x):
    # numerically stable softplus (exp/log on EUP)
    return jnp.maximum(x, 0.0) + jnp.log(1.0 + jnp.exp(-jnp.abs(x)))


# ---------------------------------------------------------------------------
# Fused Pallas kernel: one grid program = one sequence (T rows).
#   tok+pos activation -> N_LAYER residual Mamba blocks -> lm_head (padded lanes)
# ---------------------------------------------------------------------------
def fused_forward_kernel(
    x_ref,
    norm_w_ref, in_w_ref, conv_w_ref, conv_b_ref,
    xproj_w_ref, dt_w_ref, dt_b_ref,
    a_logT_ref, d_w_ref, out_w_ref,
    lm_w_ref, lm_b_ref,
    o_ref,
    *, n_layer, seq, d_inner, d_state, d_conv, dt_rank):
    x = x_ref[...].astype(jnp.float32)                    # (T, D) : one sequence

    # Row-position iota, hoisted once (conv causal masks + scan row placement).
    tpos = jax.lax.broadcasted_iota(jnp.int32, (seq, d_inner), 0)

    for l in range(n_layer):                               # static unroll over layers
        # ---- RMSNorm (ResidualBlock.norm) ----
        ms = jnp.mean(x * x, axis=-1, keepdims=True)
        xn = x * jax.lax.rsqrt(ms + 1e-5) * norm_w_ref[l]  # (T, D)

        # ---- in_proj: single lane-dense (D, 2*d_inner)=128-lane matmul, lane split ----
        xr = jnp.dot(xn, in_w_ref[l], preferred_element_type=jnp.float32)  # (T, 128)
        xin = xr[:, :d_inner]                              # (T, d_inner)
        res = xr[:, d_inner:]                              # (T, d_inner)

        # ---- depthwise causal conv1d: sublane roll + causal mask (no MXU) ----
        conv_w = conv_w_ref[l]                             # (d_conv, d_inner)
        acc = conv_b_ref[l] + conv_w[d_conv - 1:d_conv, :] * xin          # shift 0 term
        for k in range(d_conv - 1):
            s = d_conv - 1 - k                             # shift s in {1..d_conv-1}
            shifted = jnp.where(tpos >= s, pltpu.roll(xin, s, 0), 0.0)
            acc = acc + conv_w[k:k + 1, :] * shifted
        xc = _silu(acc)                                    # (T, d_inner)

        # ---- x_proj: single (d_inner, dt_rank+2*d_state) matmul, lane split ----
        xp = jnp.dot(xc, xproj_w_ref[l], preferred_element_type=jnp.float32)  # (T, 34)
        dt_low = xp[:, :dt_rank]
        Bm = xp[:, dt_rank:dt_rank + d_state]              # (T, d_state)
        Cm = xp[:, dt_rank + d_state:]                     # (T, d_state)
        delta = _softplus(
            jnp.dot(dt_low, dt_w_ref[l], preferred_element_type=jnp.float32)
            + dt_b_ref[l])                                 # (T, d_inner)

        A_T = -jnp.exp(a_logT_ref[l])                      # (d_state, d_inner)

        # ---- hoist transcendentals out of the recurrence ----
        dA = jnp.exp(delta[:, None, :] * A_T[None, :, :])  # (T, d_state, d_inner)
        du = delta * xc                                    # (T, d_inner)
        BmT = Bm.T                                         # (d_state, T) - one tiny transpose
        CmT = Cm.T                                         # (d_state, T)

        # ---- selective scan: pure VPU FMAs + one sublane reduce per step ----
        h = jnp.zeros((d_state, d_inner), jnp.float32)
        y = jnp.zeros((seq, d_inner), jnp.float32)
        for t in range(seq):
            h = dA[t] * h + BmT[:, t:t + 1] * du[t:t + 1, :]
            y_row = jnp.sum(CmT[:, t:t + 1] * h, axis=0, keepdims=True)   # (1, d_inner)
            y = jnp.where(tpos == t, y_row, y)             # register-resident row insert

        y = y + xc * d_w_ref[l]                            # skip term u * D
        y = y * _silu(res)                                 # SiLU gate
        x = x + jnp.dot(y, out_w_ref[l],
                        preferred_element_type=jnp.float32)  # out_proj + residual

    # ---- lm_head, padded to 128 lanes -> unmasked lane-dense output stores ----
    o_ref[...] = (jnp.dot(x, lm_w_ref[...], preferred_element_type=jnp.float32)
                  + lm_b_ref[...]).astype(o_ref.dtype)


# ---------------------------------------------------------------------------
# Parameter init (deterministic, mirrors nn.Module __init__ / _init_weights)
# Linear & Embedding weights ~ N(0, 0.02), biases = 0, RMSNorm weight = 1,
# A_log = log(1..d_state), D = 1.
# ---------------------------------------------------------------------------
def init_params(key):
    std = 0.02
    keys = jax.random.split(key, 3 + 5 * N_LAYER)
    tok_emb = std * jax.random.normal(keys[0], (VOCAB, N_EMBD), jnp.float32)
    pos_emb = std * jax.random.normal(keys[1], (BLOCK_SIZE, N_EMBD), jnp.float32)
    lm_w = std * jax.random.normal(keys[2], (N_EMBD, VOCAB), jnp.float32)
    lm_w_pad = jnp.zeros((N_EMBD, VOCAB_PAD), jnp.float32).at[:, :VOCAB].set(lm_w)
    lm_b_pad = jnp.zeros((1, VOCAB_PAD), jnp.float32)

    layers = []
    kidx = 3
    for _ in range(N_LAYER):
        k = keys[kidx:kidx + 5]
        kidx += 5
        layers.append(dict(
            norm_w=jnp.ones((1, N_EMBD), jnp.float32),
            # fused in_proj weight (x and z halves) -> single 128-lane matmul in kernel
            in_w=std * jax.random.normal(k[0], (N_EMBD, 2 * D_INNER), jnp.float32),
            conv_w=std * jax.random.normal(k[1], (D_CONV, D_INNER), jnp.float32),
            conv_b=jnp.zeros((1, D_INNER), jnp.float32),
            # fused x_proj weight (dt | B | C) -> single matmul in kernel
            xproj_w=std * jax.random.normal(
                k[2], (D_INNER, DT_RANK + 2 * D_STATE), jnp.float32),
            dt_w=std * jax.random.normal(k[3], (DT_RANK, D_INNER), jnp.float32),
            dt_b=jnp.zeros((1, D_INNER), jnp.float32),
            # A_log stored pre-transposed: (d_state, d_inner) so d_inner sits on lanes
            a_logT=jnp.log(jnp.tile(
                jnp.arange(1, D_STATE + 1, dtype=jnp.float32)[:, None], (1, D_INNER))),
            d_w=jnp.ones((1, D_INNER), jnp.float32),
            out_w=std * jax.random.normal(k[4], (D_INNER, N_EMBD), jnp.float32),
        ))
    stacked = {name: jnp.stack([lp[name] for lp in layers]) for name in layers[0]}
    return {"tok_emb": tok_emb, "pos_emb": pos_emb,
            "lm_w_pad": lm_w_pad, "lm_b_pad": lm_b_pad, "layers": stacked}


@jax.jit
def forward(idx, params):
    B, T = idx.shape
    # Embedding gather stays in plain JAX (data-dependent gather = glue); everything
    # else (both residual Mamba blocks + lm_head) runs in ONE fused Pallas kernel,
    # grid-parallel over the batch dimension.
    tok = jnp.take(params["tok_emb"], idx, axis=0)               # (B, T, D)
    x = (tok + params["pos_emb"][:T][None, :, :]).reshape(B * T, N_EMBD)

    L = params["layers"]
    weights = [L["norm_w"], L["in_w"], L["conv_w"], L["conv_b"], L["xproj_w"],
               L["dt_w"], L["dt_b"], L["a_logT"], L["d_w"], L["out_w"],
               params["lm_w_pad"], params["lm_b_pad"]]

    def wspec(a):
        nd = a.ndim
        return pl.BlockSpec(a.shape, lambda b, _nd=nd: (0,) * _nd)  # full block, resident

    kern = functools.partial(
        fused_forward_kernel, n_layer=N_LAYER, seq=T,
        d_inner=D_INNER, d_state=D_STATE, d_conv=D_CONV, dt_rank=DT_RANK)

    logits_pad = pl.pallas_call(
        kern,
        out_shape=jax.ShapeDtypeStruct((B * T, VOCAB_PAD), jnp.float32),
        grid=(B,),
        in_specs=[pl.BlockSpec((T, N_EMBD), lambda b: (b, 0))] + [wspec(a) for a in weights],
        out_specs=pl.BlockSpec((T, VOCAB_PAD), lambda b: (b, 0)),
        compiler_params=pltpu.CompilerParams(dimension_semantics=("parallel",)),
    )(x, *weights)
    return logits_pad[:, :VOCAB].reshape(B, T, VOCAB)
    # TODO(synk): cross-entropy loss / generate() multinomial sampling not implemented
    # (forward is called with targets=None here).


# ---------------------------------------------------------------------------
# Pure-JAX reference (same math, standard layout) for correctness checking.
# ---------------------------------------------------------------------------
def reference_forward(idx, params):
    B, T = idx.shape
    L = params["layers"]
    x = jnp.take(params["tok_emb"], idx, axis=0) + params["pos_emb"][:T][None, :, :]
    for l in range(N_LAYER):
        ms = jnp.mean(x * x, axis=-1, keepdims=True)
        xn = x * jax.lax.rsqrt(ms + 1e-5) * L["norm_w"][l]
        xr = xn @ L["in_w"][l]
        xin, res = xr[..., :D_INNER], xr[..., D_INNER:]
        xp = jnp.pad(xin, ((0, 0), (D_CONV - 1, 0), (0, 0)))
        acc = L["conv_b"][l]
        for k in range(D_CONV):
            acc = acc + L["conv_w"][l][k] * xp[:, k:k + T, :]
        xc = _silu(acc)
        xpj = xc @ L["xproj_w"][l]
        dt_low = xpj[..., :DT_RANK]
        Bm = xpj[..., DT_RANK:DT_RANK + D_STATE]
        Cm = xpj[..., DT_RANK + D_STATE:]
        delta = _softplus(dt_low @ L["dt_w"][l] + L["dt_b"][l])
        A = -jnp.exp(L["a_logT"][l]).T                      # (d_inner, d_state)
        h = jnp.zeros((B, D_INNER, D_STATE), jnp.float32)
        ys = []
        for t in range(T):
            dA = jnp.exp(delta[:, t, :, None] * A[None])
            dBu = delta[:, t, :, None] * Bm[:, t, None, :] * xc[:, t, :, None]
            h = dA * h + dBu
            ys.append(jnp.einsum("bdn,bn->bd", h, Cm[:, t]))
        y = jnp.stack(ys, axis=1) + xc * L["d_w"][l]
        y = y * _silu(res)
        x = x + y @ L["out_w"][l]
    return x @ params["lm_w_pad"][:, :VOCAB] + params["lm_b_pad"][:, :VOCAB]


if __name__ == "__main__":
    key = jax.random.PRNGKey(0)
    pkey, ikey = jax.random.split(key)
    params = init_params(pkey)
    idx = jax.random.randint(ikey, (BATCH, BLOCK_SIZE), 0, VOCAB, dtype=jnp.int32)

    logits = forward(idx, params)
    jax.block_until_ready(logits)
    assert logits.shape == (BATCH, BLOCK_SIZE, VOCAB)
    assert bool(jnp.all(jnp.isfinite(logits)))

    ref = reference_forward(idx, params)
    assert bool(jnp.allclose(logits, ref, atol=1e-4, rtol=1e-2)), (
        "max |diff| = %e" % float(jnp.max(jnp.abs(logits - ref))))
    print("KERNEL_OK")
</pallas_src>

<mosaic_0001>
module attributes {stable_mosaic.version = 11 : i64} {
  func.func @fused_forward_kernel(%arg0: i32, %arg1: memref<8x32xf32, #tpu.memory_space<vmem>>, %arg2: memref<2x1x32xf32, #tpu.memory_space<vmem>>, %arg3: memref<2x32x128xf32, #tpu.memory_space<vmem>>, %arg4: memref<2x4x64xf32, #tpu.memory_space<vmem>>, %arg5: memref<2x1x64xf32, #tpu.memory_space<vmem>>, %arg6: memref<2x64x34xf32, #tpu.memory_space<vmem>>, %arg7: memref<2x2x64xf32, #tpu.memory_space<vmem>>, %arg8: memref<2x1x64xf32, #tpu.memory_space<vmem>>, %arg9: memref<2x16x64xf32, #tpu.memory_space<vmem>>, %arg10: memref<2x1x64xf32, #tpu.memory_space<vmem>>, %arg11: memref<2x64x32xf32, #tpu.memory_space<vmem>>, %arg12: memref<32x128xf32, #tpu.memory_space<vmem>>, %arg13: memref<1x128xf32, #tpu.memory_space<vmem>>, %arg14: memref<8x128xf32, #tpu.memory_space<vmem>>) attributes {dimension_semantics = [#tpu.dimension_semantics<parallel>], iteration_bounds = array<i64: 2>, scalar_prefetch = 0 : i64, scratch_operands = 0 : i64, tpu.core_type = #tpu.core_type<tc>, window_params = [{transform_indices = @transform_0, window_bounds = array<i64: 8, 32>}, {pipeline_mode = #tpu.pipeline_mode<synchronous>, transform_indices = @transform_1, window_bounds = array<i64: 2, 1, 32>}, {pipeline_mode = #tpu.pipeline_mode<synchronous>, transform_indices = @transform_2, window_bounds = array<i64: 2, 32, 128>}, {pipeline_mode = #tpu.pipeline_mode<synchronous>, transform_indices = @transform_3, window_bounds = array<i64: 2, 4, 64>}, {pipeline_mode = #tpu.pipeline_mode<synchronous>, transform_indices = @transform_4, window_bounds = array<i64: 2, 1, 64>}, {pipeline_mode = #tpu.pipeline_mode<synchronous>, transform_indices = @transform_5, window_bounds = array<i64: 2, 64, 34>}, {pipeline_mode = #tpu.pipeline_mode<synchronous>, transform_indices = @transform_6, window_bounds = array<i64: 2, 2, 64>}, {pipeline_mode = #tpu.pipeline_mode<synchronous>, transform_indices = @transform_7, window_bounds = array<i64: 2, 1, 64>}, {pipeline_mode = #tpu.pipeline_mode<synchronous>, transform_indices = @transform_8, window_bounds = array<i64: 2, 16, 64>}, {pipeline_mode = #tpu.pipeline_mode<synchronous>, transform_indices = @transform_9, window_bounds = array<i64: 2, 1, 64>}, {pipeline_mode = #tpu.pipeline_mode<synchronous>, transform_indices = @transform_10, window_bounds = array<i64: 2, 64, 32>}, {pipeline_mode = #tpu.pipeline_mode<synchronous>, transform_indices = @transform_11, window_bounds = array<i64: 32, 128>}, {pipeline_mode = #tpu.pipeline_mode<synchronous>, transform_indices = @transform_12, window_bounds = array<i64: 1, 128>}, {transform_indices = @transform_13, window_bounds = array<i64: 8, 128>}]} {
    %c0 = arith.constant 0 : index
    %c0_0 = arith.constant 0 : index
    %0 = vector.load %arg1[%c0, %c0_0] : memref<8x32xf32, #tpu.memory_space<vmem>>, vector<8x32xf32>
    %1 = tpu.iota {dimensions = array<i32: 0>} : vector<8x64xi32>
    %2 = arith.mulf %0, %0 : vector<8x32xf32>
    %cst = arith.constant dense<0.000000e+00> : vector<8xf32>
    %3 = vector.multi_reduction <add>, %2, %cst [1] : vector<8x32xf32> to vector<8xf32>
    %4 = vector.shape_cast %3 : vector<8xf32> to vector<8x1xf32>
    %cst_1 = arith.constant 3.200000e+01 : f32
    %5 = vector.broadcast %cst_1 : f32 to vector<8x1xf32>
    %6 = arith.divf %4, %5 : vector<8x1xf32>
    %cst_2 = arith.constant 9.99999974E-6 : f32
    %7 = vector.broadcast %cst_2 : f32 to vector<8x1xf32>
    %8 = arith.addf %6, %7 : vector<8x1xf32>
    %9 = math.rsqrt %8 : vector<8x1xf32>
    %10 = vector.broadcast %9 : vector<8x1xf32> to vector<8x32xf32>
    %11 = arith.mulf %0, %10 : vector<8x32xf32>
    %c0_3 = arith.constant 0 : index
    %c0_4 = arith.constant 0 : index
    %c0_5 = arith.constant 0 : index
    %12 = vector.load %arg2[%c0_3, %c0_4, %c0_5] : memref<2x1x32xf32, #tpu.memory_space<vmem>>, vector<1x1x32xf32>
    %13 = vector.shape_cast %12 : vector<1x1x32xf32> to vector<1x32xf32>
    %14 = vector.broadcast %13 : vector<1x32xf32> to vector<8x32xf32>
    %15 = arith.mulf %11, %14 : vector<8x32xf32>
    %c0_6 = arith.constant 0 : index
    %c0_7 = arith.constant 0 : index
    %c0_8 = arith.constant 0 : index
    %16 = vector.load %arg3[%c0_6, %c0_7, %c0_8] : memref<2x32x128xf32, #tpu.memory_space<vmem>>, vector<1x32x128xf32>
    %17 = vector.shape_cast %16 : vector<1x32x128xf32> to vector<32x128xf32>
    %cst_9 = arith.constant dense<0.000000e+00> : vector<8x128xf32>
    %18 = tpu.matmul %15, %17, %cst_9 {dimension_numbers = #tpu.dot_dimension_numbers<[1], [0], [0], [1], [0, 0, 1, 1], [], []>} : vector<8x32xf32>, vector<32x128xf32>, vector<8x128xf32> -> vector<8x128xf32>
    %19 = vector.extract_strided_slice %18 {offsets = [0, 0], sizes = [8, 64], strides = [1, 1]} : vector<8x128xf32> to vector<8x64xf32>
    %20 = vector.extract_strided_slice %18 {offsets = [0, 64], sizes = [8, 64], strides = [1, 1]} : vector<8x128xf32> to vector<8x64xf32>
    %c0_10 = arith.constant 0 : index
    %c0_11 = arith.constant 0 : index
    %c0_12 = arith.constant 0 : index
    %21 = vector.load %arg4[%c0_10, %c0_11, %c0_12] : memref<2x4x64xf32, #tpu.memory_space<vmem>>, vector<1x4x64xf32>
    %22 = vector.shape_cast %21 : vector<1x4x64xf32> to vector<4x64xf32>
    %c0_13 = arith.constant 0 : index
    %c0_14 = arith.constant 0 : index
    %c0_15 = arith.constant 0 : index
    %23 = vector.load %arg5[%c0_13, %c0_14, %c0_15] : memref<2x1x64xf32, #tpu.memory_space<vmem>>, vector<1x1x64xf32>
    %24 = vector.shape_cast %23 : vector<1x1x64xf32> to vector<1x64xf32>
    %25 = vector.extract_strided_slice %22 {offsets = [3, 0], sizes = [1, 64], strides = [1, 1]} : vector<4x64xf32> to vector<1x64xf32>
    %26 = vector.broadcast %25 : vector<1x64xf32> to vector<8x64xf32>
    %27 = arith.mulf %26, %19 : vector<8x64xf32>
    %28 = vector.broadcast %24 : vector<1x64xf32> to vector<8x64xf32>
    %29 = arith.addf %28, %27 : vector<8x64xf32>
    %c3_i32 = arith.constant 3 : i32
    %30 = vector.broadcast %c3_i32 : i32 to vector<8x64xi32>
    %31 = arith.cmpi sge, %1, %30 : vector<8x64xi32>
    %c3_i32_16 = arith.constant 3 : i32
    %32 = tpu.dynamic_rotate %19 by %c3_i32_16 dim 0 : vector<8x64xf32>, i32 -> vector<8x64xf32>
    %cst_17 = arith.constant 0.000000e+00 : f32
    %33 = vector.broadcast %cst_17 : f32 to vector<8x64xf32>
    %34 = arith.select %31, %32, %33 : vector<8x64xi1>, vector<8x64xf32>
    %35 = vector.extract_strided_slice %22 {offsets = [0, 0], sizes = [1, 64], strides = [1, 1]} : vector<4x64xf32> to vector<1x64xf32>
    %36 = vector.broadcast %35 : vector<1x64xf32> to vector<8x64xf32>
    %37 = arith.mulf %36, %34 : vector<8x64xf32>
    %38 = arith.addf %29, %37 : vector<8x64xf32>
    %c2_i32 = arith.constant 2 : i32
    %39 = vector.broadcast %c2_i32 : i32 to vector<8x64xi32>
    %40 = arith.cmpi sge, %1, %39 : vector<8x64xi32>
    %c2_i32_18 = arith.constant 2 : i32
    %41 = tpu.dynamic_rotate %19 by %c2_i32_18 dim 0 : vector<8x64xf32>, i32 -> vector<8x64xf32>
    %cst_19 = arith.constant 0.000000e+00 : f32
    %42 = vector.broadcast %cst_19 : f32 to vector<8x64xf32>
    %43 = arith.select %40, %41, %42 : vector<8x64xi1>, vector<8x64xf32>
    %44 = vector.extract_strided_slice %22 {offsets = [1, 0], sizes = [1, 64], strides = [1, 1]} : vector<4x64xf32> to vector<1x64xf32>
    %45 = vector.broadcast %44 : vector<1x64xf32> to vector<8x64xf32>
    %46 = arith.mulf %45, %43 : vector<8x64xf32>
    %47 = arith.addf %38, %46 : vector<8x64xf32>
    %c1_i32 = arith.constant 1 : i32
    %48 = vector.broadcast %c1_i32 : i32 to vector<8x64xi32>
    %49 = arith.cmpi sge, %1, %48 : vector<8x64xi32>
    %c1_i32_20 = arith.constant 1 : i32
    %50 = tpu.dynamic_rotate %19 by %c1_i32_20 dim 0 : vector<8x64xf32>, i32 -> vector<8x64xf32>
    %cst_21 = arith.constant 0.000000e+00 : f32
    %51 = vector.broadcast %cst_21 : f32 to vector<8x64xf32>
    %52 = arith.select %49, %50, %51 : vector<8x64xi1>, vector<8x64xf32>
    %53 = vector.extract_strided_slice %22 {offsets = [2, 0], sizes = [1, 64], strides = [1, 1]} : vector<4x64xf32> to vector<1x64xf32>
    %54 = vector.broadcast %53 : vector<1x64xf32> to vector<8x64xf32>
    %55 = arith.mulf %54, %52 : vector<8x64xf32>
    %56 = arith.addf %47, %55 : vector<8x64xf32>
    %cst_22 = arith.constant 5.000000e-01 : f32
    %57 = vector.broadcast %cst_22 : f32 to vector<8x64xf32>
    %58 = arith.mulf %57, %56 : vector<8x64xf32>
    %59 = math.tanh %58 : vector<8x64xf32>
    %cst_23 = arith.constant 1.000000e+00 : f32
    %60 = vector.broadcast %cst_23 : f32 to vector<8x64xf32>
    %61 = arith.addf %59, %60 : vector<8x64xf32>
    %cst_24 = arith.constant 5.000000e-01 : f32
    %62 = vector.broadcast %cst_24 : f32 to vector<8x64xf32>
    %63 = arith.mulf %62, %61 : vector<8x64xf32>
    %64 = arith.mulf %56, %63 : vector<8x64xf32>
    %c0_25 = arith.constant 0 : index
    %c0_26 = arith.constant 0 : index
    %c0_27 = arith.constant 0 : index
    %65 = vector.load %arg6[%c0_25, %c0_26, %c0_27] : memref<2x64x34xf32, #tpu.memory_space<vmem>>, vector<1x64x34xf32>
    %66 = vector.shape_cast %65 : vector<1x64x34xf32> to vector<64x34xf32>
    %cst_28 = arith.constant dense<0.000000e+00> : vector<8x34xf32>
    %67 = tpu.matmul %64, %66, %cst_28 {dimension_numbers = #tpu.dot_dimension_numbers<[1], [0], [0], [1], [0, 0, 1, 1], [], []>} : vector<8x64xf32>, vector<64x34xf32>, vector<8x34xf32> -> vector<8x34xf32>
    %68 = vector.extract_strided_slice %67 {offsets = [0, 0], sizes = [8, 2], strides = [1, 1]} : vector<8x34xf32> to vector<8x2xf32>
    %69 = vector.extract_strided_slice %67 {offsets = [0, 2], sizes = [8, 16], strides = [1, 1]} : vector<8x34xf32> to vector<8x16xf32>
    %70 = vector.extract_strided_slice %67 {offsets = [0, 18], sizes = [8, 16], strides = [1, 1]} : vector<8x34xf32> to vector<8x16xf32>
    %c0_29 = arith.constant 0 : index
    %c0_30 = arith.constant 0 : index
    %c0_31 = arith.constant 0 : index
    %71 = vector.load %arg7[%c0_29, %c0_30, %c0_31] : memref<2x2x64xf32, #tpu.memory_space<vmem>>, vector<1x2x64xf32>
    %72 = vector.shape_cast %71 : vector<1x2x64xf32> to vector<2x64xf32>
    %cst_32 = arith.constant dense<0.000000e+00> : vector<8x64xf32>
    %73 = tpu.matmul %68, %72, %cst_32 {dimension_numbers = #tpu.dot_dimension_numbers<[1], [0], [0], [1], [0, 0, 1, 1], [], []>} : vector<8x2xf32>, vector<2x64xf32>, vector<8x64xf32> -> vector<8x64xf32>
    %c0_33 = arith.constant 0 : index
    %c0_34 = arith.constant 0 : index
    %c0_35 = arith.constant 0 : index
    %74 = vector.load %arg8[%c0_33, %c0_34, %c0_35] : memref<2x1x64xf32, #tpu.memory_space<vmem>>, vector<1x1x64xf32>
    %75 = vector.shape_cast %74 : vector<1x1x64xf32> to vector<1x64xf32>
    %76 = vector.broadcast %75 : vector<1x64xf32> to vector<8x64xf32>
    %77 = arith.addf %73, %76 : vector<8x64xf32>
    %cst_36 = arith.constant 0.000000e+00 : f32
    %78 = vector.broadcast %cst_36 : f32 to vector<8x64xf32>
    %79 = arith.maximumf %77, %78 : vector<8x64xf32>
    %80 = math.absf %77 : vector<8x64xf32>
    %cst_37 = arith.constant 0.000000e+00 : f32
    %81 = vector.broadcast %cst_37 : f32 to vector<8x64xf32>
    %82 = arith.subf %81, %80 : vector<8x64xf32>
    %83 = math.exp %82 : vector<8x64xf32>
    %cst_38 = arith.constant 1.000000e+00 : f32
    %84 = vector.broadcast %cst_38 : f32 to vector<8x64xf32>
    %85 = arith.addf %84, %83 : vector<8x64xf32>
    %86 = math.log %85 : vector<8x64xf32>
    %87 = arith.addf %79, %86 : vector<8x64xf32>
    %c0_39 = arith.constant 0 : index
    %c0_40 = arith.constant 0 : index
    %c0_41 = arith.constant 0 : index
    %88 = vector.load %arg9[%c0_39, %c0_40, %c0_41] : memref<2x16x64xf32, #tpu.memory_space<vmem>>, vector<1x16x64xf32>
    %89 = vector.shape_cast %88 : vector<1x16x64xf32> to vector<16x64xf32>
    %90 = math.exp %89 : vector<16x64xf32>
    %cst_42 = arith.constant 0.000000e+00 : f32
    %91 = vector.broadcast %cst_42 : f32 to vector<16x64xf32>
    %92 = arith.subf %91, %90 : vector<16x64xf32>
    %93 = vector.shape_cast %87 : vector<8x64xf32> to vector<8x1x64xf32>
    %94 = vector.shape_cast %92 : vector<16x64xf32> to vector<1x16x64xf32>
    %95 = vector.broadcast %93 : vector<8x1x64xf32> to vector<8x16x64xf32>
    %96 = vector.broadcast %94 : vector<1x16x64xf32> to vector<8x16x64xf32>
    %97 = arith.mulf %95, %96 : vector<8x16x64xf32>
    %98 = math.exp %97 : vector<8x16x64xf32>
    %99 = arith.mulf %87, %64 : vector<8x64xf32>
    %100 = tpu.transpose %69, [1, 0] : vector<8x16xf32> -> vector<16x8xf32>
    %101 = tpu.transpose %70, [1, 0] : vector<8x16xf32> -> vector<16x8xf32>
    %cst_43 = arith.constant 0.000000e+00 : f32
    %102 = vector.broadcast %cst_43 : f32 to vector<16x64xf32>
    %cst_44 = arith.constant 0.000000e+00 : f32
    %103 = vector.broadcast %cst_44 : f32 to vector<8x64xf32>
    %104 = vector.extract_strided_slice %98 {offsets = [0, 0, 0], sizes = [1, 16, 64], strides = [1, 1, 1]} : vector<8x16x64xf32> to vector<1x16x64xf32>
    %105 = vector.shape_cast %104 : vector<1x16x64xf32> to vector<16x64xf32>
    %106 = arith.mulf %105, %102 : vector<16x64xf32>
    %107 = vector.extract_strided_slice %100 {offsets = [0, 0], sizes = [16, 1], strides = [1, 1]} : vector<16x8xf32> to vector<16x1xf32>
    %108 = vector.extract_strided_slice %99 {offsets = [0, 0], sizes = [1, 64], strides = [1, 1]} : vector<8x64xf32> to vector<1x64xf32>
    %109 = vector.broadcast %107 : vector<16x1xf32> to vector<16x64xf32>
    %110 = vector.broadcast %108 : vector<1x64xf32> to vector<16x64xf32>
    %111 = arith.mulf %109, %110 : vector<16x64xf32>
    %112 = arith.addf %106, %111 : vector<16x64xf32>
    %113 = vector.extract_strided_slice %101 {offsets = [0, 0], sizes = [16, 1], strides = [1, 1]} : vector<16x8xf32> to vector<16x1xf32>
    %114 = vector.broadcast %113 : vector<16x1xf32> to vector<16x64xf32>
    %115 = arith.mulf %114, %112 : vector<16x64xf32>
    %cst_45 = arith.constant dense<0.000000e+00> : vector<64xf32>
    %116 = vector.multi_reduction <add>, %115, %cst_45 [0] : vector<16x64xf32> to vector<64xf32>
    %117 = vector.shape_cast %116 : vector<64xf32> to vector<1x64xf32>
    %c0_i32 = arith.constant 0 : i32
    %118 = vector.broadcast %c0_i32 : i32 to vector<8x64xi32>
    %119 = arith.cmpi eq, %1, %118 : vector<8x64xi32>
    %120 = vector.shape_cast %117 : vector<1x64xf32> to vector<1x64xf32>
    %121 = vector.broadcast %120 : vector<1x64xf32> to vector<8x64xf32>
    %122 = arith.select %119, %121, %103 : vector<8x64xi1>, vector<8x64xf32>
    %123 = vector.extract_strided_slice %98 {offsets = [1, 0, 0], sizes = [1, 16, 64], strides = [1, 1, 1]} : vector<8x16x64xf32> to vector<1x16x64xf32>
    %124 = vector.shape_cast %123 : vector<1x16x64xf32> to vector<16x64xf32>
    %125 = arith.mulf %124, %112 : vector<16x64xf32>
    %126 = vector.extract_strided_slice %100 {offsets = [0, 1], sizes = [16, 1], strides = [1, 1]} : vector<16x8xf32> to vector<16x1xf32>
    %127 = vector.extract_strided_slice %99 {offsets = [1, 0], sizes = [1, 64], strides = [1, 1]} : vector<8x64xf32> to vector<1x64xf32>
    %128 = vector.broadcast %126 : vector<16x1xf32> to vector<16x64xf32>
    %129 = vector.broadcast %127 : vector<1x64xf32> to vector<16x64xf32>
    %130 = arith.mulf %128, %129 : vector<16x64xf32>
    %131 = arith.addf %125, %130 : vector<16x64xf32>
    %132 = vector.extract_strided_slice %101 {offsets = [0, 1], sizes = [16, 1], strides = [1, 1]} : vector<16x8xf32> to vector<16x1xf32>
    %133 = vector.broadcast %132 : vector<16x1xf32> to vector<16x64xf32>
    %134 = arith.mulf %133, %131 : vector<16x64xf32>
    %cst_46 = arith.constant dense<0.000000e+00> : vector<64xf32>
    %135 = vector.multi_reduction <add>, %134, %cst_46 [0] : vector<16x64xf32> to vector<64xf32>
    %136 = vector.shape_cast %135 : vector<64xf32> to vector<1x64xf32>
    %c1_i32_47 = arith.constant 1 : i32
    %137 = vector.broadcast %c1_i32_47 : i32 to vector<8x64xi32>
    %138 = arith.cmpi eq, %1, %137 : vector<8x64xi32>
    %139 = vector.shape_cast %136 : vector<1x64xf32> to vector<1x64xf32>
    %140 = vector.broadcast %139 : vector<1x64xf32> to vector<8x64xf32>
    %141 = arith.select %138, %140, %122 : vector<8x64xi1>, vector<8x64xf32>
    %142 = vector.extract_strided_slice %98 {offsets = [2, 0, 0], sizes = [1, 16, 64], strides = [1, 1, 1]} : vector<8x16x64xf32> to vector<1x16x64xf32>
    %143 = vector.shape_cast %142 : vector<1x16x64xf32> to vector<16x64xf32>
    %144 = arith.mulf %143, %131 : vector<16x64xf32>
    %145 = vector.extract_strided_slice %100 {offsets = [0, 2], sizes = [16, 1], strides = [1, 1]} : vector<16x8xf32> to vector<16x1xf32>
    %146 = vector.extract_strided_slice %99 {offsets = [2, 0], sizes = [1, 64], strides = [1, 1]} : vector<8x64xf32> to vector<1x64xf32>
    %147 = vector.broadcast %145 : vector<16x1xf32> to vector<16x64xf32>
    %148 = vector.broadcast %146 : vector<1x64xf32> to vector<16x64xf32>
    %149 = arith.mulf %147, %148 : vector<16x64xf32>
    %150 = arith.addf %144, %149 : vector<16x64xf32>
    %151 = vector.extract_strided_slice %101 {offsets = [0, 2], sizes = [16, 1], strides = [1, 1]} : vector<16x8xf32> to vector<16x1xf32>
    %152 = vector.broadcast %151 : vector<16x1xf32> to vector<16x64xf32>
    %153 = arith.mulf %152, %150 : vector<16x64xf32>
    %cst_48 = arith.constant dense<0.000000e+00> : vector<64xf32>
    %154 = vector.multi_reduction <add>, %153, %cst_48 [0] : vector<16x64xf32> to vector<64xf32>
    %155 = vector.shape_cast %154 : vector<64xf32> to vector<1x64xf32>
    %c2_i32_49 = arith.constant 2 : i32
    %156 = vector.broadcast %c2_i32_49 : i32 to vector<8x64xi32>
    %157 = arith.cmpi eq, %1, %156 : vector<8x64xi32>
    %158 = vector.shape_cast %155 : vector<1x64xf32> to vector<1x64xf32>
    %159 = vector.broadcast %158 : vector<1x64xf32> to vector<8x64xf32>
    %160 = arith.select %157, %159, %141 : vector<8x64xi1>, vector<8x64xf32>
    %161 = vector.extract_strided_slice %98 {offsets = [3, 0, 0], sizes = [1, 16, 64], strides = [1, 1, 1]} : vector<8x16x64xf32> to vector<1x16x64xf32>
    %162 = vector.shape_cast %161 : vector<1x16x64xf32> to vector<16x64xf32>
    %163 = arith.mulf %162, %150 : vector<16x64xf32>
    %164 = vector.extract_strided_slice %100 {offsets = [0, 3], sizes = [16, 1], strides = [1, 1]} : vector<16x8xf32> to vector<16x1xf32>
    %165 = vector.extract_strided_slice %99 {offsets = [3, 0], sizes = [1, 64], strides = [1, 1]} : vector<8x64xf32> to vector<1x64xf32>
    %166 = vector.broadcast %164 : vector<16x1xf32> to vector<16x64xf32>
    %167 = vector.broadcast %165 : vector<1x64xf32> to vector<16x64xf32>
    %168 = arith.mulf %166, %167 : vector<16x64xf32>
    %169 = arith.addf %163, %168 : vector<16x64xf32>
    %170 = vector.extract_strided_slice %101 {offsets = [0, 3], sizes = [16, 1], strides = [1, 1]} : vector<16x8xf32> to vector<16x1xf32>
    %171 = vector.broadcast %170 : vector<16x1xf32> to vector<16x64xf32>
    %172 = arith.mulf %171, %169 : vector<16x64xf32>
    %cst_50 = arith.constant dense<0.000000e+00> : vector<64xf32>
    %173 = vector.multi_reduction <add>, %172, %cst_50 [0] : vector<16x64xf32> to vector<64xf32>
    %174 = vector.shape_cast %173 : vector<64xf32> to vector<1x64xf32>
    %c3_i32_51 = arith.constant 3 : i32
    %175 = vector.broadcast %c3_i32_51 : i32 to vector<8x64xi32>
    %176 = arith.cmpi eq, %1, %175 : vector<8x64xi32>
    %177 = vector.shape_cast %174 : vector<1x64xf32> to vector<1x64xf32>
    %178 = vector.broadcast %177 : vector<1x64xf32> to vector<8x64xf32>
    %179 = arith.select %176, %178, %160 : vector<8x64xi1>, vector<8x64xf32>
    %180 = vector.extract_strided_slice %98 {offsets = [4, 0, 0], sizes = [1, 16, 64], strides = [1, 1, 1]} : vector<8x16x64xf32> to vector<1x16x64xf32>
    %181 = vector.shape_cast %180 : vector<1x16x64xf32> to vector<16x64xf32>
    %182 = arith.mulf %181, %169 : vector<16x64xf32>
    %183 = vector.extract_strided_slice %100 {offsets = [0, 4], sizes = [16, 1], strides = [1, 1]} : vector<16x8xf32> to vector<16x1xf32>
    %184 = vector.extract_strided_slice %99 {offsets = [4, 0], sizes = [1, 64], strides = [1, 1]} : vector<8x64xf32> to vector<1x64xf32>
    %185 = vector.broadcast %183 : vector<16x1xf32> to vector<16x64xf32>
    %186 = vector.broadcast %184 : vector<1x64xf32> to vector<16x64xf32>
    %187 = arith.mulf %185, %186 : vector<16x64xf32>
    %188 = arith.addf %182, %187 : vector<16x64xf32>
    %189 = vector.extract_strided_slice %101 {offsets = [0, 4], sizes = [16, 1], strides = [1, 1]} : vector<16x8xf32> to vector<16x1xf32>
    %190 = vector.broadcast %189 : vector<16x1xf32> to vector<16x64xf32>
    %191 = arith.mulf %190, %188 : vector<16x64xf32>
    %cst_52 = arith.constant dense<0.000000e+00> : vector<64xf32>
    %192 = vector.multi_reduction <add>, %191, %cst_52 [0] : vector<16x64xf32> to vector<64xf32>
    %193 = vector.shape_cast %192 : vector<64xf32> to vector<1x64xf32>
    %c4_i32 = arith.constant 4 : i32
    %194 = vector.broadcast %c4_i32 : i32 to vector<8x64xi32>
    %195 = arith.cmpi eq, %1, %194 : vector<8x64xi32>
    %196 = vector.shape_cast %193 : vector<1x64xf32> to vector<1x64xf32>
    %197 = vector.broadcast %196 : vector<1x64xf32> to vector<8x64xf32>
    %198 = arith.select %195, %197, %179 : vector<8x64xi1>, vector<8x64xf32>
    %199 = vector.extract_strided_slice %98 {offsets = [5, 0, 0], sizes = [1, 16, 64], strides = [1, 1, 1]} : vector<8x16x64xf32> to vector<1x16x64xf32>
    %200 = vector.shape_cast %199 : vector<1x16x64xf32> to vector<16x64xf32>
    %201 = arith.mulf %200, %188 : vector<16x64xf32>
    %202 = vector.extract_strided_slice %100 {offsets = [0, 5], sizes = [16, 1], strides = [1, 1]} : vector<16x8xf32> to vector<16x1xf32>
    %203 = vector.extract_strided_slice %99 {offsets = [5, 0], sizes = [1, 64], strides = [1, 1]} : vector<8x64xf32> to vector<1x64xf32>
    %204 = vector.broadcast %202 : vector<16x1xf32> to vector<16x64xf32>
    %205 = vector.broadcast %203 : vector<1x64xf32> to vector<16x64xf32>
    %206 = arith.mulf %204, %205 : vector<16x64xf32>
    %207 = arith.addf %201, %206 : vector<16x64xf32>
    %208 = vector.extract_strided_slice %101 {offsets = [0, 5], sizes = [16, 1], strides = [1, 1]} : vector<16x8xf32> to vector<16x1xf32>
    %209 = vector.broadcast %208 : vector<16x1xf32> to vector<16x64xf32>
    %210 = arith.mulf %209, %207 : vector<16x64xf32>
    %cst_53 = arith.constant dense<0.000000e+00> : vector<64xf32>
    %211 = vector.multi_reduction <add>, %210, %cst_53 [0] : vector<16x64xf32> to vector<64xf32>
    %212 = vector.shape_cast %211 : vector<64xf32> to vector<1x64xf32>
    %c5_i32 = arith.constant 5 : i32
    %213 = vector.broadcast %c5_i32 : i32 to vector<8x64xi32>
    %214 = arith.cmpi eq, %1, %213 : vector<8x64xi32>
    %215 = vector.shape_cast %212 : vector<1x64xf32> to vector<1x64xf32>
    %216 = vector.broadcast %215 : vector<1x64xf32> to vector<8x64xf32>
    %217 = arith.select %214, %216, %198 : vector<8x64xi1>, vector<8x64xf32>
    %218 = vector.extract_strided_slice %98 {offsets = [6, 0, 0], sizes = [1, 16, 64], strides = [1, 1, 1]} : vector<8x16x64xf32> to vector<1x16x64xf32>
    %219 = vector.shape_cast %218 : vector<1x16x64xf32> to vector<16x64xf32>
    %220 = arith.mulf %219, %207 : vector<16x64xf32>
    %221 = vector.extract_strided_slice %100 {offsets = [0, 6], sizes = [16, 1], strides = [1, 1]} : vector<16x8xf32> to vector<16x1xf32>
    %222 = vector.extract_strided_slice %99 {offsets = [6, 0], sizes = [1, 64], strides = [1, 1]} : vector<8x64xf32> to vector<1x64xf32>
    %223 = vector.broadcast %221 : vector<16x1xf32> to vector<16x64xf32>
    %224 = vector.broadcast %222 : vector<1x64xf32> to vector<16x64xf32>
    %225 = arith.mulf %223, %224 : vector<16x64xf32>
    %226 = arith.addf %220, %225 : vector<16x64xf32>
    %227 = vector.extract_strided_slice %101 {offsets = [0, 6], sizes = [16, 1], strides = [1, 1]} : vector<16x8xf32> to vector<16x1xf32>
    %228 = vector.broadcast %227 : vector<16x1xf32> to vector<16x64xf32>
    %229 = arith.mulf %228, %226 : vector<16x64xf32>
    %cst_54 = arith.constant dense<0.000000e+00> : vector<64xf32>
    %230 = vector.multi_reduction <add>, %229, %cst_54 [0] : vector<16x64xf32> to vector<64xf32>
    %231 = vector.shape_cast %230 : vector<64xf32> to vector<1x64xf32>
    %c6_i32 = arith.constant 6 : i32
    %232 = vector.broadcast %c6_i32 : i32 to vector<8x64xi32>
    %233 = arith.cmpi eq, %1, %232 : vector<8x64xi32>
    %234 = vector.shape_cast %231 : vector<1x64xf32> to vector<1x64xf32>
    %235 = vector.broadcast %234 : vector<1x64xf32> to vector<8x64xf32>
    %236 = arith.select %233, %235, %217 : vector<8x64xi1>, vector<8x64xf32>
    %237 = vector.extract_strided_slice %98 {offsets = [7, 0, 0], sizes = [1, 16, 64], strides = [1, 1, 1]} : vector<8x16x64xf32> to vector<1x16x64xf32>
    %238 = vector.shape_cast %237 : vector<1x16x64xf32> to vector<16x64xf32>
    %239 = arith.mulf %238, %226 : vector<16x64xf32>
    %240 = vector.extract_strided_slice %100 {offsets = [0, 7], sizes = [16, 1], strides = [1, 1]} : vector<16x8xf32> to vector<16x1xf32>
    %241 = vector.extract_strided_slice %99 {offsets = [7, 0], sizes = [1, 64], strides = [1, 1]} : vector<8x64xf32> to vector<1x64xf32>
    %242 = vector.broadcast %240 : vector<16x1xf32> to vector<16x64xf32>
    %243 = vector.broadcast %241 : vector<1x64xf32> to vector<16x64xf32>
    %244 = arith.mulf %242, %243 : vector<16x64xf32>
    %245 = arith.addf %239, %244 : vector<16x64xf32>
    %246 = vector.extract_strided_slice %101 {offsets = [0, 7], sizes = [16, 1], strides = [1, 1]} : vector<16x8xf32> to vector<16x1xf32>
    %247 = vector.broadcast %246 : vector<16x1xf32> to vector<16x64xf32>
    %248 = arith.mulf %247, %245 : vector<16x64xf32>
    %cst_55 = arith.constant dense<0.000000e+00> : vector<64xf32>
    %249 = vector.multi_reduction <add>, %248, %cst_55 [0] : vector<16x64xf32> to vector<64xf32>
    %250 = vector.shape_cast %249 : vector<64xf32> to vector<1x64xf32>
    %c7_i32 = arith.constant 7 : i32
    %251 = vector.broadcast %c7_i32 : i32 to vector<8x64xi32>
    %252 = arith.cmpi eq, %1, %251 : vector<8x64xi32>
    %253 = vector.shape_cast %250 : vector<1x64xf32> to vector<1x64xf32>
    %254 = vector.broadcast %253 : vector<1x64xf32> to vector<8x64xf32>
    %255 = arith.select %252, %254, %236 : vector<8x64xi1>, vector<8x64xf32>
    %c0_56 = arith.constant 0 : index
    %c0_57 = arith.constant 0 : index
    %c0_58 = arith.constant 0 : index
    %256 = vector.load %arg10[%c0_56, %c0_57, %c0_58] : memref<2x1x64xf32, #tpu.memory_space<vmem>>, vector<1x1x64xf32>
    %257 = vector.shape_cast %256 : vector<1x1x64xf32> to vector<1x64xf32>
    %258 = vector.broadcast %257 : vector<1x64xf32> to vector<8x64xf32>
    %259 = arith.mulf %64, %258 : vector<8x64xf32>
    %260 = arith.addf %255, %259 : vector<8x64xf32>
    %cst_59 = arith.constant 5.000000e-01 : f32
    %261 = vector.broadcast %cst_59 : f32 to vector<8x64xf32>
    %262 = arith.mulf %261, %20 : vector<8x64xf32>
    %263 = math.tanh %262 : vector<8x64xf32>
    %cst_60 = arith.constant 1.000000e+00 : f32
    %264 = vector.broadcast %cst_60 : f32 to vector<8x64xf32>
    %265 = arith.addf %263, %264 : vector<8x64xf32>
    %cst_61 = arith.constant 5.000000e-01 : f32
    %266 = vector.broadcast %cst_61 : f32 to vector<8x64xf32>
    %267 = arith.mulf %266, %265 : vector<8x64xf32>
    %268 = arith.mulf %20, %267 : vector<8x64xf32>
    %269 = arith.mulf %260, %268 : vector<8x64xf32>
    %c0_62 = arith.constant 0 : index
    %c0_63 = arith.constant 0 : index
    %c0_64 = arith.constant 0 : index
    %270 = vector.load %arg11[%c0_62, %c0_63, %c0_64] : memref<2x64x32xf32, #tpu.memory_space<vmem>>, vector<1x64x32xf32>
    %271 = vector.shape_cast %270 : vector<1x64x32xf32> to vector<64x32xf32>
    %cst_65 = arith.constant dense<0.000000e+00> : vector<8x32xf32>
    %272 = tpu.matmul %269, %271, %cst_65 {dimension_numbers = #tpu.dot_dimension_numbers<[1], [0], [0], [1], [0, 0, 1, 1], [], []>} : vector<8x64xf32>, vector<64x32xf32>, vector<8x32xf32> -> vector<8x32xf32>
    %273 = arith.addf %0, %272 : vector<8x32xf32>
    %274 = arith.mulf %273, %273 : vector<8x32xf32>
    %cst_66 = arith.constant dense<0.000000e+00> : vector<8xf32>
    %275 = vector.multi_reduction <add>, %274, %cst_66 [1] : vector<8x32xf32> to vector<8xf32>
    %276 = vector.shape_cast %275 : vector<8xf32> to vector<8x1xf32>
    %cst_67 = arith.constant 3.200000e+01 : f32
    %277 = vector.broadcast %cst_67 : f32 to vector<8x1xf32>
    %278 = arith.divf %276, %277 : vector<8x1xf32>
    %cst_68 = arith.constant 9.99999974E-6 : f32
    %279 = vector.broadcast %cst_68 : f32 to vector<8x1xf32>
    %280 = arith.addf %278, %279 : vector<8x1xf32>
    %281 = math.rsqrt %280 : vector<8x1xf32>
    %282 = vector.broadcast %281 : vector<8x1xf32> to vector<8x32xf32>
    %283 = arith.mulf %273, %282 : vector<8x32xf32>
    %c1 = arith.constant 1 : index
    %c0_69 = arith.constant 0 : index
    %c0_70 = arith.constant 0 : index
    %284 = vector.load %arg2[%c1, %c0_69, %c0_70] : memref<2x1x32xf32, #tpu.memory_space<vmem>>, vector<1x1x32xf32>
    %285 = vector.shape_cast %284 : vector<1x1x32xf32> to vector<1x32xf32>
    %286 = vector.broadcast %285 : vector<1x32xf32> to vector<8x32xf32>
    %287 = arith.mulf %283, %286 : vector<8x32xf32>
    %c1_71 = arith.constant 1 : index
    %c0_72 = arith.constant 0 : index
    %c0_73 = arith.constant 0 : index
    %288 = vector.load %arg3[%c1_71, %c0_72, %c0_73] : memref<2x32x128xf32, #tpu.memory_space<vmem>>, vector<1x32x128xf32>
    %289 = vector.shape_cast %288 : vector<1x32x128xf32> to vector<32x128xf32>
    %cst_74 = arith.constant dense<0.000000e+00> : vector<8x128xf32>
    %290 = tpu.matmul %287, %289, %cst_74 {dimension_numbers = #tpu.dot_dimension_numbers<[1], [0], [0], [1], [0, 0, 1, 1], [], []>} : vector<8x32xf32>, vector<32x128xf32>, vector<8x128xf32> -> vector<8x128xf32>
    %291 = vector.extract_strided_slice %290 {offsets = [0, 0], sizes = [8, 64], strides = [1, 1]} : vector<8x128xf32> to vector<8x64xf32>
    %292 = vector.extract_strided_slice %290 {offsets = [0, 64], sizes = [8, 64], strides = [1, 1]} : vector<8x128xf32> to vector<8x64xf32>
    %c1_75 = arith.constant 1 : index
    %c0_76 = arith.constant 0 : index
    %c0_77 = arith.constant 0 : index
    %293 = vector.load %arg4[%c1_75, %c0_76, %c0_77] : memref<2x4x64xf32, #tpu.memory_space<vmem>>, vector<1x4x64xf32>
    %294 = vector.shape_cast %293 : vector<1x4x64xf32> to vector<4x64xf32>
    %c1_78 = arith.constant 1 : index
    %c0_79 = arith.constant 0 : index
    %c0_80 = arith.constant 0 : index
    %295 = vector.load %arg5[%c1_78, %c0_79, %c0_80] : memref<2x1x64xf32, #tpu.memory_space<vmem>>, vector<1x1x64xf32>
    %296 = vector.shape_cast %295 : vector<1x1x64xf32> to vector<1x64xf32>
    %297 = vector.extract_strided_slice %294 {offsets = [3, 0], sizes = [1, 64], strides = [1, 1]} : vector<4x64xf32> to vector<1x64xf32>
    %298 = vector.broadcast %297 : vector<1x64xf32> to vector<8x64xf32>
    %299 = arith.mulf %298, %291 : vector<8x64xf32>
    %300 = vector.broadcast %296 : vector<1x64xf32> to vector<8x64xf32>
    %301 = arith.addf %300, %299 : vector<8x64xf32>
    %c3_i32_81 = arith.constant 3 : i32
    %302 = vector.broadcast %c3_i32_81 : i32 to vector<8x64xi32>
    %303 = arith.cmpi sge, %1, %302 : vector<8x64xi32>
    %c3_i32_82 = arith.constant 3 : i32
    %304 = tpu.dynamic_rotate %291 by %c3_i32_82 dim 0 : vector<8x64xf32>, i32 -> vector<8x64xf32>
    %cst_83 = arith.constant 0.000000e+00 : f32
    %305 = vector.broadcast %cst_83 : f32 to vector<8x64xf32>
    %306 = arith.select %303, %304, %305 : vector<8x64xi1>, vector<8x64xf32>
    %307 = vector.extract_strided_slice %294 {offsets = [0, 0], sizes = [1, 64], strides = [1, 1]} : vector<4x64xf32> to vector<1x64xf32>
    %308 = vector.broadcast %307 : vector<1x64xf32> to vector<8x64xf32>
    %309 = arith.mulf %308, %306 : vector<8x64xf32>
    %310 = arith.addf %301, %309 : vector<8x64xf32>
    %c2_i32_84 = arith.constant 2 : i32
    %311 = vector.broadcast %c2_i32_84 : i32 to vector<8x64xi32>
    %312 = arith.cmpi sge, %1, %311 : vector<8x64xi32>
    %c2_i32_85 = arith.constant 2 : i32
    %313 = tpu.dynamic_rotate %291 by %c2_i32_85 dim 0 : vector<8x64xf32>, i32 -> vector<8x64xf32>
    %cst_86 = arith.constant 0.000000e+00 : f32
    %314 = vector.broadcast %cst_86 : f32 to vector<8x64xf32>
    %315 = arith.select %312, %313, %314 : vector<8x64xi1>, vector<8x64xf32>
    %316 = vector.extract_strided_slice %294 {offsets = [1, 0], sizes = [1, 64], strides = [1, 1]} : vector<4x64xf32> to vector<1x64xf32>
    %317 = vector.broadcast %316 : vector<1x64xf32> to vector<8x64xf32>
    %318 = arith.mulf %317, %315 : vector<8x64xf32>
    %319 = arith.addf %310, %318 : vector<8x64xf32>
    %c1_i32_87 = arith.constant 1 : i32
    %320 = vector.broadcast %c1_i32_87 : i32 to vector<8x64xi32>
    %321 = arith.cmpi sge, %1, %320 : vector<8x64xi32>
    %c1_i32_88 = arith.constant 1 : i32
    %322 = tpu.dynamic_rotate %291 by %c1_i32_88 dim 0 : vector<8x64xf32>, i32 -> vector<8x64xf32>
    %cst_89 = arith.constant 0.000000e+00 : f32
    %323 = vector.broadcast %cst_89 : f32 to vector<8x64xf32>
    %324 = arith.select %321, %322, %323 : vector<8x64xi1>, vector<8x64xf32>
    %325 = vector.extract_strided_slice %294 {offsets = [2, 0], sizes = [1, 64], strides = [1, 1]} : vector<4x64xf32> to vector<1x64xf32>
    %326 = vector.broadcast %325 : vector<1x64xf32> to vector<8x64xf32>
    %327 = arith.mulf %326, %324 : vector<8x64xf32>
    %328 = arith.addf %319, %327 : vector<8x64xf32>
    %cst_90 = arith.constant 5.000000e-01 : f32
    %329 = vector.broadcast %cst_90 : f32 to vector<8x64xf32>
    %330 = arith.mulf %329, %328 : vector<8x64xf32>
    %331 = math.tanh %330 : vector<8x64xf32>
    %cst_91 = arith.constant 1.000000e+00 : f32
    %332 = vector.broadcast %cst_91 : f32 to vector<8x64xf32>
    %333 = arith.addf %331, %332 : vector<8x64xf32>
    %cst_92 = arith.constant 5.000000e-01 : f32
    %334 = vector.broadcast %cst_92 : f32 to vector<8x64xf32>
    %335 = arith.mulf %334, %333 : vector<8x64xf32>
    %336 = arith.mulf %328, %335 : vector<8x64xf32>
    %c1_93 = arith.constant 1 : index
    %c0_94 = arith.constant 0 : index
    %c0_95 = arith.constant 0 : index
    %337 = vector.load %arg6[%c1_93, %c0_94, %c0_95] : memref<2x64x34xf32, #tpu.memory_space<vmem>>, vector<1x64x34xf32>
    %338 = vector.shape_cast %337 : vector<1x64x34xf32> to vector<64x34xf32>
    %cst_96 = arith.constant dense<0.000000e+00> : vector<8x34xf32>
    %339 = tpu.matmul %336, %338, %cst_96 {dimension_numbers = #tpu.dot_dimension_numbers<[1], [0], [0], [1], [0, 0, 1, 1], [], []>} : vector<8x64xf32>, vector<64x34xf32>, vector<8x34xf32> -> vector<8x34xf32>
    %340 = vector.extract_strided_slice %339 {offsets = [0, 0], sizes = [8, 2], strides = [1, 1]} : vector<8x34xf32> to vector<8x2xf32>
    %341 = vector.extract_strided_slice %339 {offsets = [0, 2], sizes = [8, 16], strides = [1, 1]} : vector<8x34xf32> to vector<8x16xf32>
    %342 = vector.extract_strided_slice %339 {offsets = [0, 18], sizes = [8, 16], strides = [1, 1]} : vector<8x34xf32> to vector<8x16xf32>
    %c1_97 = arith.constant 1 : index
    %c0_98 = arith.constant 0 : index
    %c0_99 = arith.constant 0 : index
    %343 = vector.load %arg7[%c1_97, %c0_98, %c0_99] : memref<2x2x64xf32, #tpu.memory_space<vmem>>, vector<1x2x64xf32>
    %344 = vector.shape_cast %343 : vector<1x2x64xf32> to vector<2x64xf32>
    %cst_100 = arith.constant dense<0.000000e+00> : vector<8x64xf32>
    %345 = tpu.matmul %340, %344, %cst_100 {dimension_numbers = #tpu.dot_dimension_numbers<[1], [0], [0], [1], [0, 0, 1, 1], [], []>} : vector<8x2xf32>, vector<2x64xf32>, vector<8x64xf32> -> vector<8x64xf32>
    %c1_101 = arith.constant 1 : index
    %c0_102 = arith.constant 0 : index
    %c0_103 = arith.constant 0 : index
    %346 = vector.load %arg8[%c1_101, %c0_102, %c0_103] : memref<2x1x64xf32, #tpu.memory_space<vmem>>, vector<1x1x64xf32>
    %347 = vector.shape_cast %346 : vector<1x1x64xf32> to vector<1x64xf32>
    %348 = vector.broadcast %347 : vector<1x64xf32> to vector<8x64xf32>
    %349 = arith.addf %345, %348 : vector<8x64xf32>
    %cst_104 = arith.constant 0.000000e+00 : f32
    %350 = vector.broadcast %cst_104 : f32 to vector<8x64xf32>
    %351 = arith.maximumf %349, %350 : vector<8x64xf32>
    %352 = math.absf %349 : vector<8x64xf32>
    %cst_105 = arith.constant 0.000000e+00 : f32
    %353 = vector.broadcast %cst_105 : f32 to vector<8x64xf32>
    %354 = arith.subf %353, %352 : vector<8x64xf32>
    %355 = math.exp %354 : vector<8x64xf32>
    %cst_106 = arith.constant 1.000000e+00 : f32
    %356 = vector.broadcast %cst_106 : f32 to vector<8x64xf32>
    %357 = arith.addf %356, %355 : vector<8x64xf32>
    %358 = math.log %357 : vector<8x64xf32>
    %359 = arith.addf %351, %358 : vector<8x64xf32>
    %c1_107 = arith.constant 1 : index
    %c0_108 = arith.constant 0 : index
    %c0_109 = arith.constant 0 : index
    %360 = vector.load %arg9[%c1_107, %c0_108, %c0_109] : memref<2x16x64xf32, #tpu.memory_space<vmem>>, vector<1x16x64xf32>
    %361 = vector.shape_cast %360 : vector<1x16x64xf32> to vector<16x64xf32>
    %362 = math.exp %361 : vector<16x64xf32>
    %cst_110 = arith.constant 0.000000e+00 : f32
    %363 = vector.broadcast %cst_110 : f32 to vector<16x64xf32>
    %364 = arith.subf %363, %362 : vector<16x64xf32>
    %365 = vector.shape_cast %359 : vector<8x64xf32> to vector<8x1x64xf32>
    %366 = vector.shape_cast %364 : vector<16x64xf32> to vector<1x16x64xf32>
    %367 = vector.broadcast %365 : vector<8x1x64xf32> to vector<8x16x64xf32>
    %368 = vector.broadcast %366 : vector<1x16x64xf32> to vector<8x16x64xf32>
    %369 = arith.mulf %367, %368 : vector<8x16x64xf32>
    %370 = math.exp %369 : vector<8x16x64xf32>
    %371 = arith.mulf %359, %336 : vector<8x64xf32>
    %372 = tpu.transpose %341, [1, 0] : vector<8x16xf32> -> vector<16x8xf32>
    %373 = tpu.transpose %342, [1, 0] : vector<8x16xf32> -> vector<16x8xf32>
    %cst_111 = arith.constant 0.000000e+00 : f32
    %374 = vector.broadcast %cst_111 : f32 to vector<16x64xf32>
    %cst_112 = arith.constant 0.000000e+00 : f32
    %375 = vector.broadcast %cst_112 : f32 to vector<8x64xf32>
    %376 = vector.extract_strided_slice %370 {offsets = [0, 0, 0], sizes = [1, 16, 64], strides = [1, 1, 1]} : vector<8x16x64xf32> to vector<1x16x64xf32>
    %377 = vector.shape_cast %376 : vector<1x16x64xf32> to vector<16x64xf32>
    %378 = arith.mulf %377, %374 : vector<16x64xf32>
    %379 = vector.extract_strided_slice %372 {offsets = [0, 0], sizes = [16, 1], strides = [1, 1]} : vector<16x8xf32> to vector<16x1xf32>
    %380 = vector.extract_strided_slice %371 {offsets = [0, 0], sizes = [1, 64], strides = [1, 1]} : vector<8x64xf32> to vector<1x64xf32>
    %381 = vector.broadcast %379 : vector<16x1xf32> to vector<16x64xf32>
    %382 = vector.broadcast %380 : vector<1x64xf32> to vector<16x64xf32>
    %383 = arith.mulf %381, %382 : vector<16x64xf32>
    %384 = arith.addf %378, %383 : vector<16x64xf32>
    %385 = vector.extract_strided_slice %373 {offsets = [0, 0], sizes = [16, 1], strides = [1, 1]} : vector<16x8xf32> to vector<16x1xf32>
    %386 = vector.broadcast %385 : vector<16x1xf32> to vector<16x64xf32>
    %387 = arith.mulf %386, %384 : vector<16x64xf32>
    %cst_113 = arith.constant dense<0.000000e+00> : vector<64xf32>
    %388 = vector.multi_reduction <add>, %387, %cst_113 [0] : vector<16x64xf32> to vector<64xf32>
    %389 = vector.shape_cast %388 : vector<64xf32> to vector<1x64xf32>
    %c0_i32_114 = arith.constant 0 : i32
    %390 = vector.broadcast %c0_i32_114 : i32 to vector<8x64xi32>
    %391 = arith.cmpi eq, %1, %390 : vector<8x64xi32>
    %392 = vector.shape_cast %389 : vector<1x64xf32> to vector<1x64xf32>
    %393 = vector.broadcast %392 : vector<1x64xf32> to vector<8x64xf32>
    %394 = arith.select %391, %393, %375 : vector<8x64xi1>, vector<8x64xf32>
    %395 = vector.extract_strided_slice %370 {offsets = [1, 0, 0], sizes = [1, 16, 64], strides = [1, 1, 1]} : vector<8x16x64xf32> to vector<1x16x64xf32>
    %396 = vector.shape_cast %395 : vector<1x16x64xf32> to vector<16x64xf32>
    %397 = arith.mulf %396, %384 : vector<16x64xf32>
    %398 = vector.extract_strided_slice %372 {offsets = [0, 1], sizes = [16, 1], strides = [1, 1]} : vector<16x8xf32> to vector<16x1xf32>
    %399 = vector.extract_strided_slice %371 {offsets = [1, 0], sizes = [1, 64], strides = [1, 1]} : vector<8x64xf32> to vector<1x64xf32>
    %400 = vector.broadcast %398 : vector<16x1xf32> to vector<16x64xf32>
    %401 = vector.broadcast %399 : vector<1x64xf32> to vector<16x64xf32>
    %402 = arith.mulf %400, %401 : vector<16x64xf32>
    %403 = arith.addf %397, %402 : vector<16x64xf32>
    %404 = vector.extract_strided_slice %373 {offsets = [0, 1], sizes = [16, 1], strides = [1, 1]} : vector<16x8xf32> to vector<16x1xf32>
    %405 = vector.broadcast %404 : vector<16x1xf32> to vector<16x64xf32>
    %406 = arith.mulf %405, %403 : vector<16x64xf32>
    %cst_115 = arith.constant dense<0.000000e+00> : vector<64xf32>
    %407 = vector.multi_reduction <add>, %406, %cst_115 [0] : vector<16x64xf32> to vector<64xf32>
    %408 = vector.shape_cast %407 : vector<64xf32> to vector<1x64xf32>
    %c1_i32_116 = arith.constant 1 : i32
    %409 = vector.broadcast %c1_i32_116 : i32 to vector<8x64xi32>
    %410 = arith.cmpi eq, %1, %409 : vector<8x64xi32>
    %411 = vector.shape_cast %408 : vector<1x64xf32> to vector<1x64xf32>
    %412 = vector.broadcast %411 : vector<1x64xf32> to vector<8x64xf32>
    %413 = arith.select %410, %412, %394 : vector<8x64xi1>, vector<8x64xf32>
    %414 = vector.extract_strided_slice %370 {offsets = [2, 0, 0], sizes = [1, 16, 64], strides = [1, 1, 1]} : vector<8x16x64xf32> to vector<1x16x64xf32>
    %415 = vector.shape_cast %414 : vector<1x16x64xf32> to vector<16x64xf32>
    %416 = arith.mulf %415, %403 : vector<16x64xf32>
    %417 = vector.extract_strided_slice %372 {offsets = [0, 2], sizes = [16, 1], strides = [1, 1]} : vector<16x8xf32> to vector<16x1xf32>
    %418 = vector.extract_strided_slice %371 {offsets = [2, 0], sizes = [1, 64], strides = [1, 1]} : vector<8x64xf32> to vector<1x64xf32>
    %419 = vector.broadcast %417 : vector<16x1xf32> to vector<16x64xf32>
    %420 = vector.broadcast %418 : vector<1x64xf32> to vector<16x64xf32>
    %421 = arith.mulf %419, %420 : vector<16x64xf32>
    %422 = arith.addf %416, %421 : vector<16x64xf32>
    %423 = vector.extract_strided_slice %373 {offsets = [0, 2], sizes = [16, 1], strides = [1, 1]} : vector<16x8xf32> to vector<16x1xf32>
    %424 = vector.broadcast %423 : vector<16x1xf32> to vector<16x64xf32>
    %425 = arith.mulf %424, %422 : vector<16x64xf32>
    %cst_117 = arith.constant dense<0.000000e+00> : vector<64xf32>
    %426 = vector.multi_reduction <add>, %425, %cst_117 [0] : vector<16x64xf32> to vector<64xf32>
    %427 = vector.shape_cast %426 : vector<64xf32> to vector<1x64xf32>
    %c2_i32_118 = arith.constant 2 : i32
    %428 = vector.broadcast %c2_i32_118 : i32 to vector<8x64xi32>
    %429 = arith.cmpi eq, %1, %428 : vector<8x64xi32>
    %430 = vector.shape_cast %427 : vector<1x64xf32> to vector<1x64xf32>
    %431 = vector.broadcast %430 : vector<1x64xf32> to vector<8x64xf32>
    %432 = arith.select %429, %431, %413 : vector<8x64xi1>, vector<8x64xf32>
    %433 = vector.extract_strided_slice %370 {offsets = [3, 0, 0], sizes = [1, 16, 64], strides = [1, 1, 1]} : vector<8x16x64xf32> to vector<1x16x64xf32>
    %434 = vector.shape_cast %433 : vector<1x16x64xf32> to vector<16x64xf32>
    %435 = arith.mulf %434, %422 : vector<16x64xf32>
    %436 = vector.extract_strided_slice %372 {offsets = [0, 3], sizes = [16, 1], strides = [1, 1]} : vector<16x8xf32> to vector<16x1xf32>
    %437 = vector.extract_strided_slice %371 {offsets = [3, 0], sizes = [1, 64], strides = [1, 1]} : vector<8x64xf32> to vector<1x64xf32>
    %438 = vector.broadcast %436 : vector<16x1xf32> to vector<16x64xf32>
    %439 = vector.broadcast %437 : vector<1x64xf32> to vector<16x64xf32>
    %440 = arith.mulf %438, %439 : vector<16x64xf32>
    %441 = arith.addf %435, %440 : vector<16x64xf32>
    %442 = vector.extract_strided_slice %373 {offsets = [0, 3], sizes = [16, 1], strides = [1, 1]} : vector<16x8xf32> to vector<16x1xf32>
    %443 = vector.broadcast %442 : vector<16x1xf32> to vector<16x64xf32>
    %444 = arith.mulf %443, %441 : vector<16x64xf32>
    %cst_119 = arith.constant dense<0.000000e+00> : vector<64xf32>
    %445 = vector.multi_reduction <add>, %444, %cst_119 [0] : vector<16x64xf32> to vector<64xf32>
    %446 = vector.shape_cast %445 : vector<64xf32> to vector<1x64xf32>
    %c3_i32_120 = arith.constant 3 : i32
    %447 = vector.broadcast %c3_i32_120 : i32 to vector<8x64xi32>
    %448 = arith.cmpi eq, %1, %447 : vector<8x64xi32>
    %449 = vector.shape_cast %446 : vector<1x64xf32> to vector<1x64xf32>
    %450 = vector.broadcast %449 : vector<1x64xf32> to vector<8x64xf32>
    %451 = arith.select %448, %450, %432 : vector<8x64xi1>, vector<8x64xf32>
    %452 = vector.extract_strided_slice %370 {offsets = [4, 0, 0], sizes = [1, 16, 64], strides = [1, 1, 1]} : vector<8x16x64xf32> to vector<1x16x64xf32>
    %453 = vector.shape_cast %452 : vector<1x16x64xf32> to vector<16x64xf32>
    %454 = arith.mulf %453, %441 : vector<16x64xf32>
    %455 = vector.extract_strided_slice %372 {offsets = [0, 4], sizes = [16, 1], strides = [1, 1]} : vector<16x8xf32> to vector<16x1xf32>
    %456 = vector.extract_strided_slice %371 {offsets = [4, 0], sizes = [1, 64], strides = [1, 1]} : vector<8x64xf32> to vector<1x64xf32>
    %457 = vector.broadcast %455 : vector<16x1xf32> to vector<16x64xf32>
    %458 = vector.broadcast %456 : vector<1x64xf32> to vector<16x64xf32>
    %459 = arith.mulf %457, %458 : vector<16x64xf32>
    %460 = arith.addf %454, %459 : vector<16x64xf32>
    %461 = vector.extract_strided_slice %373 {offsets = [0, 4], sizes = [16, 1], strides = [1, 1]} : vector<16x8xf32> to vector<16x1xf32>
    %462 = vector.broadcast %461 : vector<16x1xf32> to vector<16x64xf32>
    %463 = arith.mulf %462, %460 : vector<16x64xf32>
    %cst_121 = arith.constant dense<0.000000e+00> : vector<64xf32>
    %464 = vector.multi_reduction <add>, %463, %cst_121 [0] : vector<16x64xf32> to vector<64xf32>
    %465 = vector.shape_cast %464 : vector<64xf32> to vector<1x64xf32>
    %c4_i32_122 = arith.constant 4 : i32
    %466 = vector.broadcast %c4_i32_122 : i32 to vector<8x64xi32>
    %467 = arith.cmpi eq, %1, %466 : vector<8x64xi32>
    %468 = vector.shape_cast %465 : vector<1x64xf32> to vector<1x64xf32>
    %469 = vector.broadcast %468 : vector<1x64xf32> to vector<8x64xf32>
    %470 = arith.select %467, %469, %451 : vector<8x64xi1>, vector<8x64xf32>
    %471 = vector.extract_strided_slice %370 {offsets = [5, 0, 0], sizes = [1, 16, 64], strides = [1, 1, 1]} : vector<8x16x64xf32> to vector<1x16x64xf32>
    %472 = vector.shape_cast %471 : vector<1x16x64xf32> to vector<16x64xf32>
    %473 = arith.mulf %472, %460 : vector<16x64xf32>
    %474 = vector.extract_strided_slice %372 {offsets = [0, 5], sizes = [16, 1], strides = [1, 1]} : vector<16x8xf32> to vector<16x1xf32>
    %475 = vector.extract_strided_slice %371 {offsets = [5, 0], sizes = [1, 64], strides = [1, 1]} : vector<8x64xf32> to vector<1x64xf32>
    %476 = vector.broadcast %474 : vector<16x1xf32> to vector<16x64xf32>
    %477 = vector.broadcast %475 : vector<1x64xf32> to vector<16x64xf32>
    %478 = arith.mulf %476, %477 : vector<16x64xf32>
    %479 = arith.addf %473, %478 : vector<16x64xf32>
    %480 = vector.extract_strided_slice %373 {offsets = [0, 5], sizes = [16, 1], strides = [1, 1]} : vector<16x8xf32> to vector<16x1xf32>
    %481 = vector.broadcast %480 : vector<16x1xf32> to vector<16x64xf32>
    %482 = arith.mulf %481, %479 : vector<16x64xf32>
    %cst_123 = arith.constant dense<0.000000e+00> : vector<64xf32>
    %483 = vector.multi_reduction <add>, %482, %cst_123 [0] : vector<16x64xf32> to vector<64xf32>
    %484 = vector.shape_cast %483 : vector<64xf32> to vector<1x64xf32>
    %c5_i32_124 = arith.constant 5 : i32
    %485 = vector.broadcast %c5_i32_124 : i32 to vector<8x64xi32>
    %486 = arith.cmpi eq, %1, %485 : vector<8x64xi32>
    %487 = vector.shape_cast %484 : vector<1x64xf32> to vector<1x64xf32>
    %488 = vector.broadcast %487 : vector<1x64xf32> to vector<8x64xf32>
    %489 = arith.select %486, %488, %470 : vector<8x64xi1>, vector<8x64xf32>
    %490 = vector.extract_strided_slice %370 {offsets = [6, 0, 0], sizes = [1, 16, 64], strides = [1, 1, 1]} : vector<8x16x64xf32> to vector<1x16x64xf32>
    %491 = vector.shape_cast %490 : vector<1x16x64xf32> to vector<16x64xf32>
    %492 = arith.mulf %491, %479 : vector<16x64xf32>
    %493 = vector.extract_strided_slice %372 {offsets = [0, 6], sizes = [16, 1], strides = [1, 1]} : vector<16x8xf32> to vector<16x1xf32>
    %494 = vector.extract_strided_slice %371 {offsets = [6, 0], sizes = [1, 64], strides = [1, 1]} : vector<8x64xf32> to vector<1x64xf32>
    %495 = vector.broadcast %493 : vector<16x1xf32> to vector<16x64xf32>
    %496 = vector.broadcast %494 : vector<1x64xf32> to vector<16x64xf32>
    %497 = arith.mulf %495, %496 : vector<16x64xf32>
    %498 = arith.addf %492, %497 : vector<16x64xf32>
    %499 = vector.extract_strided_slice %373 {offsets = [0, 6], sizes = [16, 1], strides = [1, 1]} : vector<16x8xf32> to vector<16x1xf32>
    %500 = vector.broadcast %499 : vector<16x1xf32> to vector<16x64xf32>
    %501 = arith.mulf %500, %498 : vector<16x64xf32>
    %cst_125 = arith.constant dense<0.000000e+00> : vector<64xf32>
    %502 = vector.multi_reduction <add>, %501, %cst_125 [0] : vector<16x64xf32> to vector<64xf32>
    %503 = vector.shape_cast %502 : vector<64xf32> to vector<1x64xf32>
    %c6_i32_126 = arith.constant 6 : i32
    %504 = vector.broadcast %c6_i32_126 : i32 to vector<8x64xi32>
    %505 = arith.cmpi eq, %1, %504 : vector<8x64xi32>
    %506 = vector.shape_cast %503 : vector<1x64xf32> to vector<1x64xf32>
    %507 = vector.broadcast %506 : vector<1x64xf32> to vector<8x64xf32>
    %508 = arith.select %505, %507, %489 : vector<8x64xi1>, vector<8x64xf32>
    %509 = vector.extract_strided_slice %370 {offsets = [7, 0, 0], sizes = [1, 16, 64], strides = [1, 1, 1]} : vector<8x16x64xf32> to vector<1x16x64xf32>
    %510 = vector.shape_cast %509 : vector<1x16x64xf32> to vector<16x64xf32>
    %511 = arith.mulf %510, %498 : vector<16x64xf32>
    %512 = vector.extract_strided_slice %372 {offsets = [0, 7], sizes = [16, 1], strides = [1, 1]} : vector<16x8xf32> to vector<16x1xf32>
    %513 = vector.extract_strided_slice %371 {offsets = [7, 0], sizes = [1, 64], strides = [1, 1]} : vector<8x64xf32> to vector<1x64xf32>
    %514 = vector.broadcast %512 : vector<16x1xf32> to vector<16x64xf32>
    %515 = vector.broadcast %513 : vector<1x64xf32> to vector<16x64xf32>
    %516 = arith.mulf %514, %515 : vector<16x64xf32>
    %517 = arith.addf %511, %516 : vector<16x64xf32>
    %518 = vector.extract_strided_slice %373 {offsets = [0, 7], sizes = [16, 1], strides = [1, 1]} : vector<16x8xf32> to vector<16x1xf32>
    %519 = vector.broadcast %518 : vector<16x1xf32> to vector<16x64xf32>
    %520 = arith.mulf %519, %517 : vector<16x64xf32>
    %cst_127 = arith.constant dense<0.000000e+00> : vector<64xf32>
    %521 = vector.multi_reduction <add>, %520, %cst_127 [0] : vector<16x64xf32> to vector<64xf32>
    %522 = vector.shape_cast %521 : vector<64xf32> to vector<1x64xf32>
    %c7_i32_128 = arith.constant 7 : i32
    %523 = vector.broadcast %c7_i32_128 : i32 to vector<8x64xi32>
    %524 = arith.cmpi eq, %1, %523 : vector<8x64xi32>
    %525 = vector.shape_cast %522 : vector<1x64xf32> to vector<1x64xf32>
    %526 = vector.broadcast %525 : vector<1x64xf32> to vector<8x64xf32>
    %527 = arith.select %524, %526, %508 : vector<8x64xi1>, vector<8x64xf32>
    %c1_129 = arith.constant 1 : index
    %c0_130 = arith.constant 0 : index
    %c0_131 = arith.constant 0 : index
    %528 = vector.load %arg10[%c1_129, %c0_130, %c0_131] : memref<2x1x64xf32, #tpu.memory_space<vmem>>, vector<1x1x64xf32>
    %529 = vector.shape_cast %528 : vector<1x1x64xf32> to vector<1x64xf32>
    %530 = vector.broadcast %529 : vector<1x64xf32> to vector<8x64xf32>
    %531 = arith.mulf %336, %530 : vector<8x64xf32>
    %532 = arith.addf %527, %531 : vector<8x64xf32>
    %cst_132 = arith.constant 5.000000e-01 : f32
    %533 = vector.broadcast %cst_132 : f32 to vector<8x64xf32>
    %534 = arith.mulf %533, %292 : vector<8x64xf32>
    %535 = math.tanh %534 : vector<8x64xf32>
    %cst_133 = arith.constant 1.000000e+00 : f32
    %536 = vector.broadcast %cst_133 : f32 to vector<8x64xf32>
    %537 = arith.addf %535, %536 : vector<8x64xf32>
    %cst_134 = arith.constant 5.000000e-01 : f32
    %538 = vector.broadcast %cst_134 : f32 to vector<8x64xf32>
    %539 = arith.mulf %538, %537 : vector<8x64xf32>
    %540 = arith.mulf %292, %539 : vector<8x64xf32>
    %541 = arith.mulf %532, %540 : vector<8x64xf32>
    %c1_135 = arith.constant 1 : index
    %c0_136 = arith.constant 0 : index
    %c0_137 = arith.constant 0 : index
    %542 = vector.load %arg11[%c1_135, %c0_136, %c0_137] : memref<2x64x32xf32, #tpu.memory_space<vmem>>, vector<1x64x32xf32>
    %543 = vector.shape_cast %542 : vector<1x64x32xf32> to vector<64x32xf32>
    %cst_138 = arith.constant dense<0.000000e+00> : vector<8x32xf32>
    %544 = tpu.matmul %541, %543, %cst_138 {dimension_numbers = #tpu.dot_dimension_numbers<[1], [0], [0], [1], [0, 0, 1, 1], [], []>} : vector<8x64xf32>, vector<64x32xf32>, vector<8x32xf32> -> vector<8x32xf32>
    %545 = arith.addf %273, %544 : vector<8x32xf32>
    %c0_139 = arith.constant 0 : index
    %c0_140 = arith.constant 0 : index
    %546 = vector.load %arg12[%c0_139, %c0_140] : memref<32x128xf32, #tpu.memory_space<vmem>>, vector<32x128xf32>
    %cst_141 = arith.constant dense<0.000000e+00> : vector<8x128xf32>
    %547 = tpu.matmul %545, %546, %cst_141 {dimension_numbers = #tpu.dot_dimension_numbers<[1], [0], [0], [1], [0, 0, 1, 1], [], []>} : vector<8x32xf32>, vector<32x128xf32>, vector<8x128xf32> -> vector<8x128xf32>
    %c0_142 = arith.constant 0 : index
    %c0_143 = arith.constant 0 : index
    %548 = vector.load %arg13[%c0_142, %c0_143] : memref<1x128xf32, #tpu.memory_space<vmem>>, vector<1x128xf32>
    %549 = vector.broadcast %548 : vector<1x128xf32> to vector<8x128xf32>
    %550 = arith.addf %547, %549 : vector<8x128xf32>
    %c0_144 = arith.constant 0 : index
    %c0_145 = arith.constant 0 : index
    %551 = vector.load %arg14[%c0_144, %c0_145] : memref<8x128xf32, #tpu.memory_space<vmem>>, vector<8x128xf32>
    tpu.vector_store %arg14[%c0_144, %c0_145], %550 {strides = array<i32>} : memref<8x128xf32, #tpu.memory_space<vmem>>, vector<8x128xf32>,
    return
  }
  func.func @transform_0(%arg0: i32) -> (i32, i32) {
    %c0_i32 = arith.constant 0 : i32
    %c0_i32_0 = arith.constant 0 : i32
    return %arg0, %c0_i32 : i32, i32
  }
  func.func @transform_1(%arg0: i32) -> (i32, i32, i32) {
    %c0_i32 = arith.constant 0 : i32
    %c0_i32_0 = arith.constant 0 : i32
    %c0_i32_1 = arith.constant 0 : i32
    %c0_i32_2 = arith.constant 0 : i32
    return %c0_i32, %c0_i32_0, %c0_i32_1 : i32, i32, i32
  }
  func.func @transform_2(%arg0: i32) -> (i32, i32, i32) {
    %c0_i32 = arith.constant 0 : i32
    %c0_i32_0 = arith.constant 0 : i32
    %c0_i32_1 = arith.constant 0 : i32
    %c0_i32_2 = arith.constant 0 : i32
    return %c0_i32, %c0_i32_0, %c0_i32_1 : i32, i32, i32
  }
  func.func @transform_3(%arg0: i32) -> (i32, i32, i32) {
    %c0_i32 = arith.constant 0 : i32
    %c0_i32_0 = arith.constant 0 : i32
    %c0_i32_1 = arith.constant 0 : i32
    %c0_i32_2 = arith.constant 0 : i32
    return %c0_i32, %c0_i32_0, %c0_i32_1 : i32, i32, i32
  }
  func.func @transform_4(%arg0: i32) -> (i32, i32, i32) {
    %c0_i32 = arith.constant 0 : i32
    %c0_i32_0 = arith.constant 0 : i32
    %c0_i32_1 = arith.constant 0 : i32
    %c0_i32_2 = arith.constant 0 : i32
    return %c0_i32, %c0_i32_0, %c0_i32_1 : i32, i32, i32
  }
  func.func @transform_5(%arg0: i32) -> (i32, i32, i32) {
    %c0_i32 = arith.constant 0 : i32
    %c0_i32_0 = arith.constant 0 : i32
    %c0_i32_1 = arith.constant 0 : i32
    %c0_i32_2 = arith.constant 0 : i32
    return %c0_i32, %c0_i32_0, %c0_i32_1 : i32, i32, i32
  }
  func.func @transform_6(%arg0: i32) -> (i32, i32, i32) {
    %c0_i32 = arith.constant 0 : i32
    %c0_i32_0 = arith.constant 0 : i32
    %c0_i32_1 = arith.constant 0 : i32
    %c0_i32_2 = arith.constant 0 : i32
    return %c0_i32, %c0_i32_0, %c0_i32_1 : i32, i32, i32
  }
  func.func @transform_7(%arg0: i32) -> (i32, i32, i32) {
    %c0_i32 = arith.constant 0 : i32
    %c0_i32_0 = arith.constant 0 : i32
    %c0_i32_1 = arith.constant 0 : i32
    %c0_i32_2 = arith.constant 0 : i32
    return %c0_i32, %c0_i32_0, %c0_i32_1 : i32, i32, i32
  }
  func.func @transform_8(%arg0: i32) -> (i32, i32, i32) {
    %c0_i32 = arith.constant 0 : i32
    %c0_i32_0 = arith.constant 0 : i32
    %c0_i32_1 = arith.constant 0 : i32
    %c0_i32_2 = arith.constant 0 : i32
    return %c0_i32, %c0_i32_0, %c0_i32_1 : i32, i32, i32
  }
  func.func @transform_9(%arg0: i32) -> (i32, i32, i32) {
    %c0_i32 = arith.constant 0 : i32
    %c0_i32_0 = arith.constant 0 : i32
    %c0_i32_1 = arith.constant 0 : i32
    %c0_i32_2 = arith.constant 0 : i32
    return %c0_i32, %c0_i32_0, %c0_i32_1 : i32, i32, i32
  }
  func.func @transform_10(%arg0: i32) -> (i32, i32, i32) {
    %c0_i32 = arith.constant 0 : i32
    %c0_i32_0 = arith.constant 0 : i32
    %c0_i32_1 = arith.constant 0 : i32
    %c0_i32_2 = arith.constant 0 : i32
    return %c0_i32, %c0_i32_0, %c0_i32_1 : i32, i32, i32
  }
  func.func @transform_11(%arg0: i32) -> (i32, i32) {
    %c0_i32 = arith.constant 0 : i32
    %c0_i32_0 = arith.constant 0 : i32
    %c0_i32_1 = arith.constant 0 : i32
    return %c0_i32, %c0_i32_0 : i32, i32
  }
  func.func @transform_12(%arg0: i32) -> (i32, i32) {
    %c0_i32 = arith.constant 0 : i32
    %c0_i32_0 = arith.constant 0 : i32
    %c0_i32_1 = arith.constant 0 : i32
    return %c0_i32, %c0_i32_0 : i32, i32
  }
  func.func @transform_13(%arg0: i32) -> (i32, i32) {
    %c0_i32 = arith.constant 0 : i32
    %c0_i32_0 = arith.constant 0 : i32
    return %arg0, %c0_i32 : i32, i32
  }
}

</mosaic_0001>

<llo_original>
// kernel: forward.1
$region0: #{forward.1}
  #allocation0 [shape = 'u32[]', space=smem, size = 0x4, offset = 0x4, fixed_abs, tag = 'smem constant byte address 0x4 - core index']
  #allocation1 [shape = 'u32[144,128]{1,0:T(1,128)}', space=vmem, size = 0x12000, scoped, tag = 'internal scratch']
  %s0 = inlined_call_operand.vmem [shape: f32[16,32], index: 0, kind: input, shape index: {}]
  %s1 = inlined_call_operand.vmem [shape: f32[2,1,32], index: 1, kind: input, shape index: {}]
  %s2 = inlined_call_operand.vmem [shape: f32[2,32,128], index: 2, kind: input, shape index: {}]
  %s3 = inlined_call_operand.vmem [shape: f32[2,4,64], index: 3, kind: input, shape index: {}]
  %s4 = inlined_call_operand.vmem [shape: f32[2,1,64], index: 4, kind: input, shape index: {}]
  %s5 = inlined_call_operand.vmem [shape: f32[2,64,34], index: 5, kind: input, shape index: {}]
  %s6 = inlined_call_operand.vmem [shape: f32[2,2,64], index: 6, kind: input, shape index: {}]
  %s7 = inlined_call_operand.vmem [shape: f32[2,1,64], index: 7, kind: input, shape index: {}]
  %s8 = inlined_call_operand.vmem [shape: f32[2,16,64], index: 8, kind: input, shape index: {}]
  %s9 = inlined_call_operand.vmem [shape: f32[2,1,64], index: 9, kind: input, shape index: {}]
  %s10 = inlined_call_operand.vmem [shape: f32[2,64,32], index: 10, kind: input, shape index: {}]
  %s11 = inlined_call_operand.vmem [shape: f32[32,128], index: 11, kind: input, shape index: {}]
  %s12 = inlined_call_operand.vmem [shape: f32[1,128], index: 12, kind: input, shape index: {}]
  %s13 = inlined_call_operand.vmem [shape: f32[16,128], index: 13, kind: output, shape index: {}]
  %s14 = sld [smem:[#allocation0]]
  $region85: #{forward.1} parent=0
    _
  %s16 = ssub.s32 1, %s14
  %s17 = scalar_select 0, %s16, %s14
  loop: start=0, step=1, limit=4
  $region2: #{forward.1} parent=0 // loop_pre_header
    _
  $region3: #{forward.1} parent=0 // loop_header
    %s19 = sphi 0, %s23
    %p20 = scmp.ge.s32.totalorder %s19, 4
    %s29 = sphi 0, %s31
    %s32 = sphi 0, %s29
    %s33 = sphi 0, %s32
    %s49 = sphi 0, %s33
    %s53 = sphi 0, %s53
    %s55 = sphi 0, %s53
    %s56 = sphi 0, %s55
    %s70 = sphi 0, %s56
    %s74 = sphi 0, %s74
    %s76 = sphi 0, %s74
    %s77 = sphi 0, %s76
    %s91 = sphi 0, %s77
    %s95 = sphi 0, %s95
    %s97 = sphi 0, %s95
    %s98 = sphi 0, %s97
    %s112 = sphi 0, %s98
    %s116 = sphi 0, %s116
    %s118 = sphi 0, %s116
    %s119 = sphi 0, %s118
    %s133 = sphi 0, %s119
    %s137 = sphi 0, %s137
    %s139 = sphi 0, %s137
    %s140 = sphi 0, %s139
    %s154 = sphi 0, %s140
    %s158 = sphi 0, %s158
    %s160 = sphi 0, %s158
    %s161 = sphi 0, %s160
    %s175 = sphi 0, %s161
    %s179 = sphi 0, %s179
    %s181 = sphi 0, %s179
    %s182 = sphi 0, %s181
    %s196 = sphi 0, %s182
    %s200 = sphi 0, %s200
    %s202 = sphi 0, %s200
    %s203 = sphi 0, %s202
    %s217 = sphi 0, %s203
    %s221 = sphi 0, %s221
    %s223 = sphi 0, %s221
    %s224 = sphi 0, %s223
    %s238 = sphi 0, %s224
    %s242 = sphi 0, %s242
    %s244 = sphi 0, %s242
    %s245 = sphi 0, %s244
    %s259 = sphi 0, %s245
    %s263 = sphi 0, %s263
    %s265 = sphi 0, %s263
    %s266 = sphi 0, %s265
    %s280 = sphi 0, %s266
    %s284 = sphi 0, %s284
    %s286 = sphi 0, %s284
    %s287 = sphi 0, %s286
    %s301 = sphi 0, %s287
    %s307 = sphi 0, %s309
    %s310 = sphi 0, %s307
    %s311 = sphi 0, %s310
    %s327 = sphi 0, %s311
  $region4: #{forward.1} parent=0 // loop_header_branch
    %22 = sbr.rel (%p20) target = $region8
  $region5: #{forward.1} parent=0 // loop_body
    %s24 = ssub.s32 %s19, 1
    %s25 = ssub.s32 %s19, 2
    %s26 = sadd.s32 %s19, 1
    %s27 = ssub.s32 %s19, %s26
    %p28 = scmp.eq.s32.totalorder %s27, 0
    %s30 = sadd.s32 %s29, 1
    %s31 = scalar_select %p28, %s29, %s30
    %p34 = pneg %p28
    %p35 = scmp.eq.s32.totalorder %s19, 1
    %p36 = por %p34, %p35
    %p37 = scmp.ne.s32.totalorder %s29, %s32
    %p38 = scmp.eq.s32.totalorder %s19, 0
    %p39 = por %p37, %p38
    %p40 = scmp.ne.s32.totalorder %s29, %s32
    %p41 = scmp.eq.s32.totalorder %s24, 1
    %p42 = por %p40, %p41
    %p43 = scmp.ne.s32.totalorder %s32, %s33
    %p44 = scmp.eq.s32.totalorder %s24, 0
    %p45 = por %p43, %p44
    %p46 = scmp.ne.s32.totalorder %s32, %s33
    %p47 = scmp.eq.s32.totalorder %s25, 1
    %p48 = por %p46, %p47
    %p50 = scmp.ne.s32.totalorder %s33, %s49
    %p51 = scmp.eq.s32.totalorder %s25, 0
    %p52 = por %p50, %p51
    %s54 = sadd.s32 %s53, 1
    %p57 = scmp.eq.s32.totalorder %s19, 1
    %p58 = scmp.ne.s32.totalorder %s53, %s55
    %p59 = scmp.eq.s32.totalorder %s19, 0
    %p60 = por %p58, %p59
    %p61 = scmp.ne.s32.totalorder %s53, %s55
    %p62 = scmp.eq.s32.totalorder %s24, 1
    %p63 = por %p61, %p62
    %p64 = scmp.ne.s32.totalorder %s55, %s56
    %p65 = scmp.eq.s32.totalorder %s24, 0
    %p66 = por %p64, %p65
    %p67 = scmp.ne.s32.totalorder %s55, %s56
    %p68 = scmp.eq.s32.totalorder %s25, 1
    %p69 = por %p67, %p68
    %p71 = scmp.ne.s32.totalorder %s56, %s70
    %p72 = scmp.eq.s32.totalorder %s25, 0
    %p73 = por %p71, %p72
    %s75 = sadd.s32 %s74, 1
    %p78 = scmp.eq.s32.totalorder %s19, 1
    %p79 = scmp.ne.s32.totalorder %s74, %s76
    %p80 = scmp.eq.s32.totalorder %s19, 0
    %p81 = por %p79, %p80
    %p82 = scmp.ne.s32.totalorder %s74, %s76
    %p83 = scmp.eq.s32.totalorder %s24, 1
    %p84 = por %p82, %p83
    %p85 = scmp.ne.s32.totalorder %s76, %s77
    %p86 = scmp.eq.s32.totalorder %s24, 0
    %p87 = por %p85, %p86
    %p88 = scmp.ne.s32.totalorder %s76, %s77
    %p89 = scmp.eq.s32.totalorder %s25, 1
    %p90 = por %p88, %p89
    %p92 = scmp.ne.s32.totalorder %s77, %s91
    %p93 = scmp.eq.s32.totalorder %s25, 0
    %p94 = por %p92, %p93
    %s96 = sadd.s32 %s95, 1
    %p99 = scmp.eq.s32.totalorder %s19, 1
    %p100 = scmp.ne.s32.totalorder %s95, %s97
    %p101 = scmp.eq.s32.totalorder %s19, 0
    %p102 = por %p100, %p101
    %p103 = scmp.ne.s32.totalorder %s95, %s97
    %p104 = scmp.eq.s32.totalorder %s24, 1
    %p105 = por %p103, %p104
    %p106 = scmp.ne.s32.totalorder %s97, %s98
    %p107 = scmp.eq.s32.totalorder %s24, 0
    %p108 = por %p106, %p107
    %p109 = scmp.ne.s32.totalorder %s97, %s98
    %p110 = scmp.eq.s32.totalorder %s25, 1
    %p111 = por %p109, %p110
    %p113 = scmp.ne.s32.totalorder %s98, %s112
    %p114 = scmp.eq.s32.totalorder %s25, 0
    %p115 = por %p113, %p114
    %s117 = sadd.s32 %s116, 1
    %p120 = scmp.eq.s32.totalorder %s19, 1
    %p121 = scmp.ne.s32.totalorder %s116, %s118
    %p122 = scmp.eq.s32.totalorder %s19, 0
    %p123 = por %p121, %p122
    %p124 = scmp.ne.s32.totalorder %s116, %s118
    %p125 = scmp.eq.s32.totalorder %s24, 1
    %p126 = por %p124, %p125
    %p127 = scmp.ne.s32.totalorder %s118, %s119
    %p128 = scmp.eq.s32.totalorder %s24, 0
    %p129 = por %p127, %p128
    %p130 = scmp.ne.s32.totalorder %s118, %s119
    %p131 = scmp.eq.s32.totalorder %s25, 1
    %p132 = por %p130, %p131
    %p134 = scmp.ne.s32.totalorder %s119, %s133
    %p135 = scmp.eq.s32.totalorder %s25, 0
    %p136 = por %p134, %p135
    %s138 = sadd.s32 %s137, 1
    %p141 = scmp.eq.s32.totalorder %s19, 1
    %p142 = scmp.ne.s32.totalorder %s137, %s139
    %p143 = scmp.eq.s32.totalorder %s19, 0
    %p144 = por %p142, %p143
    %p145 = scmp.ne.s32.totalorder %s137, %s139
    %p146 = scmp.eq.s32.totalorder %s24, 1
    %p147 = por %p145, %p146
    %p148 = scmp.ne.s32.totalorder %s139, %s140
    %p149 = scmp.eq.s32.totalorder %s24, 0
    %p150 = por %p148, %p149
    %p151 = scmp.ne.s32.totalorder %s139, %s140
    %p152 = scmp.eq.s32.totalorder %s25, 1
    %p153 = por %p151, %p152
    %p155 = scmp.ne.s32.totalorder %s140, %s154
    %p156 = scmp.eq.s32.totalorder %s25, 0
    %p157 = por %p155, %p156
    %s159 = sadd.s32 %s158, 1
    %p162 = scmp.eq.s32.totalorder %s19, 1
    %p163 = scmp.ne.s32.totalorder %s158, %s160
    %p164 = scmp.eq.s32.totalorder %s19, 0
    %p165 = por %p163, %p164
    %p166 = scmp.ne.s32.totalorder %s158, %s160
    %p167 = scmp.eq.s32.totalorder %s24, 1
    %p168 = por %p166, %p167
    %p169 = scmp.ne.s32.totalorder %s160, %s161
    %p170 = scmp.eq.s32.totalorder %s24, 0
    %p171 = por %p169, %p170
    %p172 = scmp.ne.s32.totalorder %s160, %s161
    %p173 = scmp.eq.s32.totalorder %s25, 1
    %p174 = por %p172, %p173
    %p176 = scmp.ne.s32.totalorder %s161, %s175
    %p177 = scmp.eq.s32.totalorder %s25, 0
    %p178 = por %p176, %p177
    %s180 = sadd.s32 %s179, 1
    %p183 = scmp.eq.s32.totalorder %s19, 1
    %p184 = scmp.ne.s32.totalorder %s179, %s181
    %p185 = scmp.eq.s32.totalorder %s19, 0
    %p186 = por %p184, %p185
    %p187 = scmp.ne.s32.totalorder %s179, %s181
    %p188 = scmp.eq.s32.totalorder %s24, 1
    %p189 = por %p187, %p188
    %p190 = scmp.ne.s32.totalorder %s181, %s182
    %p191 = scmp.eq.s32.totalorder %s24, 0
    %p192 = por %p190, %p191
    %p193 = scmp.ne.s32.totalorder %s181, %s182
    %p194 = scmp.eq.s32.totalorder %s25, 1
    %p195 = por %p193, %p194
    %p197 = scmp.ne.s32.totalorder %s182, %s196
    %p198 = scmp.eq.s32.totalorder %s25, 0
    %p199 = por %p197, %p198
    %s201 = sadd.s32 %s200, 1
    %p204 = scmp.eq.s32.totalorder %s19, 1
    %p205 = scmp.ne.s32.totalorder %s200, %s202
    %p206 = scmp.eq.s32.totalorder %s19, 0
    %p207 = por %p205, %p206
    %p208 = scmp.ne.s32.totalorder %s200, %s202
    %p209 = scmp.eq.s32.totalorder %s24, 1
    %p210 = por %p208, %p209
    %p211 = scmp.ne.s32.totalorder %s202, %s203
    %p212 = scmp.eq.s32.totalorder %s24, 0
    %p213 = por %p211, %p212
    %p214 = scmp.ne.s32.totalorder %s202, %s203
    %p215 = scmp.eq.s32.totalorder %s25, 1
    %p216 = por %p214, %p215
    %p218 = scmp.ne.s32.totalorder %s203, %s217
    %p219 = scmp.eq.s32.totalorder %s25, 0
    %p220 = por %p218, %p219
    %s222 = sadd.s32 %s221, 1
    %p225 = scmp.eq.s32.totalorder %s19, 1
    %p226 = scmp.ne.s32.totalorder %s221, %s223
    %p227 = scmp.eq.s32.totalorder %s19, 0
    %p228 = por %p226, %p227
    %p229 = scmp.ne.s32.totalorder %s221, %s223
    %p230 = scmp.eq.s32.totalorder %s24, 1
    %p231 = por %p229, %p230
    %p232 = scmp.ne.s32.totalorder %s223, %s224
    %p233 = scmp.eq.s32.totalorder %s24, 0
    %p234 = por %p232, %p233
    %p235 = scmp.ne.s32.totalorder %s223, %s224
    %p236 = scmp.eq.s32.totalorder %s25, 1
    %p237 = por %p235, %p236
    %p239 = scmp.ne.s32.totalorder %s224, %s238
    %p240 = scmp.eq.s32.totalorder %s25, 0
    %p241 = por %p239, %p240
    %s243 = sadd.s32 %s242, 1
    %p246 = scmp.eq.s32.totalorder %s19, 1
    %p247 = scmp.ne.s32.totalorder %s242, %s244
    %p248 = scmp.eq.s32.totalorder %s19, 0
    %p249 = por %p247, %p248
    %p250 = scmp.ne.s32.totalorder %s242, %s244
    %p251 = scmp.eq.s32.totalorder %s24, 1
    %p252 = por %p250, %p251
    %p253 = scmp.ne.s32.totalorder %s244, %s245
    %p254 = scmp.eq.s32.totalorder %s24, 0
    %p255 = por %p253, %p254
    %p256 = scmp.ne.s32.totalorder %s244, %s245
    %p257 = scmp.eq.s32.totalorder %s25, 1
    %p258 = por %p256, %p257
    %p260 = scmp.ne.s32.totalorder %s245, %s259
    %p261 = scmp.eq.s32.totalorder %s25, 0
    %p262 = por %p260, %p261
    %s264 = sadd.s32 %s263, 1
    %p267 = scmp.eq.s32.totalorder %s19, 1
    %p268 = scmp.ne.s32.totalorder %s263, %s265
    %p269 = scmp.eq.s32.totalorder %s19, 0
    %p270 = por %p268, %p269
    %p271 = scmp.ne.s32.totalorder %s263, %s265
    %p272 = scmp.eq.s32.totalorder %s24, 1
    %p273 = por %p271, %p272
    %p274 = scmp.ne.s32.totalorder %s265, %s266
    %p275 = scmp.eq.s32.totalorder %s24, 0
    %p276 = por %p274, %p275
    %p277 = scmp.ne.s32.totalorder %s265, %s266
    %p278 = scmp.eq.s32.totalorder %s25, 1
    %p279 = por %p277, %p278
    %p281 = scmp.ne.s32.totalorder %s266, %s280
    %p282 = scmp.eq.s32.totalorder %s25, 0
    %p283 = por %p281, %p282
    %s285 = sadd.s32 %s284, 1
    %p288 = scmp.eq.s32.totalorder %s19, 1
    %p289 = scmp.ne.s32.totalorder %s284, %s286
    %p290 = scmp.eq.s32.totalorder %s19, 0
    %p291 = por %p289, %p290
    %p292 = scmp.ne.s32.totalorder %s284, %s286
    %p293 = scmp.eq.s32.totalorder %s24, 1
    %p294 = por %p292, %p293
    %p295 = scmp.ne.s32.totalorder %s286, %s287
    %p296 = scmp.eq.s32.totalorder %s24, 0
    %p297 = por %p295, %p296
    %p298 = scmp.ne.s32.totalorder %s286, %s287
    %p299 = scmp.eq.s32.totalorder %s25, 1
    %p300 = por %p298, %p299
    %p302 = scmp.ne.s32.totalorder %s287, %s301
    %p303 = scmp.eq.s32.totalorder %s25, 0
    %p304 = por %p302, %p303
    %s305 = ssub.s32 %s19, %s26
    %p306 = scmp.eq.s32.totalorder %s305, 0
    %s308 = sadd.s32 %s307, 1
    %s309 = scalar_select %p306, %s307, %s308
    %p312 = pneg %p306
    %p313 = scmp.eq.s32.totalorder %s19, 1
    %p314 = por %p312, %p313
    %p315 = scmp.ne.s32.totalorder %s307, %s310
    %p316 = scmp.eq.s32.totalorder %s19, 0
    %p317 = por %p315, %p316
    %p318 = scmp.ne.s32.totalorder %s307, %s310
    %p319 = scmp.eq.s32.totalorder %s24, 1
    %p320 = por %p318, %p319
    %p321 = scmp.ne.s32.totalorder %s310, %s311
    %p322 = scmp.eq.s32.totalorder %s24, 0
    %p323 = por %p321, %p322
    %p324 = scmp.ne.s32.totalorder %s310, %s311
    %p325 = scmp.eq.s32.totalorder %s25, 1
    %p326 = por %p324, %p325
    %p328 = scmp.ne.s32.totalorder %s311, %s327
    %p329 = scmp.eq.s32.totalorder %s25, 0
    %p330 = por %p328, %p329
    %p331 = scmp.le.s32.totalorder 1, %s19
    %p332 = scmp.lt.s32.totalorder %s19, 3
    %p333 = pnand %p331, %p332
    %p334 = pneg %p333
    // Predicated region
    $region9: #{forward.1} parent=5 // pred_check
      _
    $region10: #{forward.1} parent=5 // pred_check_branch
      %336 = sbr.rel (%p333) target = $region12
    $region11: #{forward.1} parent=5 // pred_region
      %s337 = ssub.s32 %s19, 1
      // Predicated region
      $region13: #{forward.1} parent=11 // pred_check
        %p338 = pneg %p66
      $region14: #{forward.1} parent=11 // pred_check_branch
        %340 = sbr.rel (%p338) target = $region16
      $region15: #{forward.1} parent=11 // pred_region
        _
      $region16: #{forward.1} parent=11 // pred_fallthru
        _
      // Predicated region
      $region17: #{forward.1} parent=11 // pred_check
        %p341 = pneg %p87
      $region18: #{forward.1} parent=11 // pred_check_branch
        %343 = sbr.rel (%p341) target = $region20
      $region19: #{forward.1} parent=11 // pred_region
        _
      $region20: #{forward.1} parent=11 // pred_fallthru
        _
      // Predicated region
      $region21: #{forward.1} parent=11 // pred_check
        %p344 = pneg %p108
      $region22: #{forward.1} parent=11 // pred_check_branch
        %346 = sbr.rel (%p344) target = $region24
      $region23: #{forward.1} parent=11 // pred_region
        _
      $region24: #{forward.1} parent=11 // pred_fallthru
        _
      // Predicated region
      $region25: #{forward.1} parent=11 // pred_check
        %p347 = pneg %p129
      $region26: #{forward.1} parent=11 // pred_check_branch
        %349 = sbr.rel (%p347) target = $region28
      $region27: #{forward.1} parent=11 // pred_region
        _
      $region28: #{forward.1} parent=11 // pred_fallthru
        _
      // Predicated region
      $region29: #{forward.1} parent=11 // pred_check
        %p350 = pneg %p150
      $region30: #{forward.1} parent=11 // pred_check_branch
        %352 = sbr.rel (%p350) target = $region32
      $region31: #{forward.1} parent=11 // pred_region
        _
      $region32: #{forward.1} parent=11 // pred_fallthru
        _
      // Predicated region
      $region33: #{forward.1} parent=11 // pred_check
        %p353 = pneg %p171
      $region34: #{forward.1} parent=11 // pred_check_branch
        %355 = sbr.rel (%p353) target = $region36
      $region35: #{forward.1} parent=11 // pred_region
        _
      $region36: #{forward.1} parent=11 // pred_fallthru
        _
      // Predicated region
      $region37: #{forward.1} parent=11 // pred_check
        %p356 = pneg %p192
      $region38: #{forward.1} parent=11 // pred_check_branch
        %358 = sbr.rel (%p356) target = $region40
      $region39: #{forward.1} parent=11 // pred_region
        _
      $region40: #{forward.1} parent=11 // pred_fallthru
        _
      // Predicated region
      $region41: #{forward.1} parent=11 // pred_check
        %p359 = pneg %p213
      $region42: #{forward.1} parent=11 // pred_check_branch
        %361 = sbr.rel (%p359) target = $region44
      $region43: #{forward.1} parent=11 // pred_region
        _
      $region44: #{forward.1} parent=11 // pred_fallthru
        _
      // Predicated region
      $region45: #{forward.1} parent=11 // pred_check
        %p362 = pneg %p234
      $region46: #{forward.1} parent=11 // pred_check_branch
        %364 = sbr.rel (%p362) target = $region48
      $region47: #{forward.1} parent=11 // pred_region
        _
      $region48: #{forward.1} parent=11 // pred_fallthru
        _
      // Predicated region
      $region49: #{forward.1} parent=11 // pred_check
        %p365 = pneg %p255
      $region50: #{forward.1} parent=11 // pred_check_branch
        %367 = sbr.rel (%p365) target = $region52
      $region51: #{forward.1} parent=11 // pred_region
        _
      $region52: #{forward.1} parent=11 // pred_fallthru
        _
      // Predicated region
      $region53: #{forward.1} parent=11 // pred_check
        %p368 = pneg %p276
      $region54: #{forward.1} parent=11 // pred_check_branch
        %370 = sbr.rel (%p368) target = $region56
      $region55: #{forward.1} parent=11 // pred_region
        _
      $region56: #{forward.1} parent=11 // pred_fallthru
        _
      // Predicated region
      $region57: #{forward.1} parent=11 // pred_check
        %p371 = pneg %p297
      $region58: #{forward.1} parent=11 // pred_check_branch
        %373 = sbr.rel (%p371) target = $region60
      $region59: #{forward.1} parent=11 // pred_region
        _
      $region60: #{forward.1} parent=11 // pred_fallthru
        _
    $region12: #{forward.1} parent=5 // pred_fallthru
      _
    %p374 = scmp.lt.s32.totalorder %s19, 2
    // Predicated region
    $region61: #{forward.1} parent=5 // pred_check
      %p375 = pneg %p374
    $region62: #{forward.1} parent=5 // pred_check_branch
      %377 = sbr.rel (%p375) target = $region64
    $region63: #{forward.1} parent=5 // pred_region
      // Predicated region
      $region65: #{forward.1} parent=63 // pred_check
        %p378 = pneg %p39
      $region66: #{forward.1} parent=63 // pred_check_branch
        %380 = sbr.rel (%p378) target = $region68
      $region67: #{forward.1} parent=63 // pred_region
        %p381 = scmp.lt.s32.totalorder %s19, 1
        %s382 = scalar_select %p381, %s19, 1
        %s383 = smul.addr %s382, 8
        %s384 = scalar_lea.vmem %s0, %s383
      $region68: #{forward.1} parent=63 // pred_fallthru
        _
    $region64: #{forward.1} parent=5 // pred_fallthru
      _
    %p385 = scmp.le.s32.totalorder 1, %s19
    %p386 = scmp.lt.s32.totalorder %s19, 3
    %p387 = pnand %p385, %p386
    %p388 = pneg %p387
    // Predicated region
    $region69: #{forward.1} parent=5 // pred_check
      _
    $region70: #{forward.1} parent=5 // pred_check_branch
      %390 = sbr.rel (%p387) target = $region72
    $region71: #{forward.1} parent=5 // pred_region
      %s391 = ssub.s32 %s19, 1
      %p392 = scmp.lt.s32.totalorder %s24, 1
      %s393 = scalar_select %p392, %s24, 1
      %s394 = smul.addr %s393, 8
      %s395 = scalar_lea.vmem %s0, %s394
      %p396 = pneg %p45
      %p397 = pneg %p42
      %p398 = pneg %p66
      %p399 = pneg %p63
      %p400 = pneg %p87
      %p401 = pneg %p84
      %p402 = pneg %p108
      %p403 = pneg %p105
      %p404 = pneg %p129
      %p405 = pneg %p126
      %p406 = pneg %p150
      %p407 = pneg %p147
      %p408 = pneg %p171
      %p409 = pneg %p168
      %p410 = pneg %p192
      %p411 = pneg %p189
      %p412 = pneg %p213
      %p413 = pneg %p210
      %p414 = pneg %p234
      %p415 = pneg %p231
      %p416 = pneg %p255
      %p417 = pneg %p252
      %p418 = pneg %p276
      %p419 = pneg %p273
      %p420 = pneg %p297
      %p421 = pneg %p294
      %p422 = pneg %p323
      %p423 = pneg %p320
      %p424 = scmp.lt.s32.totalorder %s24, 1
      %s425 = scalar_select %p424, %s24, 1
      %s426 = smul.addr %s425, 8
      %s427 = scalar_lea.vmem %s13, %s426
      %p428 = scmp.lt.s32.totalorder %s24, 1
      %s429 = scalar_select %p428, %s24, 1
      %s430 = smul.addr %s429, 8
      %s431 = scalar_lea.vmem %s0, %s430
      %p432 = scmp.lt.s32.totalorder %s24, 1
      %s433 = scalar_select %p432, %s24, 1
      %s434 = smul.addr %s433, 8
      %s435 = scalar_lea.vmem %s13, %s434
      %v436 = vld [vmem:[%s431] sm:$0xff]
      %v437 = vlaneseq
      %v438 = vshrl.u32 %v437, 7
      %v439 = vmul.f32 %v436, %v436
      %vm440 = vcmask 261120
      %v441 = vsel %vm440, %v439, 0.0
      %442 = vadd.xlane.f32.xlu0 %v441
      %v443 = vpop.xlane.xlu0 %442
      %v444 = vrcp.pop 32.0
      %v445 = vmul.f32 %v443, %v444
      %v446 = vadd.f32 %v445, 1e-05
      %v447 = vrsqrt.pop %v446
      %v448 = vmul.f32 %v436, %v447
      %v449 = vld [vmem:[%s1] sm:$0x1]
      %v451 = vlaneseq
      %v452 = vshrl.u32 %v451, 7
      %v453 = vsub.s32 0, %v452
      %v454 = vrot.slane %v449, %v453
      %v456 = vmul.f32 %v448, %v454
      %v457 = vld [vmem:[%s2] sm:$0xff]
      %v458 = vld [vmem:[%s2 + $0x8] sm:$0xff]
      %v459 = vld [vmem:[%s2 + $0x10] sm:$0xff]
      %v460 = vld [vmem:[%s2 + $0x18] sm:$0xff]
      %v462 = vsel %vm440, %v456, 0
      %464 = vmatprep.subr.mxu0 0.0
      %465 = vmatpush1.msra.mxu0 %v457
      %466 = vmatprep.subr.mxu0 0.0
      %467 = vmatpush1.msra.mxu0 %v458
      %468 = vmatprep.subr.mxu0 0.0
      %469 = vmatpush1.msra.mxu0 %v459
      %470 = vmatprep.subr.mxu0 0.0
      %471 = vmatpush1.msra.mxu0 %v460
      %472 = vmatprep.subr.mxu0 0.0
      %473 = vmatpush1.msra.mxu0 0.0
      %474 = vmatprep.subr.mxu0 0.0
      %475 = vmatpush1.msra.mxu0 0.0
      %476 = vmatprep.subr.mxu0 0.0
      %477 = vmatpush1.msra.mxu0 0.0
      %478 = vmatprep.subr.mxu0 0.0
      %479 = vmatpush1.msra.mxu0 0.0
      %480 = vmatprep.subr.mxu0 0.0
      %481 = vmatpush1.msra.mxu0 0.0
      %482 = vmatprep.subr.mxu0 0.0
      %483 = vmatpush1.msra.mxu0 0.0
      %484 = vmatprep.subr.mxu0 0.0
      %485 = vmatpush1.msra.mxu0 0.0
      %486 = vmatprep.subr.mxu0 0.0
      %487 = vmatpush1.msra.mxu0 0.0
      %488 = vmatprep.subr.mxu0 0.0
      %489 = vmatpush1.msra.mxu0 0.0
      %490 = vmatprep.subr.mxu0 0.0
      %491 = vmatpush1.msra.mxu0 0.0
      %492 = vmatprep.subr.mxu0 0.0
      %493 = vmatpush1.msra.mxu0 0.0
      %494 = vmatprep.subr.mxu0 0.0
      %495 = vmatpush1.msra.mxu0 0.0
      %496 = vmatprep.subr.mxu0 0.0
      %497 = vmatpush1.msra.mxu0 0.0
      %498 = vmatprep.subr.mxu0 0.0
      %499 = vmatpush1.msra.mxu0 0.0
      %500 = vmatprep.subr.mxu0 0.0
      %501 = vmatpush1.msra.mxu0 0.0
      %502 = vmatprep.subr.mxu0 0.0
      %503 = vmatpush1.msra.mxu0 0.0
      %504 = vmatprep.subr.mxu0 0.0
      %505 = vmatpush1.msra.mxu0 0.0
      %506 = vmatprep.subr.mxu0 0.0
      %507 = vmatpush1.msra.mxu0 0.0
      %508 = vmatprep.subr.mxu0 0.0
      %509 = vmatpush1.msra.mxu0 0.0
      %510 = vmatprep.subr.mxu0 0.0
      %511 = vmatpush1.msra.mxu0 0.0
      %512 = vmatprep.subr.mxu0 0.0
      %513 = vmatpush1.msra.mxu0 0.0
      %514 = vmatprep.subr.mxu0 0.0
      %515 = vmatpush1.msra.mxu0 0.0
      %516 = vmatprep.subr.mxu0 0.0
      %517 = vmatpush1.msra.mxu0 0.0
      %518 = vmatprep.subr.mxu0 0.0
      %519 = vmatpush1.msra.mxu0 0.0
      %520 = vmatprep.subr.mxu0 0.0
      %521 = vmatpush1.msra.mxu0 0.0
      %522 = vmatprep.subr.mxu0 0.0
      %523 = vmatpush1.msra.mxu0 0.0
      %524 = vmatprep.subr.mxu0 0.0
      %525 = vmatpush1.msra.mxu0 0.0
      %526 = vmatprep.subr.mxu0 0.0
      %527 = vmatpush1.msra.mxu0 0.0
      %528 = vmatprep.mubr.f32.mxu0 0.0
      %529 = vmatmul.mubr.f32.gmra.mrb[0].mxu0 %v462
      %v530 = vpop.f32.mrb[0].mxu0
      %v531 = vadd.f32 0.0, %v530
      %v532 = vpop.f32.mrb[0].mxu0
      %533 = vdwg.mxu0
      %v534 = vld [vmem:[%s3] sm:$0xf]
      %v535 = vld [vmem:[%s4] sm:$0x1]
      %v536 = vlaneseq
      %v537 = vshrl.u32 %v536, 7
      %v538 = vsub.s32 3, %v537
      %v539 = vrot.slane %v534, %v538
      %v540 = vmul.f32 %v539, %v531
      %v542 = vlaneseq
      %v543 = vshrl.u32 %v542, 7
      %v544 = vsub.s32 0, %v543
      %v545 = vrot.slane %v535, %v544
      %v547 = vadd.f32 %v545, %v540
      %vm548 = vcmp.ge.s32.totalorder %v438, 3
      %v549 = vrot.slane %v531, 5
      %v550 = vsel %vm548, %v549, 0.0
      %v551 = vlaneseq
      %v552 = vshrl.u32 %v551, 7
      %v553 = vsub.s32 0, %v552
      %v554 = vrot.slane %v534, %v553
      %v555 = vmul.f32 %v554, %v550
      %v556 = vadd.f32 %v547, %v555
      %vm557 = vcmp.ge.s32.totalorder %v438, 2
      %v558 = vrot.slane %v531, 6
      %v559 = vsel %vm557, %v558, 0.0
      %v560 = vlaneseq
      %v561 = vshrl.u32 %v560, 7
      %v562 = vsub.s32 1, %v561
      %v563 = vrot.slane %v534, %v562
      %v564 = vmul.f32 %v563, %v559
      %v565 = vadd.f32 %v556, %v564
      %vm566 = vcmp.ge.s32.totalorder %v438, 1
      %v567 = vrot.slane %v531, 7
      %v568 = vsel %vm566, %v567, 0.0
      %v569 = vlaneseq
      %v570 = vshrl.u32 %v569, 7
      %v571 = vsub.s32 2, %v570
      %v572 = vrot.slane %v534, %v571
      %v573 = vmul.f32 %v572, %v568
      %v574 = vadd.f32 %v565, %v573
      %v575 = vmul.f32 %v574, 0.5
      %v576 = vtanh.pop %v575
      %v577 = vadd.f32 %v576, 1.0
      %v578 = vmul.f32 %v577, 0.5
      %v579 = vmul.f32 %v574, %v578
      %v580 = vld [vmem:[%s5] sm:$0xff]
      %v581 = vld [vmem:[%s5 + $0x8] sm:$0xff]
      %v582 = vld [vmem:[%s5 + $0x10] sm:$0xff]
      %v583 = vld [vmem:[%s5 + $0x18] sm:$0xff]
      %v584 = vld [vmem:[%s5 + $0x20] sm:$0xff]
      %v585 = vld [vmem:[%s5 + $0x28] sm:$0xff]
      %v586 = vld [vmem:[%s5 + $0x30] sm:$0xff]
      %v587 = vld [vmem:[%s5 + $0x38] sm:$0xff]
      %vm588 = vcmask 523264
      %v590 = vsel %vm588, %v579, 0
      %592 = vmatprep.subr.mxu0 0.0
      %593 = vmatpush1.msra.mxu0 %v580
      %594 = vmatprep.subr.mxu0 0.0
      %595 = vmatpush1.msra.mxu0 %v581
      %596 = vmatprep.subr.mxu0 0.0
      %597 = vmatpush1.msra.mxu0 %v582
      %598 = vmatprep.subr.mxu0 0.0
      %599 = vmatpush1.msra.mxu0 %v583
      %600 = vmatprep.subr.mxu0 0.0
      %601 = vmatpush1.msra.mxu0 %v584
      %602 = vmatprep.subr.mxu0 0.0
      %603 = vmatpush1.msra.mxu0 %v585
      %604 = vmatprep.subr.mxu0 0.0
      %605 = vmatpush1.msra.mxu0 %v586
      %606 = vmatprep.subr.mxu0 0.0
      %607 = vmatpush1.msra.mxu0 %v587
      %608 = vmatprep.subr.mxu0 0.0
      %609 = vmatpush1.msra.mxu0 0.0
      %610 = vmatprep.subr.mxu0 0.0
      %611 = vmatpush1.msra.mxu0 0.0
      %612 = vmatprep.subr.mxu0 0.0
      %613 = vmatpush1.msra.mxu0 0.0
      %614 = vmatprep.subr.mxu0 0.0
      %615 = vmatpush1.msra.mxu0 0.0
      %616 = vmatprep.subr.mxu0 0.0
      %617 = vmatpush1.msra.mxu0 0.0
      %618 = vmatprep.subr.mxu0 0.0
      %619 = vmatpush1.msra.mxu0 0.0
      %620 = vmatprep.subr.mxu0 0.0
      %621 = vmatpush1.msra.mxu0 0.0
      %622 = vmatprep.subr.mxu0 0.0
      %623 = vmatpush1.msra.mxu0 0.0
      %624 = vmatprep.subr.mxu0 0.0
      %625 = vmatpush1.msra.mxu0 0.0
      %626 = vmatprep.subr.mxu0 0.0
      %627 = vmatpush1.msra.mxu0 0.0
      %628 = vmatprep.subr.mxu0 0.0
      %629 = vmatpush1.msra.mxu0 0.0
      %630 = vmatprep.subr.mxu0 0.0
      %631 = vmatpush1.msra.mxu0 0.0
      %632 = vmatprep.subr.mxu0 0.0
      %633 = vmatpush1.msra.mxu0 0.0
      %634 = vmatprep.subr.mxu0 0.0
      %635 = vmatpush1.msra.mxu0 0.0
      %636 = vmatprep.subr.mxu0 0.0
      %637 = vmatpush1.msra.mxu0 0.0
      %638 = vmatprep.subr.mxu0 0.0
      %639 = vmatpush1.msra.mxu0 0.0
      %640 = vmatprep.subr.mxu0 0.0
      %641 = vmatpush1.msra.mxu0 0.0
      %642 = vmatprep.subr.mxu0 0.0
      %643 = vmatpush1.msra.mxu0 0.0
      %644 = vmatprep.subr.mxu0 0.0
      %645 = vmatpush1.msra.mxu0 0.0
      %646 = vmatprep.subr.mxu0 0.0
      %647 = vmatpush1.msra.mxu0 0.0
      %648 = vmatprep.subr.mxu0 0.0
      %649 = vmatpush1.msra.mxu0 0.0
      %650 = vmatprep.subr.mxu0 0.0
      %651 = vmatpush1.msra.mxu0 0.0
      %652 = vmatprep.subr.mxu0 0.0
      %653 = vmatpush1.msra.mxu0 0.0
      %654 = vmatprep.subr.mxu0 0.0
      %655 = vmatpush1.msra.mxu0 0.0
      %656 = vmatprep.mubr.f32.mxu0 0.0
      %657 = vmatmul.mubr.f32.gmra.mrb[0].mxu0 %v590
      %v658 = vpop.f32.mrb[0].mxu0
      %v659 = vadd.f32 0.0, %v658
      %v660 = vpop.f32.mrb[0].mxu0
      %661 = vdwg.mxu0
      %v662 = vld [vmem:[%s6] sm:$0x3]
      %v663 = vld [vmem:[%s7] sm:$0x1]
      %v665 = vlaneseq
      %v666 = vshrl.u32 %v665, 7
      %v667 = vsub.s32 0, %v666
      %v668 = vrot.slane %v663, %v667
      %vm670 = vcmask 15360
      %v672 = vsel %vm670, %v659, 0
      %vm674 = vcmask 1041408
      %v676 = vsel %vm674, %v662, 0
      %678 = vmatprep.subr.mxu0 0.0
      %679 = vmatpush1.msra.mxu0 %v676
      %680 = vmatprep.subr.mxu0 0.0
      %681 = vmatpush1.msra.mxu0 0.0
      %682 = vmatprep.subr.mxu0 0.0
      %683 = vmatpush1.msra.mxu0 0.0
      %684 = vmatprep.subr.mxu0 0.0
      %685 = vmatpush1.msra.mxu0 0.0
      %686 = vmatprep.subr.mxu0 0.0
      %687 = vmatpush1.msra.mxu0 0.0
      %688 = vmatprep.subr.mxu0 0.0
      %689 = vmatpush1.msra.mxu0 0.0
      %690 = vmatprep.subr.mxu0 0.0
      %691 = vmatpush1.msra.mxu0 0.0
      %692 = vmatprep.subr.mxu0 0.0
      %693 = vmatpush1.msra.mxu0 0.0
      %694 = vmatprep.subr.mxu0 0.0
      %695 = vmatpush1.msra.mxu0 0.0
      %696 = vmatprep.subr.mxu0 0.0
      %697 = vmatpush1.msra.mxu0 0.0
      %698 = vmatprep.subr.mxu0 0.0
      %699 = vmatpush1.msra.mxu0 0.0
      %700 = vmatprep.subr.mxu0 0.0
      %701 = vmatpush1.msra.mxu0 0.0
      %702 = vmatprep.subr.mxu0 0.0
      %703 = vmatpush1.msra.mxu0 0.0
      %704 = vmatprep.subr.mxu0 0.0
      %705 = vmatpush1.msra.mxu0 0.0
      %706 = vmatprep.subr.mxu0 0.0
      %707 = vmatpush1.msra.mxu0 0.0
      %708 = vmatprep.subr.mxu0 0.0
      %709 = vmatpush1.msra.mxu0 0.0
      %710 = vmatprep.subr.mxu0 0.0
      %711 = vmatpush1.msra.mxu0 0.0
      %712 = vmatprep.subr.mxu0 0.0
      %713 = vmatpush1.msra.mxu0 0.0
      %714 = vmatprep.subr.mxu0 0.0
      %715 = vmatpush1.msra.mxu0 0.0
      %716 = vmatprep.subr.mxu0 0.0
      %717 = vmatpush1.msra.mxu0 0.0
      %718 = vmatprep.subr.mxu0 0.0
      %719 = vmatpush1.msra.mxu0 0.0
      %720 = vmatprep.subr.mxu0 0.0
      %721 = vmatpush1.msra.mxu0 0.0
      %722 = vmatprep.subr.mxu0 0.0
      %723 = vmatpush1.msra.mxu0 0.0
      %724 = vmatprep.subr.mxu0 0.0
      %725 = vmatpush1.msra.mxu0 0.0
      %726 = vmatprep.subr.mxu0 0.0
      %727 = vmatpush1.msra.mxu0 0.0
      %728 = vmatprep.subr.mxu0 0.0
      %729 = vmatpush1.msra.mxu0 0.0
      %730 = vmatprep.subr.mxu0 0.0
      %731 = vmatpush1.msra.mxu0 0.0
      %732 = vmatprep.subr.mxu0 0.0
      %733 = vmatpush1.msra.mxu0 0.0
      %734 = vmatprep.subr.mxu0 0.0
      %735 = vmatpush1.msra.mxu0 0.0
      %736 = vmatprep.subr.mxu0 0.0
      %737 = vmatpush1.msra.mxu0 0.0
      %738 = vmatprep.subr.mxu0 0.0
      %739 = vmatpush1.msra.mxu0 0.0
      %740 = vmatprep.subr.mxu0 0.0
      %741 = vmatpush1.msra.mxu0 0.0
      %742 = vmatprep.mubr.f32.mxu0 0.0
      %743 = vmatmul.mubr.f32.gmra.mrb[0].mxu0 %v672
      %v744 = vpop.f32.mrb[0].mxu0
      %v745 = vadd.f32 %v668, %v744
      %v746 = vpop.f32.mrb[0].mxu0
      %747 = vdwg.mxu0
      %v748 = vmax.f32 %v745, 0.0
      %v749 = vand.u32 2147483647, %v745
      %v750 = vsub.f32 0.0, %v749
      %v751 = vmul.f32 %v750, 1.442695
      %v752 = vpow.pop %v751
      %v753 = vadd.f32 %v752, 1.0
      %v754 = vlog2.pop %v753
      %v755 = vmul.f32 %v754, 0.6931472
      %v756 = vadd.f32 %v748, %v755
      %v757 = vld [vmem:[%s8] sm:$0xff]
      %v758 = vld [vmem:[%s8 + $0x8] sm:$0xff]
      %v759 = vmul.f32 %v757, 1.442695
      %v760 = vpow.pop %v759
      %v761 = vmul.f32 %v758, 1.442695
      %v762 = vpow.pop %v761
      %v763 = vsub.f32 0.0, %v760
      %v764 = vsub.f32 0.0, %v762
      %v766 = vcombine.high %v756, %v756
      %v768 = vunpack.c.l.s4 1966171168
      %v769 = vunpack.c.0.s8 %v768
      %v770 = vlaneseq
      %v771 = vshrl.u32 %v770, 7
      %v772 = vsub.s32 %v769, %v771
      %v773 = vrot.slane %v756, %v772
      %v775 = vunpack.c.l.s4 1966171168
      %v776 = vunpack.c.0.s8 %v775
      %v777 = vlaneseq
      %v778 = vshrl.u32 %v777, 7
      %v779 = vsub.s32 %v776, %v778
      %v780 = vrot.slane %v766, %v779
      %v781 = vcombine.high %v773, %v773
      %v782 = vcombine.high %v780, %v780
      %v784 = vunpack.c.l.s4 1966171168
      %v785 = vunpack.c.0.s8 %v784
      %v786 = vlaneseq
      %v787 = vshrl.u32 %v786, 7
      %v788 = vsub.s32 %v785, %v787
      %v789 = vrot.slane %v773, %v788
      %v791 = vunpack.c.l.s4 1966171168
      %v792 = vunpack.c.0.s8 %v791
      %v793 = vlaneseq
      %v794 = vshrl.u32 %v793, 7
      %v795 = vsub.s32 %v792, %v794
      %v796 = vrot.slane %v780, %v795
      %v798 = vunpack.c.l.s4 1966171168
      %v799 = vunpack.c.0.s8 %v798
      %v800 = vlaneseq
      %v801 = vshrl.u32 %v800, 7
      %v802 = vsub.s32 %v799, %v801
      %v803 = vrot.slane %v781, %v802
      %v805 = vunpack.c.l.s4 1966171168
      %v806 = vunpack.c.0.s8 %v805
      %v807 = vlaneseq
      %v808 = vshrl.u32 %v807, 7
      %v809 = vsub.s32 %v806, %v808
      %v810 = vrot.slane %v782, %v809
      %v811 = vcombine.high %v789, %v789
      %v812 = vcombine.high %v796, %v796
      %v813 = vcombine.high %v803, %v803
      %v814 = vcombine.high %v810, %v810
      %v815 = vlaneseq
      %v816 = vshrl.u32 %v815, 7
      %v817 = vsub.s32 0, %v816
      %v818 = vrot.slane %v789, %v817
      %v819 = vlaneseq
      %v820 = vshrl.u32 %v819, 7
      %v821 = vsub.s32 0, %v820
      %v822 = vrot.slane %v803, %v821
      %v823 = vlaneseq
      %v824 = vshrl.u32 %v823, 7
      %v825 = vsub.s32 0, %v824
      %v826 = vrot.slane %v811, %v825
      %v827 = vlaneseq
      %v828 = vshrl.u32 %v827, 7
      %v829 = vsub.s32 0, %v828
      %v830 = vrot.slane %v813, %v829
      %v831 = vlaneseq
      %v832 = vshrl.u32 %v831, 7
      %v833 = vsub.s32 0, %v832
      %v834 = vrot.slane %v796, %v833
      %v835 = vlaneseq
      %v836 = vshrl.u32 %v835, 7
      %v837 = vsub.s32 0, %v836
      %v838 = vrot.slane %v810, %v837
      %v839 = vlaneseq
      %v840 = vshrl.u32 %v839, 7
      %v841 = vsub.s32 0, %v840
      %v842 = vrot.slane %v812, %v841
      %v843 = vlaneseq
      %v844 = vshrl.u32 %v843, 7
      %v845 = vsub.s32 0, %v844
      %v846 = vrot.slane %v814, %v845
      %v855 = vmul.f32 %v818, %v763
      %v856 = vmul.f32 %v818, %v764
      %v857 = vmul.f32 %v822, %v763
      %v858 = vmul.f32 %v822, %v764
      %v859 = vmul.f32 %v826, %v763
      %v860 = vmul.f32 %v826, %v764
      %v861 = vmul.f32 %v830, %v763
      %v862 = vmul.f32 %v830, %v764
      %v863 = vmul.f32 %v834, %v763
      %v864 = vmul.f32 %v834, %v764
      %v865 = vmul.f32 %v838, %v763
      %v866 = vmul.f32 %v838, %v764
      %v867 = vmul.f32 %v842, %v763
      %v868 = vmul.f32 %v842, %v764
      %v869 = vmul.f32 %v846, %v763
      %v870 = vmul.f32 %v846, %v764
      %v871 = vmul.f32 %v855, 1.442695
      %v872 = vpow.pop %v871
      %v873 = vmul.f32 %v856, 1.442695
      %v874 = vpow.pop %v873
      %v875 = vmul.f32 %v857, 1.442695
      %v876 = vpow.pop %v875
      %v877 = vmul.f32 %v858, 1.442695
      %v878 = vpow.pop %v877
      %v879 = vmul.f32 %v859, 1.442695
      %v880 = vpow.pop %v879
      %v881 = vmul.f32 %v860, 1.442695
      %v882 = vpow.pop %v881
      %v883 = vmul.f32 %v861, 1.442695
      %v884 = vpow.pop %v883
      %v885 = vmul.f32 %v862, 1.442695
      %v886 = vpow.pop %v885
      %v887 = vmul.f32 %v863, 1.442695
      %v888 = vpow.pop %v887
      %v889 = vmul.f32 %v864, 1.442695
      %v890 = vpow.pop %v889
      %v891 = vmul.f32 %v865, 1.442695
      %v892 = vpow.pop %v891
      %v893 = vmul.f32 %v866, 1.442695
      %v894 = vpow.pop %v893
      %v895 = vmul.f32 %v867, 1.442695
      %v896 = vpow.pop %v895
      %v897 = vmul.f32 %v868, 1.442695
      %v898 = vpow.pop %v897
      %v899 = vmul.f32 %v869, 1.442695
      %v900 = vpow.pop %v899
      %v901 = vmul.f32 %v870, 1.442695
      %v902 = vpow.pop %v901
      %v903 = vmul.f32 %v756, %v579
      %904 = vrot.lane.b32.xlu0 %v659, 126
      %v905 = vpop.permute.xlu0 %904
      %907 = vxpose.xlu0.b32.start [1/16] %v905, 128
      %908 = vxpose.xlu0.b32.cont [2/16] 0.0, 128
      %909 = vxpose.xlu0.b32.cont [3/16] 0.0, 128
      %910 = vxpose.xlu0.b32.cont [4/16] 0.0, 128
      %911 = vxpose.xlu0.b32.cont [5/16] 0.0, 128
      %912 = vxpose.xlu0.b32.cont [6/16] 0.0, 128
      %913 = vxpose.xlu0.b32.cont [7/16] 0.0, 128
      %914 = vxpose.xlu0.b32.cont [8/16] 0.0, 128
      %915 = vxpose.xlu0.b32.cont [9/16] 0.0, 128
      %916 = vxpose.xlu0.b32.cont [10/16] 0.0, 128
      %917 = vxpose.xlu0.b32.cont [11/16] 0.0, 128
      %918 = vxpose.xlu0.b32.cont [12/16] 0.0, 128
      %919 = vxpose.xlu0.b32.cont [13/16] 0.0, 128
      %920 = vxpose.xlu0.b32.cont [14/16] 0.0, 128
      %921 = vxpose.xlu0.b32.cont [15/16] 0.0, 128
      %922 = vxpose.xlu0.b32.end [16/16] 0.0, 128
      %v923 = vpop.trf.xlu0
      %v924 = vpop.trf.xlu0
      %v925 = vpop.trf.xlu0
      %v926 = vpop.trf.xlu0
      %v927 = vpop.trf.xlu0
      %v928 = vpop.trf.xlu0
      %v929 = vpop.trf.xlu0
      %v930 = vpop.trf.xlu0
      %v931 = vpop.trf.xlu0
      %v932 = vpop.trf.xlu0
      %v933 = vpop.trf.xlu0
      %v934 = vpop.trf.xlu0
      %v935 = vpop.trf.xlu0
      %v936 = vpop.trf.xlu0
      %v937 = vpop.trf.xlu0
      %v938 = vpop.trf.xlu0
      %939 = vrot.lane.b32.xlu0 %v659, 110
      %v940 = vpop.permute.xlu0 %939
      %942 = vxpose.xlu0.b32.start [1/16] %v940, 128
      %943 = vxpose.xlu0.b32.cont [2/16] 0.0, 128
      %944 = vxpose.xlu0.b32.cont [3/16] 0.0, 128
      %945 = vxpose.xlu0.b32.cont [4/16] 0.0, 128
      %946 = vxpose.xlu0.b32.cont [5/16] 0.0, 128
      %947 = vxpose.xlu0.b32.cont [6/16] 0.0, 128
      %948 = vxpose.xlu0.b32.cont [7/16] 0.0, 128
      %949 = vxpose.xlu0.b32.cont [8/16] 0.0, 128
      %950 = vxpose.xlu0.b32.cont [9/16] 0.0, 128
      %951 = vxpose.xlu0.b32.cont [10/16] 0.0, 128
      %952 = vxpose.xlu0.b32.cont [11/16] 0.0, 128
      %953 = vxpose.xlu0.b32.cont [12/16] 0.0, 128
      %954 = vxpose.xlu0.b32.cont [13/16] 0.0, 128
      %955 = vxpose.xlu0.b32.cont [14/16] 0.0, 128
      %956 = vxpose.xlu0.b32.cont [15/16] 0.0, 128
      %957 = vxpose.xlu0.b32.end [16/16] 0.0, 128
      %v958 = vpop.trf.xlu0
      %v959 = vpop.trf.xlu0
      %v960 = vpop.trf.xlu0
      %v961 = vpop.trf.xlu0
      %v962 = vpop.trf.xlu0
      %v963 = vpop.trf.xlu0
      %v964 = vpop.trf.xlu0
      %v965 = vpop.trf.xlu0
      %v966 = vpop.trf.xlu0
      %v967 = vpop.trf.xlu0
      %v968 = vpop.trf.xlu0
      %v969 = vpop.trf.xlu0
      %v970 = vpop.trf.xlu0
      %v971 = vpop.trf.xlu0
      %v972 = vpop.trf.xlu0
      %v973 = vpop.trf.xlu0
      %v974 = vmul.f32 %v872, 0.0
      %v975 = vmul.f32 %v874, 0.0
      %977 = vset.pattern.permute.xlu0 0
      %978 = vperm.xlu0 %977, %v923
      %v979 = vpop.permute.xlu0 %978
      %982 = vset.pattern.permute.xlu0 0
      %983 = vperm.xlu0 %982, %v924
      %v984 = vpop.permute.xlu0 %983
      %v986 = vlaneseq
      %v987 = vshrl.u32 %v986, 7
      %v988 = vsub.s32 0, %v987
      %v989 = vrot.slane %v903, %v988
      %v990 = vmul.f32 %v979, %v989
      %v991 = vmul.f32 %v984, %v989
      %v992 = vadd.f32 %v974, %v990
      %v993 = vadd.f32 %v975, %v991
      %995 = vset.pattern.permute.xlu0 0
      %996 = vperm.xlu0 %995, %v958
      %v997 = vpop.permute.xlu0 %996
      %1000 = vset.pattern.permute.xlu0 0
      %1001 = vperm.xlu0 %1000, %v959
      %v1002 = vpop.permute.xlu0 %1001
      %v1004 = vmul.f32 %v997, %v992
      %v1005 = vmul.f32 %v1002, %v993
      %v1006 = vsel %vm588, %v1004, 0.0
      %v1007 = vsel %vm588, %v1005, 0.0
      %v1008 = vadd.f32 %v1006, %v1007
      %v1009 = vrot.slane %v1008, 4
      %v1010 = vadd.f32 %v1008, %v1009
      %v1011 = vrot.slane %v1010, 2
      %v1012 = vadd.f32 %v1010, %v1011
      %v1013 = vrot.slane %v1012, 1
      %v1014 = vadd.f32 %v1012, %v1013
      %vm1015 = vcmp.eq.s32.totalorder %v438, 0
      %v1016 = vsel %vm1015, %v1014, 0.0
      %v1017 = vmul.f32 %v876, %v992
      %v1018 = vmul.f32 %v878, %v993
      %1019 = vset.pattern.permute.xlu0 1
      %1020 = vperm.xlu0 %1019, %v923
      %v1021 = vpop.permute.xlu0 %1020
      %1023 = vset.pattern.permute.xlu0 1
      %1024 = vperm.xlu0 %1023, %v924
      %v1025 = vpop.permute.xlu0 %1024
      %v1027 = vlaneseq
      %v1028 = vshrl.u32 %v1027, 7
      %v1029 = vsub.s32 1, %v1028
      %v1030 = vrot.slane %v903, %v1029
      %v1031 = vmul.f32 %v1021, %v1030
      %v1032 = vmul.f32 %v1025, %v1030
      %v1033 = vadd.f32 %v1017, %v1031
      %v1034 = vadd.f32 %v1018, %v1032
      %1035 = vset.pattern.permute.xlu0 1
      %1036 = vperm.xlu0 %1035, %v958
      %v1037 = vpop.permute.xlu0 %1036
      %1039 = vset.pattern.permute.xlu0 1
      %1040 = vperm.xlu0 %1039, %v959
      %v1041 = vpop.permute.xlu0 %1040
      %v1043 = vmul.f32 %v1037, %v1033
      %v1044 = vmul.f32 %v1041, %v1034
      %v1045 = vsel %vm588, %v1043, 0.0
      %v1046 = vsel %vm588, %v1044, 0.0
      %v1047 = vadd.f32 %v1045, %v1046
      %v1048 = vrot.slane %v1047, 4
      %v1049 = vadd.f32 %v1047, %v1048
      %v1050 = vrot.slane %v1049, 2
      %v1051 = vadd.f32 %v1049, %v1050
      %v1052 = vrot.slane %v1051, 1
      %v1053 = vadd.f32 %v1051, %v1052
      %vm1054 = vcmp.eq.s32.totalorder %v438, 1
      %v1055 = vsel %vm1054, %v1053, %v1016
      %v1056 = vmul.f32 %v880, %v1033
      %v1057 = vmul.f32 %v882, %v1034
      %1058 = vset.pattern.permute.xlu0 2
      %1059 = vperm.xlu0 %1058, %v923
      %v1060 = vpop.permute.xlu0 %1059
      %1062 = vset.pattern.permute.xlu0 2
      %1063 = vperm.xlu0 %1062, %v924
      %v1064 = vpop.permute.xlu0 %1063
      %v1066 = vlaneseq
      %v1067 = vshrl.u32 %v1066, 7
      %v1068 = vsub.s32 2, %v1067
      %v1069 = vrot.slane %v903, %v1068
      %v1070 = vmul.f32 %v1060, %v1069
      %v1071 = vmul.f32 %v1064, %v1069
      %v1072 = vadd.f32 %v1056, %v1070
      %v1073 = vadd.f32 %v1057, %v1071
      %1074 = vset.pattern.permute.xlu0 2
      %1075 = vperm.xlu0 %1074, %v958
      %v1076 = vpop.permute.xlu0 %1075
      %1078 = vset.pattern.permute.xlu0 2
      %1079 = vperm.xlu0 %1078, %v959
      %v1080 = vpop.permute.xlu0 %1079
      %v1082 = vmul.f32 %v1076, %v1072
      %v1083 = vmul.f32 %v1080, %v1073
      %v1084 = vsel %vm588, %v1082, 0.0
      %v1085 = vsel %vm588, %v1083, 0.0
      %v1086 = vadd.f32 %v1084, %v1085
      %v1087 = vrot.slane %v1086, 4
      %v1088 = vadd.f32 %v1086, %v1087
      %v1089 = vrot.slane %v1088, 2
      %v1090 = vadd.f32 %v1088, %v1089
      %v1091 = vrot.slane %v1090, 1
      %v1092 = vadd.f32 %v1090, %v1091
      %vm1093 = vcmp.eq.s32.totalorder %v438, 2
      %v1094 = vsel %vm1093, %v1092, %v1055
      %v1095 = vmul.f32 %v884, %v1072
      %v1096 = vmul.f32 %v886, %v1073
      %1097 = vset.pattern.permute.xlu0 3
      %1098 = vperm.xlu0 %1097, %v923
      %v1099 = vpop.permute.xlu0 %1098
      %1101 = vset.pattern.permute.xlu0 3
      %1102 = vperm.xlu0 %1101, %v924
      %v1103 = vpop.permute.xlu0 %1102
      %v1105 = vlaneseq
      %v1106 = vshrl.u32 %v1105, 7
      %v1107 = vsub.s32 3, %v1106
      %v1108 = vrot.slane %v903, %v1107
      %v1109 = vmul.f32 %v1099, %v1108
      %v1110 = vmul.f32 %v1103, %v1108
      %v1111 = vadd.f32 %v1095, %v1109
      %v1112 = vadd.f32 %v1096, %v1110
      %1113 = vset.pattern.permute.xlu0 3
      %1114 = vperm.xlu0 %1113, %v958
      %v1115 = vpop.permute.xlu0 %1114
      %1117 = vset.pattern.permute.xlu0 3
      %1118 = vperm.xlu0 %1117, %v959
      %v1119 = vpop.permute.xlu0 %1118
      %v1121 = vmul.f32 %v1115, %v1111
      %v1122 = vmul.f32 %v1119, %v1112
      %v1123 = vsel %vm588, %v1121, 0.0
      %v1124 = vsel %vm588, %v1122, 0.0
      %v1125 = vadd.f32 %v1123, %v1124
      %v1126 = vrot.slane %v1125, 4
      %v1127 = vadd.f32 %v1125, %v1126
      %v1128 = vrot.slane %v1127, 2
      %v1129 = vadd.f32 %v1127, %v1128
      %v1130 = vrot.slane %v1129, 1
      %v1131 = vadd.f32 %v1129, %v1130
      %vm1132 = vcmp.eq.s32.totalorder %v438, 3
      %v1133 = vsel %vm1132, %v1131, %v1094
      %v1134 = vmul.f32 %v888, %v1111
      %v1135 = vmul.f32 %v890, %v1112
      %1136 = vset.pattern.permute.xlu0 4
      %1137 = vperm.xlu0 %1136, %v923
      %v1138 = vpop.permute.xlu0 %1137
      %1140 = vset.pattern.permute.xlu0 4
      %1141 = vperm.xlu0 %1140, %v924
      %v1142 = vpop.permute.xlu0 %1141
      %v1144 = vlaneseq
      %v1145 = vshrl.u32 %v1144, 7
      %v1146 = vsub.s32 4, %v1145
      %v1147 = vrot.slane %v903, %v1146
      %v1148 = vmul.f32 %v1138, %v1147
      %v1149 = vmul.f32 %v1142, %v1147
      %v1150 = vadd.f32 %v1134, %v1148
      %v1151 = vadd.f32 %v1135, %v1149
      %1152 = vset.pattern.permute.xlu0 4
      %1153 = vperm.xlu0 %1152, %v958
      %v1154 = vpop.permute.xlu0 %1153
      %1156 = vset.pattern.permute.xlu0 4
      %1157 = vperm.xlu0 %1156, %v959
      %v1158 = vpop.permute.xlu0 %1157
      %v1160 = vmul.f32 %v1154, %v1150
      %v1161 = vmul.f32 %v1158, %v1151
      %v1162 = vsel %vm588, %v1160, 0.0
      %v1163 = vsel %vm588, %v1161, 0.0
      %v1164 = vadd.f32 %v1162, %v1163
      %v1165 = vrot.slane %v1164, 4
      %v1166 = vadd.f32 %v1164, %v1165
      %v1167 = vrot.slane %v1166, 2
      %v1168 = vadd.f32 %v1166, %v1167
      %v1169 = vrot.slane %v1168, 1
      %v1170 = vadd.f32 %v1168, %v1169
      %vm1171 = vcmp.eq.s32.totalorder %v438, 4
      %v1172 = vsel %vm1171, %v1170, %v1133
      %v1173 = vmul.f32 %v892, %v1150
      %v1174 = vmul.f32 %v894, %v1151
      %1175 = vset.pattern.permute.xlu0 5
      %1176 = vperm.xlu0 %1175, %v923
      %v1177 = vpop.permute.xlu0 %1176
      %1179 = vset.pattern.permute.xlu0 5
      %1180 = vperm.xlu0 %1179, %v924
      %v1181 = vpop.permute.xlu0 %1180
      %v1183 = vlaneseq
      %v1184 = vshrl.u32 %v1183, 7
      %v1185 = vsub.s32 5, %v1184
      %v1186 = vrot.slane %v903, %v1185
      %v1187 = vmul.f32 %v1177, %v1186
      %v1188 = vmul.f32 %v1181, %v1186
      %v1189 = vadd.f32 %v1173, %v1187
      %v1190 = vadd.f32 %v1174, %v1188
      %1191 = vset.pattern.permute.xlu0 5
      %1192 = vperm.xlu0 %1191, %v958
      %v1193 = vpop.permute.xlu0 %1192
      %1195 = vset.pattern.permute.xlu0 5
      %1196 = vperm.xlu0 %1195, %v959
      %v1197 = vpop.permute.xlu0 %1196
      %v1199 = vmul.f32 %v1193, %v1189
      %v1200 = vmul.f32 %v1197, %v1190
      %v1201 = vsel %vm588, %v1199, 0.0
      %v1202 = vsel %vm588, %v1200, 0.0
      %v1203 = vadd.f32 %v1201, %v1202
      %v1204 = vrot.slane %v1203, 4
      %v1205 = vadd.f32 %v1203, %v1204
      %v1206 = vrot.slane %v1205, 2
      %v1207 = vadd.f32 %v1205, %v1206
      %v1208 = vrot.slane %v1207, 1
      %v1209 = vadd.f32 %v1207, %v1208
      %vm1210 = vcmp.eq.s32.totalorder %v438, 5
      %v1211 = vsel %vm1210, %v1209, %v1172
      %v1212 = vmul.f32 %v896, %v1189
      %v1213 = vmul.f32 %v898, %v1190
      %1214 = vset.pattern.permute.xlu0 6
      %1215 = vperm.xlu0 %1214, %v923
      %v1216 = vpop.permute.xlu0 %1215
      %1218 = vset.pattern.permute.xlu0 6
      %1219 = vperm.xlu0 %1218, %v924
      %v1220 = vpop.permute.xlu0 %1219
      %v1222 = vlaneseq
      %v1223 = vshrl.u32 %v1222, 7
      %v1224 = vsub.s32 6, %v1223
      %v1225 = vrot.slane %v903, %v1224
      %v1226 = vmul.f32 %v1216, %v1225
      %v1227 = vmul.f32 %v1220, %v1225
      %v1228 = vadd.f32 %v1212, %v1226
      %v1229 = vadd.f32 %v1213, %v1227
      %1230 = vset.pattern.permute.xlu0 6
      %1231 = vperm.xlu0 %1230, %v958
      %v1232 = vpop.permute.xlu0 %1231
      %1234 = vset.pattern.permute.xlu0 6
      %1235 = vperm.xlu0 %1234, %v959
      %v1236 = vpop.permute.xlu0 %1235
      %v1238 = vmul.f32 %v1232, %v1228
      %v1239 = vmul.f32 %v1236, %v1229
      %v1240 = vsel %vm588, %v1238, 0.0
      %v1241 = vsel %vm588, %v1239, 0.0
      %v1242 = vadd.f32 %v1240, %v1241
      %v1243 = vrot.slane %v1242, 4
      %v1244 = vadd.f32 %v1242, %v1243
      %v1245 = vrot.slane %v1244, 2
      %v1246 = vadd.f32 %v1244, %v1245
      %v1247 = vrot.slane %v1246, 1
      %v1248 = vadd.f32 %v1246, %v1247
      %vm1249 = vcmp.eq.s32.totalorder %v438, 6
      %v1250 = vsel %vm1249, %v1248, %v1211
      %v1251 = vmul.f32 %v900, %v1228
      %v1252 = vmul.f32 %v902, %v1229
      %1253 = vset.pattern.permute.xlu0 7
      %1254 = vperm.xlu0 %1253, %v923
      %v1255 = vpop.permute.xlu0 %1254
      %1257 = vset.pattern.permute.xlu0 7
      %1258 = vperm.xlu0 %1257, %v924
      %v1259 = vpop.permute.xlu0 %1258
      %v1261 = vlaneseq
      %v1262 = vshrl.u32 %v1261, 7
      %v1263 = vsub.s32 7, %v1262
      %v1264 = vrot.slane %v903, %v1263
      %v1265 = vmul.f32 %v1255, %v1264
      %v1266 = vmul.f32 %v1259, %v1264
      %v1267 = vadd.f32 %v1251, %v1265
      %v1268 = vadd.f32 %v1252, %v1266
      %1269 = vset.pattern.permute.xlu0 7
      %1270 = vperm.xlu0 %1269, %v958
      %v1271 = vpop.permute.xlu0 %1270
      %1273 = vset.pattern.permute.xlu0 7
      %1274 = vperm.xlu0 %1273, %v959
      %v1275 = vpop.permute.xlu0 %1274
      %v1277 = vmul.f32 %v1271, %v1267
      %v1278 = vmul.f32 %v1275, %v1268
      %v1279 = vsel %vm588, %v1277, 0.0
      %v1280 = vsel %vm588, %v1278, 0.0
      %v1281 = vadd.f32 %v1279, %v1280
      %v1282 = vrot.slane %v1281, 4
      %v1283 = vadd.f32 %v1281, %v1282
      %v1284 = vrot.slane %v1283, 2
      %v1285 = vadd.f32 %v1283, %v1284
      %v1286 = vrot.slane %v1285, 1
      %v1287 = vadd.f32 %v1285, %v1286
      %vm1288 = vcmp.eq.s32.totalorder %v438, 7
      %v1289 = vsel %vm1288, %v1287, %v1250
      %v1290 = vld [vmem:[%s9] sm:$0x1]
      %v1292 = vlaneseq
      %v1293 = vshrl.u32 %v1292, 7
      %v1294 = vsub.s32 0, %v1293
      %v1295 = vrot.slane %v1290, %v1294
      %v1297 = vmul.f32 %v579, %v1295
      %v1298 = vadd.f32 %v1289, %v1297
      %v1299 = vmul.f32 %v531, 0.5
      %v1300 = vtanh.pop %v1299
      %v1301 = vadd.f32 %v1300, 1.0
      %v1302 = vmul.f32 %v1301, 0.5
      %v1303 = vmul.f32 %v531, %v1302
      %1305 = vrot.lane.b32.xlu0 %v1303, 64
      %v1306 = vpop.permute.xlu0 %1305
      %v1308 = vmul.f32 %v1298, %v1306
      %v1309 = vld [vmem:[%s10] sm:$0xff]
      %v1310 = vld [vmem:[%s10 + $0x8] sm:$0xff]
      %v1311 = vld [vmem:[%s10 + $0x10] sm:$0xff]
      %v1312 = vld [vmem:[%s10 + $0x18] sm:$0xff]
      %v1313 = vld [vmem:[%s10 + $0x20] sm:$0xff]
      %v1314 = vld [vmem:[%s10 + $0x28] sm:$0xff]
      %v1315 = vld [vmem:[%s10 + $0x30] sm:$0xff]
      %v1316 = vld [vmem:[%s10 + $0x38] sm:$0xff]
      %v1318 = vsel %vm588, %v1308, 0
      %1320 = vmatprep.subr.mxu0 0.0
      %1321 = vmatpush1.msra.mxu0 %v1309
      %1322 = vmatprep.subr.mxu0 0.0
      %1323 = vmatpush1.msra.mxu0 %v1310
      %1324 = vmatprep.subr.mxu0 0.0
      %1325 = vmatpush1.msra.mxu0 %v1311
      %1326 = vmatprep.subr.mxu0 0.0
      %1327 = vmatpush1.msra.mxu0 %v1312
      %1328 = vmatprep.subr.mxu0 0.0
      %1329 = vmatpush1.msra.mxu0 %v1313
      %1330 = vmatprep.subr.mxu0 0.0
      %1331 = vmatpush1.msra.mxu0 %v1314
      %1332 = vmatprep.subr.mxu0 0.0
      %1333 = vmatpush1.msra.mxu0 %v1315
      %1334 = vmatprep.subr.mxu0 0.0
      %1335 = vmatpush1.msra.mxu0 %v1316
      %1336 = vmatprep.subr.mxu0 0.0
      %1337 = vmatpush1.msra.mxu0 0.0
      %1338 = vmatprep.subr.mxu0 0.0
      %1339 = vmatpush1.msra.mxu0 0.0
      %1340 = vmatprep.subr.mxu0 0.0
      %1341 = vmatpush1.msra.mxu0 0.0
      %1342 = vmatprep.subr.mxu0 0.0
      %1343 = vmatpush1.msra.mxu0 0.0
      %1344 = vmatprep.subr.mxu0 0.0
      %1345 = vmatpush1.msra.mxu0 0.0
      %1346 = vmatprep.subr.mxu0 0.0
      %1347 = vmatpush1.msra.mxu0 0.0
      %1348 = vmatprep.subr.mxu0 0.0
      %1349 = vmatpush1.msra.mxu0 0.0
      %1350 = vmatprep.subr.mxu0 0.0
      %1351 = vmatpush1.msra.mxu0 0.0
      %1352 = vmatprep.subr.mxu0 0.0
      %1353 = vmatpush1.msra.mxu0 0.0
      %1354 = vmatprep.subr.mxu0 0.0
      %1355 = vmatpush1.msra.mxu0 0.0
      %1356 = vmatprep.subr.mxu0 0.0
      %1357 = vmatpush1.msra.mxu0 0.0
      %1358 = vmatprep.subr.mxu0 0.0
      %1359 = vmatpush1.msra.mxu0 0.0
      %1360 = vmatprep.subr.mxu0 0.0
      %1361 = vmatpush1.msra.mxu0 0.0
      %1362 = vmatprep.subr.mxu0 0.0
      %1363 = vmatpush1.msra.mxu0 0.0
      %1364 = vmatprep.subr.mxu0 0.0
      %1365 = vmatpush1.msra.mxu0 0.0
      %1366 = vmatprep.subr.mxu0 0.0
      %1367 = vmatpush1.msra.mxu0 0.0
      %1368 = vmatprep.subr.mxu0 0.0
      %1369 = vmatpush1.msra.mxu0 0.0
      %1370 = vmatprep.subr.mxu0 0.0
      %1371 = vmatpush1.msra.mxu0 0.0
      %1372 = vmatprep.subr.mxu0 0.0
      %1373 = vmatpush1.msra.mxu0 0.0
      %1374 = vmatprep.subr.mxu0 0.0
      %1375 = vmatpush1.msra.mxu0 0.0
      %1376 = vmatprep.subr.mxu0 0.0
      %1377 = vmatpush1.msra.mxu0 0.0
      %1378 = vmatprep.subr.mxu0 0.0
      %1379 = vmatpush1.msra.mxu0 0.0
      %1380 = vmatprep.subr.mxu0 0.0
      %1381 = vmatpush1.msra.mxu0 0.0
      %1382 = vmatprep.subr.mxu0 0.0
      %1383 = vmatpush1.msra.mxu0 0.0
      %1384 = vmatprep.mubr.f32.mxu0 0.0
      %1385 = vmatmul.mubr.f32.gmra.mrb[0].mxu0 %v1318
      %v1386 = vpop.f32.mrb[0].mxu0
      %v1387 = vadd.f32 0.0, %v1386
      %v1388 = vpop.f32.mrb[0].mxu0
      %1389 = vdwg.mxu0
      %v1390 = vadd.f32 %v436, %v1387
      %v1391 = vmul.f32 %v1390, %v1390
      %v1392 = vsel %vm440, %v1391, 0.0
      %1393 = vadd.xlane.f32.xlu0 %v1392
      %v1394 = vpop.xlane.xlu0 %1393
      %v1395 = vmul.f32 %v1394, %v444
      %v1396 = vadd.f32 %v1395, 1e-05
      %v1397 = vrsqrt.pop %v1396
      %v1398 = vmul.f32 %v1390, %v1397
      %s1399 = scalar_lea.vmem %s1, 1
      %v1400 = vld [vmem:[%s1399] sm:$0x1]
      %v1402 = vlaneseq
      %v1403 = vshrl.u32 %v1402, 7
      %v1404 = vsub.s32 0, %v1403
      %v1405 = vrot.slane %v1400, %v1404
      %v1407 = vmul.f32 %v1398, %v1405
      %s1408 = scalar_lea.vmem %s2, 32
      %v1409 = vld [vmem:[%s1408] sm:$0xff]
      %v1410 = vld [vmem:[%s1408 + $0x8] sm:$0xff]
      %v1411 = vld [vmem:[%s1408 + $0x10] sm:$0xff]
      %v1412 = vld [vmem:[%s1408 + $0x18] sm:$0xff]
      %v1414 = vsel %vm440, %v1407, 0
      %1416 = vmatprep.subr.mxu0 0.0
      %1417 = vmatpush1.msra.mxu0 %v1409
      %1418 = vmatprep.subr.mxu0 0.0
      %1419 = vmatpush1.msra.mxu0 %v1410
      %1420 = vmatprep.subr.mxu0 0.0
      %1421 = vmatpush1.msra.mxu0 %v1411
      %1422 = vmatprep.subr.mxu0 0.0
      %1423 = vmatpush1.msra.mxu0 %v1412
      %1424 = vmatprep.subr.mxu0 0.0
      %1425 = vmatpush1.msra.mxu0 0.0
      %1426 = vmatprep.subr.mxu0 0.0
      %1427 = vmatpush1.msra.mxu0 0.0
      %1428 = vmatprep.subr.mxu0 0.0
      %1429 = vmatpush1.msra.mxu0 0.0
      %1430 = vmatprep.subr.mxu0 0.0
      %1431 = vmatpush1.msra.mxu0 0.0
      %1432 = vmatprep.subr.mxu0 0.0
      %1433 = vmatpush1.msra.mxu0 0.0
      %1434 = vmatprep.subr.mxu0 0.0
      %1435 = vmatpush1.msra.mxu0 0.0
      %1436 = vmatprep.subr.mxu0 0.0
      %1437 = vmatpush1.msra.mxu0 0.0
      %1438 = vmatprep.subr.mxu0 0.0
      %1439 = vmatpush1.msra.mxu0 0.0
      %1440 = vmatprep.subr.mxu0 0.0
      %1441 = vmatpush1.msra.mxu0 0.0
      %1442 = vmatprep.subr.mxu0 0.0
      %1443 = vmatpush1.msra.mxu0 0.0
      %1444 = vmatprep.subr.mxu0 0.0
      %1445 = vmatpush1.msra.mxu0 0.0
      %1446 = vmatprep.subr.mxu0 0.0
      %1447 = vmatpush1.msra.mxu0 0.0
      %1448 = vmatprep.subr.mxu0 0.0
      %1449 = vmatpush1.msra.mxu0 0.0
      %1450 = vmatprep.subr.mxu0 0.0
      %1451 = vmatpush1.msra.mxu0 0.0
      %1452 = vmatprep.subr.mxu0 0.0
      %1453 = vmatpush1.msra.mxu0 0.0
      %1454 = vmatprep.subr.mxu0 0.0
      %1455 = vmatpush1.msra.mxu0 0.0
      %1456 = vmatprep.subr.mxu0 0.0
      %1457 = vmatpush1.msra.mxu0 0.0
      %1458 = vmatprep.subr.mxu0 0.0
      %1459 = vmatpush1.msra.mxu0 0.0
      %1460 = vmatprep.subr.mxu0 0.0
      %1461 = vmatpush1.msra.mxu0 0.0
      %1462 = vmatprep.subr.mxu0 0.0
      %1463 = vmatpush1.msra.mxu0 0.0
      %1464 = vmatprep.subr.mxu0 0.0
      %1465 = vmatpush1.msra.mxu0 0.0
      %1466 = vmatprep.subr.mxu0 0.0
      %1467 = vmatpush1.msra.mxu0 0.0
      %1468 = vmatprep.subr.mxu0 0.0
      %1469 = vmatpush1.msra.mxu0 0.0
      %1470 = vmatprep.subr.mxu0 0.0
      %1471 = vmatpush1.msra.mxu0 0.0
      %1472 = vmatprep.subr.mxu0 0.0
      %1473 = vmatpush1.msra.mxu0 0.0
      %1474 = vmatprep.subr.mxu0 0.0
      %1475 = vmatpush1.msra.mxu0 0.0
      %1476 = vmatprep.subr.mxu0 0.0
      %1477 = vmatpush1.msra.mxu0 0.0
      %1478 = vmatprep.subr.mxu0 0.0
      %1479 = vmatpush1.msra.mxu0 0.0
      %1480 = vmatprep.mubr.f32.mxu0 0.0
      %1481 = vmatmul.mubr.f32.gmra.mrb[0].mxu0 %v1414
      %v1482 = vpop.f32.mrb[0].mxu0
      %v1483 = vadd.f32 0.0, %v1482
      %v1484 = vpop.f32.mrb[0].mxu0
      %1485 = vdwg.mxu0
      %s1486 = scalar_lea.vmem %s3, 4
      %v1487 = vld [vmem:[%s1486] sm:$0xf]
      %s1488 = scalar_lea.vmem %s4, 1
      %v1489 = vld [vmem:[%s1488] sm:$0x1]
      %v1490 = vlaneseq
      %v1491 = vshrl.u32 %v1490, 7
      %v1492 = vsub.s32 3, %v1491
      %v1493 = vrot.slane %v1487, %v1492
      %v1494 = vmul.f32 %v1493, %v1483
      %v1496 = vlaneseq
      %v1497 = vshrl.u32 %v1496, 7
      %v1498 = vsub.s32 0, %v1497
      %v1499 = vrot.slane %v1489, %v1498
      %v1501 = vadd.f32 %v1499, %v1494
      %v1502 = vrot.slane %v1483, 5
      %v1503 = vsel %vm548, %v1502, 0.0
      %v1504 = vlaneseq
      %v1505 = vshrl.u32 %v1504, 7
      %v1506 = vsub.s32 0, %v1505
      %v1507 = vrot.slane %v1487, %v1506
      %v1508 = vmul.f32 %v1507, %v1503
      %v1509 = vadd.f32 %v1501, %v1508
      %v1510 = vrot.slane %v1483, 6
      %v1511 = vsel %vm557, %v1510, 0.0
      %v1512 = vlaneseq
      %v1513 = vshrl.u32 %v1512, 7
      %v1514 = vsub.s32 1, %v1513
      %v1515 = vrot.slane %v1487, %v1514
      %v1516 = vmul.f32 %v1515, %v1511
      %v1517 = vadd.f32 %v1509, %v1516
      %v1518 = vrot.slane %v1483, 7
      %v1519 = vsel %vm566, %v1518, 0.0
      %v1520 = vlaneseq
      %v1521 = vshrl.u32 %v1520, 7
      %v1522 = vsub.s32 2, %v1521
      %v1523 = vrot.slane %v1487, %v1522
      %v1524 = vmul.f32 %v1523, %v1519
      %v1525 = vadd.f32 %v1517, %v1524
      %v1526 = vmul.f32 %v1525, 0.5
      %v1527 = vtanh.pop %v1526
      %v1528 = vadd.f32 %v1527, 1.0
      %v1529 = vmul.f32 %v1528, 0.5
      %v1530 = vmul.f32 %v1525, %v1529
      %s1531 = scalar_lea.vmem %s5, 64
      %v1532 = vld [vmem:[%s1531] sm:$0xff]
      %v1533 = vld [vmem:[%s1531 + $0x8] sm:$0xff]
      %v1534 = vld [vmem:[%s1531 + $0x10] sm:$0xff]
      %v1535 = vld [vmem:[%s1531 + $0x18] sm:$0xff]
      %v1536 = vld [vmem:[%s1531 + $0x20] sm:$0xff]
      %v1537 = vld [vmem:[%s1531 + $0x28] sm:$0xff]
      %v1538 = vld [vmem:[%s1531 + $0x30] sm:$0xff]
      %v1539 = vld [vmem:[%s1531 + $0x38] sm:$0xff]
      %v1541 = vsel %vm588, %v1530, 0
      %1543 = vmatprep.subr.mxu0 0.0
      %1544 = vmatpush1.msra.mxu0 %v1532
      %1545 = vmatprep.subr.mxu0 0.0
      %1546 = vmatpush1.msra.mxu0 %v1533
      %1547 = vmatprep.subr.mxu0 0.0
      %1548 = vmatpush1.msra.mxu0 %v1534
      %1549 = vmatprep.subr.mxu0 0.0
      %1550 = vmatpush1.msra.mxu0 %v1535
      %1551 = vmatprep.subr.mxu0 0.0
      %1552 = vmatpush1.msra.mxu0 %v1536
      %1553 = vmatprep.subr.mxu0 0.0
      %1554 = vmatpush1.msra.mxu0 %v1537
      %1555 = vmatprep.subr.mxu0 0.0
      %1556 = vmatpush1.msra.mxu0 %v1538
      %1557 = vmatprep.subr.mxu0 0.0
      %1558 = vmatpush1.msra.mxu0 %v1539
      %1559 = vmatprep.subr.mxu0 0.0
      %1560 = vmatpush1.msra.mxu0 0.0
      %1561 = vmatprep.subr.mxu0 0.0
      %1562 = vmatpush1.msra.mxu0 0.0
      %1563 = vmatprep.subr.mxu0 0.0
      %1564 = vmatpush1.msra.mxu0 0.0
      %1565 = vmatprep.subr.mxu0 0.0
      %1566 = vmatpush1.msra.mxu0 0.0
      %1567 = vmatprep.subr.mxu0 0.0
      %1568 = vmatpush1.msra.mxu0 0.0
      %1569 = vmatprep.subr.mxu0 0.0
      %1570 = vmatpush1.msra.mxu0 0.0
      %1571 = vmatprep.subr.mxu0 0.0
      %1572 = vmatpush1.msra.mxu0 0.0
      %1573 = vmatprep.subr.mxu0 0.0
      %1574 = vmatpush1.msra.mxu0 0.0
      %1575 = vmatprep.subr.mxu0 0.0
      %1576 = vmatpush1.msra.mxu0 0.0
      %1577 = vmatprep.subr.mxu0 0.0
      %1578 = vmatpush1.msra.mxu0 0.0
      %1579 = vmatprep.subr.mxu0 0.0
      %1580 = vmatpush1.msra.mxu0 0.0
      %1581 = vmatprep.subr.mxu0 0.0
      %1582 = vmatpush1.msra.mxu0 0.0
      %1583 = vmatprep.subr.mxu0 0.0
      %1584 = vmatpush1.msra.mxu0 0.0
      %1585 = vmatprep.subr.mxu0 0.0
      %1586 = vmatpush1.msra.mxu0 0.0
      %1587 = vmatprep.subr.mxu0 0.0
      %1588 = vmatpush1.msra.mxu0 0.0
      %1589 = vmatprep.subr.mxu0 0.0
      %1590 = vmatpush1.msra.mxu0 0.0
      %1591 = vmatprep.subr.mxu0 0.0
      %1592 = vmatpush1.msra.mxu0 0.0
      %1593 = vmatprep.subr.mxu0 0.0
      %1594 = vmatpush1.msra.mxu0 0.0
      %1595 = vmatprep.subr.mxu0 0.0
      %1596 = vmatpush1.msra.mxu0 0.0
      %1597 = vmatprep.subr.mxu0 0.0
      %1598 = vmatpush1.msra.mxu0 0.0
      %1599 = vmatprep.subr.mxu0 0.0
      %1600 = vmatpush1.msra.mxu0 0.0
      %1601 = vmatprep.subr.mxu0 0.0
      %1602 = vmatpush1.msra.mxu0 0.0
      %1603 = vmatprep.subr.mxu0 0.0
      %1604 = vmatpush1.msra.mxu0 0.0
      %1605 = vmatprep.subr.mxu0 0.0
      %1606 = vmatpush1.msra.mxu0 0.0
      %1607 = vmatprep.mubr.f32.mxu0 0.0
      %1608 = vmatmul.mubr.f32.gmra.mrb[0].mxu0 %v1541
      %v1609 = vpop.f32.mrb[0].mxu0
      %v1610 = vadd.f32 0.0, %v1609
      %v1611 = vpop.f32.mrb[0].mxu0
      %1612 = vdwg.mxu0
      %s1613 = scalar_lea.vmem %s6, 2
      %v1614 = vld [vmem:[%s1613] sm:$0x3]
      %s1615 = scalar_lea.vmem %s7, 1
      %v1616 = vld [vmem:[%s1615] sm:$0x1]
      %v1618 = vlaneseq
      %v1619 = vshrl.u32 %v1618, 7
      %v1620 = vsub.s32 0, %v1619
      %v1621 = vrot.slane %v1616, %v1620
      %v1624 = vsel %vm670, %v1610, 0
      %v1627 = vsel %vm674, %v1614, 0
      %1629 = vmatprep.subr.mxu0 0.0
      %1630 = vmatpush1.msra.mxu0 %v1627
      %1631 = vmatprep.subr.mxu0 0.0
      %1632 = vmatpush1.msra.mxu0 0.0
      %1633 = vmatprep.subr.mxu0 0.0
      %1634 = vmatpush1.msra.mxu0 0.0
      %1635 = vmatprep.subr.mxu0 0.0
      %1636 = vmatpush1.msra.mxu0 0.0
      %1637 = vmatprep.subr.mxu0 0.0
      %1638 = vmatpush1.msra.mxu0 0.0
      %1639 = vmatprep.subr.mxu0 0.0
      %1640 = vmatpush1.msra.mxu0 0.0
      %1641 = vmatprep.subr.mxu0 0.0
      %1642 = vmatpush1.msra.mxu0 0.0
      %1643 = vmatprep.subr.mxu0 0.0
      %1644 = vmatpush1.msra.mxu0 0.0
      %1645 = vmatprep.subr.mxu0 0.0
      %1646 = vmatpush1.msra.mxu0 0.0
      %1647 = vmatprep.subr.mxu0 0.0
      %1648 = vmatpush1.msra.mxu0 0.0
      %1649 = vmatprep.subr.mxu0 0.0
      %1650 = vmatpush1.msra.mxu0 0.0
      %1651 = vmatprep.subr.mxu0 0.0
      %1652 = vmatpush1.msra.mxu0 0.0
      %1653 = vmatprep.subr.mxu0 0.0
      %1654 = vmatpush1.msra.mxu0 0.0
      %1655 = vmatprep.subr.mxu0 0.0
      %1656 = vmatpush1.msra.mxu0 0.0
      %1657 = vmatprep.subr.mxu0 0.0
      %1658 = vmatpush1.msra.mxu0 0.0
      %1659 = vmatprep.subr.mxu0 0.0
      %1660 = vmatpush1.msra.mxu0 0.0
      %1661 = vmatprep.subr.mxu0 0.0
      %1662 = vmatpush1.msra.mxu0 0.0
      %1663 = vmatprep.subr.mxu0 0.0
      %1664 = vmatpush1.msra.mxu0 0.0
      %1665 = vmatprep.subr.mxu0 0.0
      %1666 = vmatpush1.msra.mxu0 0.0
      %1667 = vmatprep.subr.mxu0 0.0
      %1668 = vmatpush1.msra.mxu0 0.0
      %1669 = vmatprep.subr.mxu0 0.0
      %1670 = vmatpush1.msra.mxu0 0.0
      %1671 = vmatprep.subr.mxu0 0.0
      %1672 = vmatpush1.msra.mxu0 0.0
      %1673 = vmatprep.subr.mxu0 0.0
      %1674 = vmatpush1.msra.mxu0 0.0
      %1675 = vmatprep.subr.mxu0 0.0
      %1676 = vmatpush1.msra.mxu0 0.0
      %1677 = vmatprep.subr.mxu0 0.0
      %1678 = vmatpush1.msra.mxu0 0.0
      %1679 = vmatprep.subr.mxu0 0.0
      %1680 = vmatpush1.msra.mxu0 0.0
      %1681 = vmatprep.subr.mxu0 0.0
      %1682 = vmatpush1.msra.mxu0 0.0
      %1683 = vmatprep.subr.mxu0 0.0
      %1684 = vmatpush1.msra.mxu0 0.0
      %1685 = vmatprep.subr.mxu0 0.0
      %1686 = vmatpush1.msra.mxu0 0.0
      %1687 = vmatprep.subr.mxu0 0.0
      %1688 = vmatpush1.msra.mxu0 0.0
      %1689 = vmatprep.subr.mxu0 0.0
      %1690 = vmatpush1.msra.mxu0 0.0
      %1691 = vmatprep.subr.mxu0 0.0
      %1692 = vmatpush1.msra.mxu0 0.0
      %1693 = vmatprep.mubr.f32.mxu0 0.0
      %1694 = vmatmul.mubr.f32.gmra.mrb[0].mxu0 %v1624
      %v1695 = vpop.f32.mrb[0].mxu0
      %v1696 = vadd.f32 %v1621, %v1695
      %v1697 = vpop.f32.mrb[0].mxu0
      %1698 = vdwg.mxu0
      %v1699 = vmax.f32 %v1696, 0.0
      %v1700 = vand.u32 2147483647, %v1696
      %v1701 = vsub.f32 0.0, %v1700
      %v1702 = vmul.f32 %v1701, 1.442695
      %v1703 = vpow.pop %v1702
      %v1704 = vadd.f32 %v1703, 1.0
      %v1705 = vlog2.pop %v1704
      %v1706 = vmul.f32 %v1705, 0.6931472
      %v1707 = vadd.f32 %v1699, %v1706
      %s1708 = scalar_lea.vmem %s8, 16
      %v1709 = vld [vmem:[%s1708] sm:$0xff]
      %v1710 = vld [vmem:[%s1708 + $0x8] sm:$0xff]
      %v1711 = vmul.f32 %v1709, 1.442695
      %v1712 = vpow.pop %v1711
      %v1713 = vmul.f32 %v1710, 1.442695
      %v1714 = vpow.pop %v1713
      %v1715 = vsub.f32 0.0, %v1712
      %v1716 = vsub.f32 0.0, %v1714
      %v1718 = vcombine.high %v1707, %v1707
      %v1720 = vunpack.c.l.s4 1966171168
      %v1721 = vunpack.c.0.s8 %v1720
      %v1722 = vlaneseq
      %v1723 = vshrl.u32 %v1722, 7
      %v1724 = vsub.s32 %v1721, %v1723
      %v1725 = vrot.slane %v1707, %v1724
      %v1727 = vunpack.c.l.s4 1966171168
      %v1728 = vunpack.c.0.s8 %v1727
      %v1729 = vlaneseq
      %v1730 = vshrl.u32 %v1729, 7
      %v1731 = vsub.s32 %v1728, %v1730
      %v1732 = vrot.slane %v1718, %v1731
      %v1733 = vcombine.high %v1725, %v1725
      %v1734 = vcombine.high %v1732, %v1732
      %v1736 = vunpack.c.l.s4 1966171168
      %v1737 = vunpack.c.0.s8 %v1736
      %v1738 = vlaneseq
      %v1739 = vshrl.u32 %v1738, 7
      %v1740 = vsub.s32 %v1737, %v1739
      %v1741 = vrot.slane %v1725, %v1740
      %v1743 = vunpack.c.l.s4 1966171168
      %v1744 = vunpack.c.0.s8 %v1743
      %v1745 = vlaneseq
      %v1746 = vshrl.u32 %v1745, 7
      %v1747 = vsub.s32 %v1744, %v1746
      %v1748 = vrot.slane %v1732, %v1747
      %v1750 = vunpack.c.l.s4 1966171168
      %v1751 = vunpack.c.0.s8 %v1750
      %v1752 = vlaneseq
      %v1753 = vshrl.u32 %v1752, 7
      %v1754 = vsub.s32 %v1751, %v1753
      %v1755 = vrot.slane %v1733, %v1754
      %v1757 = vunpack.c.l.s4 1966171168
      %v1758 = vunpack.c.0.s8 %v1757
      %v1759 = vlaneseq
      %v1760 = vshrl.u32 %v1759, 7
      %v1761 = vsub.s32 %v1758, %v1760
      %v1762 = vrot.slane %v1734, %v1761
      %v1763 = vcombine.high %v1741, %v1741
      %v1764 = vcombine.high %v1748, %v1748
      %v1765 = vcombine.high %v1755, %v1755
      %v1766 = vcombine.high %v1762, %v1762
      %v1767 = vlaneseq
      %v1768 = vshrl.u32 %v1767, 7
      %v1769 = vsub.s32 0, %v1768
      %v1770 = vrot.slane %v1741, %v1769
      %v1771 = vlaneseq
      %v1772 = vshrl.u32 %v1771, 7
      %v1773 = vsub.s32 0, %v1772
      %v1774 = vrot.slane %v1755, %v1773
      %v1775 = vlaneseq
      %v1776 = vshrl.u32 %v1775, 7
      %v1777 = vsub.s32 0, %v1776
      %v1778 = vrot.slane %v1763, %v1777
      %v1779 = vlaneseq
      %v1780 = vshrl.u32 %v1779, 7
      %v1781 = vsub.s32 0, %v1780
      %v1782 = vrot.slane %v1765, %v1781
      %v1783 = vlaneseq
      %v1784 = vshrl.u32 %v1783, 7
      %v1785 = vsub.s32 0, %v1784
      %v1786 = vrot.slane %v1748, %v1785
      %v1787 = vlaneseq
      %v1788 = vshrl.u32 %v1787, 7
      %v1789 = vsub.s32 0, %v1788
      %v1790 = vrot.slane %v1762, %v1789
      %v1791 = vlaneseq
      %v1792 = vshrl.u32 %v1791, 7
      %v1793 = vsub.s32 0, %v1792
      %v1794 = vrot.slane %v1764, %v1793
      %v1795 = vlaneseq
      %v1796 = vshrl.u32 %v1795, 7
      %v1797 = vsub.s32 0, %v1796
      %v1798 = vrot.slane %v1766, %v1797
      %v1807 = vmul.f32 %v1770, %v1715
      %v1808 = vmul.f32 %v1770, %v1716
      %v1809 = vmul.f32 %v1774, %v1715
      %v1810 = vmul.f32 %v1774, %v1716
      %v1811 = vmul.f32 %v1778, %v1715
      %v1812 = vmul.f32 %v1778, %v1716
      %v1813 = vmul.f32 %v1782, %v1715
      %v1814 = vmul.f32 %v1782, %v1716
      %v1815 = vmul.f32 %v1786, %v1715
      %v1816 = vmul.f32 %v1786, %v1716
      %v1817 = vmul.f32 %v1790, %v1715
      %v1818 = vmul.f32 %v1790, %v1716
      %v1819 = vmul.f32 %v1794, %v1715
      %v1820 = vmul.f32 %v1794, %v1716
      %v1821 = vmul.f32 %v1798, %v1715
      %v1822 = vmul.f32 %v1798, %v1716
      %v1823 = vmul.f32 %v1807, 1.442695
      %v1824 = vpow.pop %v1823
      %v1825 = vmul.f32 %v1808, 1.442695
      %v1826 = vpow.pop %v1825
      %v1827 = vmul.f32 %v1809, 1.442695
      %v1828 = vpow.pop %v1827
      %v1829 = vmul.f32 %v1810, 1.442695
      %v1830 = vpow.pop %v1829
      %v1831 = vmul.f32 %v1811, 1.442695
      %v1832 = vpow.pop %v1831
      %v1833 = vmul.f32 %v1812, 1.442695
      %v1834 = vpow.pop %v1833
      %v1835 = vmul.f32 %v1813, 1.442695
      %v1836 = vpow.pop %v1835
      %v1837 = vmul.f32 %v1814, 1.442695
      %v1838 = vpow.pop %v1837
      %v1839 = vmul.f32 %v1815, 1.442695
      %v1840 = vpow.pop %v1839
      %v1841 = vmul.f32 %v1816, 1.442695
      %v1842 = vpow.pop %v1841
      %v1843 = vmul.f32 %v1817, 1.442695
      %v1844 = vpow.pop %v1843
      %v1845 = vmul.f32 %v1818, 1.442695
      %v1846 = vpow.pop %v1845
      %v1847 = vmul.f32 %v1819, 1.442695
      %v1848 = vpow.pop %v1847
      %v1849 = vmul.f32 %v1820, 1.442695
      %v1850 = vpow.pop %v1849
      %v1851 = vmul.f32 %v1821, 1.442695
      %v1852 = vpow.pop %v1851
      %v1853 = vmul.f32 %v1822, 1.442695
      %v1854 = vpow.pop %v1853
      %v1855 = vmul.f32 %v1707, %v1530
      %1856 = vrot.lane.b32.xlu0 %v1610, 126
      %v1857 = vpop.permute.xlu0 %1856
      %1859 = vxpose.xlu0.b32.start [1/16] %v1857, 128
      %1860 = vxpose.xlu0.b32.cont [2/16] 0.0, 128
      %1861 = vxpose.xlu0.b32.cont [3/16] 0.0, 128
      %1862 = vxpose.xlu0.b32.cont [4/16] 0.0, 128
      %1863 = vxpose.xlu0.b32.cont [5/16] 0.0, 128
      %1864 = vxpose.xlu0.b32.cont [6/16] 0.0, 128
      %1865 = vxpose.xlu0.b32.cont [7/16] 0.0, 128
      %1866 = vxpose.xlu0.b32.cont [8/16] 0.0, 128
      %1867 = vxpose.xlu0.b32.cont [9/16] 0.0, 128
      %1868 = vxpose.xlu0.b32.cont [10/16] 0.0, 128
      %1869 = vxpose.xlu0.b32.cont [11/16] 0.0, 128
      %1870 = vxpose.xlu0.b32.cont [12/16] 0.0, 128
      %1871 = vxpose.xlu0.b32.cont [13/16] 0.0, 128
      %1872 = vxpose.xlu0.b32.cont [14/16] 0.0, 128
      %1873 = vxpose.xlu0.b32.cont [15/16] 0.0, 128
      %1874 = vxpose.xlu0.b32.end [16/16] 0.0, 128
      %v1875 = vpop.trf.xlu0
      %v1876 = vpop.trf.xlu0
      %v1877 = vpop.trf.xlu0
      %v1878 = vpop.trf.xlu0
      %v1879 = vpop.trf.xlu0
      %v1880 = vpop.trf.xlu0
      %v1881 = vpop.trf.xlu0
      %v1882 = vpop.trf.xlu0
      %v1883 = vpop.trf.xlu0
      %v1884 = vpop.trf.xlu0
      %v1885 = vpop.trf.xlu0
      %v1886 = vpop.trf.xlu0
      %v1887 = vpop.trf.xlu0
      %v1888 = vpop.trf.xlu0
      %v1889 = vpop.trf.xlu0
      %v1890 = vpop.trf.xlu0
      %1891 = vrot.lane.b32.xlu0 %v1610, 110
      %v1892 = vpop.permute.xlu0 %1891
      %1894 = vxpose.xlu0.b32.start [1/16] %v1892, 128
      %1895 = vxpose.xlu0.b32.cont [2/16] 0.0, 128
      %1896 = vxpose.xlu0.b32.cont [3/16] 0.0, 128
      %1897 = vxpose.xlu0.b32.cont [4/16] 0.0, 128
      %1898 = vxpose.xlu0.b32.cont [5/16] 0.0, 128
      %1899 = vxpose.xlu0.b32.cont [6/16] 0.0, 128
      %1900 = vxpose.xlu0.b32.cont [7/16] 0.0, 128
      %1901 = vxpose.xlu0.b32.cont [8/16] 0.0, 128
      %1902 = vxpose.xlu0.b32.cont [9/16] 0.0, 128
      %1903 = vxpose.xlu0.b32.cont [10/16] 0.0, 128
      %1904 = vxpose.xlu0.b32.cont [11/16] 0.0, 128
      %1905 = vxpose.xlu0.b32.cont [12/16] 0.0, 128
      %1906 = vxpose.xlu0.b32.cont [13/16] 0.0, 128
      %1907 = vxpose.xlu0.b32.cont [14/16] 0.0, 128
      %1908 = vxpose.xlu0.b32.cont [15/16] 0.0, 128
      %1909 = vxpose.xlu0.b32.end [16/16] 0.0, 128
      %v1910 = vpop.trf.xlu0
      %v1911 = vpop.trf.xlu0
      %v1912 = vpop.trf.xlu0
      %v1913 = vpop.trf.xlu0
      %v1914 = vpop.trf.xlu0
      %v1915 = vpop.trf.xlu0
      %v1916 = vpop.trf.xlu0
      %v1917 = vpop.trf.xlu0
      %v1918 = vpop.trf.xlu0
      %v1919 = vpop.trf.xlu0
      %v1920 = vpop.trf.xlu0
      %v1921 = vpop.trf.xlu0
      %v1922 = vpop.trf.xlu0
      %v1923 = vpop.trf.xlu0
      %v1924 = vpop.trf.xlu0
      %v1925 = vpop.trf.xlu0
      %v1926 = vmul.f32 %v1824, 0.0
      %v1927 = vmul.f32 %v1826, 0.0
      %1929 = vset.pattern.permute.xlu0 0
      %1930 = vperm.xlu0 %1929, %v1875
      %v1931 = vpop.permute.xlu0 %1930
      %1934 = vset.pattern.permute.xlu0 0
      %1935 = vperm.xlu0 %1934, %v1876
      %v1936 = vpop.permute.xlu0 %1935
      %v1938 = vlaneseq
      %v1939 = vshrl.u32 %v1938, 7
      %v1940 = vsub.s32 0, %v1939
      %v1941 = vrot.slane %v1855, %v1940
      %v1942 = vmul.f32 %v1931, %v1941
      %v1943 = vmul.f32 %v1936, %v1941
      %v1944 = vadd.f32 %v1926, %v1942
      %v1945 = vadd.f32 %v1927, %v1943
      %1947 = vset.pattern.permute.xlu0 0
      %1948 = vperm.xlu0 %1947, %v1910
      %v1949 = vpop.permute.xlu0 %1948
      %1952 = vset.pattern.permute.xlu0 0
      %1953 = vperm.xlu0 %1952, %v1911
      %v1954 = vpop.permute.xlu0 %1953
      %v1956 = vmul.f32 %v1949, %v1944
      %v1957 = vmul.f32 %v1954, %v1945
      %v1958 = vsel %vm588, %v1956, 0.0
      %v1959 = vsel %vm588, %v1957, 0.0
      %v1960 = vadd.f32 %v1958, %v1959
      %v1961 = vrot.slane %v1960, 4
      %v1962 = vadd.f32 %v1960, %v1961
      %v1963 = vrot.slane %v1962, 2
      %v1964 = vadd.f32 %v1962, %v1963
      %v1965 = vrot.slane %v1964, 1
      %v1966 = vadd.f32 %v1964, %v1965
      %v1967 = vsel %vm1015, %v1966, 0.0
      %v1968 = vmul.f32 %v1828, %v1944
      %v1969 = vmul.f32 %v1830, %v1945
      %1970 = vset.pattern.permute.xlu0 1
      %1971 = vperm.xlu0 %1970, %v1875
      %v1972 = vpop.permute.xlu0 %1971
      %1974 = vset.pattern.permute.xlu0 1
      %1975 = vperm.xlu0 %1974, %v1876
      %v1976 = vpop.permute.xlu0 %1975
      %v1978 = vlaneseq
      %v1979 = vshrl.u32 %v1978, 7
      %v1980 = vsub.s32 1, %v1979
      %v1981 = vrot.slane %v1855, %v1980
      %v1982 = vmul.f32 %v1972, %v1981
      %v1983 = vmul.f32 %v1976, %v1981
      %v1984 = vadd.f32 %v1968, %v1982
      %v1985 = vadd.f32 %v1969, %v1983
      %1986 = vset.pattern.permute.xlu0 1
      %1987 = vperm.xlu0 %1986, %v1910
      %v1988 = vpop.permute.xlu0 %1987
      %1990 = vset.pattern.permute.xlu0 1
      %1991 = vperm.xlu0 %1990, %v1911
      %v1992 = vpop.permute.xlu0 %1991
      %v1994 = vmul.f32 %v1988, %v1984
      %v1995 = vmul.f32 %v1992, %v1985
      %v1996 = vsel %vm588, %v1994, 0.0
      %v1997 = vsel %vm588, %v1995, 0.0
      %v1998 = vadd.f32 %v1996, %v1997
      %v1999 = vrot.slane %v1998, 4
      %v2000 = vadd.f32 %v1998, %v1999
      %v2001 = vrot.slane %v2000, 2
      %v2002 = vadd.f32 %v2000, %v2001
      %v2003 = vrot.slane %v2002, 1
      %v2004 = vadd.f32 %v2002, %v2003
      %v2005 = vsel %vm1054, %v2004, %v1967
      %v2006 = vmul.f32 %v1832, %v1984
      %v2007 = vmul.f32 %v1834, %v1985
      %2008 = vset.pattern.permute.xlu0 2
      %2009 = vperm.xlu0 %2008, %v1875
      %v2010 = vpop.permute.xlu0 %2009
      %2012 = vset.pattern.permute.xlu0 2
      %2013 = vperm.xlu0 %2012, %v1876
      %v2014 = vpop.permute.xlu0 %2013
      %v2016 = vlaneseq
      %v2017 = vshrl.u32 %v2016, 7
      %v2018 = vsub.s32 2, %v2017
      %v2019 = vrot.slane %v1855, %v2018
      %v2020 = vmul.f32 %v2010, %v2019
      %v2021 = vmul.f32 %v2014, %v2019
      %v2022 = vadd.f32 %v2006, %v2020
      %v2023 = vadd.f32 %v2007, %v2021
      %2024 = vset.pattern.permute.xlu0 2
      %2025 = vperm.xlu0 %2024, %v1910
      %v2026 = vpop.permute.xlu0 %2025
      %2028 = vset.pattern.permute.xlu0 2
      %2029 = vperm.xlu0 %2028, %v1911
      %v2030 = vpop.permute.xlu0 %2029
      %v2032 = vmul.f32 %v2026, %v2022
      %v2033 = vmul.f32 %v2030, %v2023
      %v2034 = vsel %vm588, %v2032, 0.0
      %v2035 = vsel %vm588, %v2033, 0.0
      %v2036 = vadd.f32 %v2034, %v2035
      %v2037 = vrot.slane %v2036, 4
      %v2038 = vadd.f32 %v2036, %v2037
      %v2039 = vrot.slane %v2038, 2
      %v2040 = vadd.f32 %v2038, %v2039
      %v2041 = vrot.slane %v2040, 1
      %v2042 = vadd.f32 %v2040, %v2041
      %v2043 = vsel %vm1093, %v2042, %v2005
      %v2044 = vmul.f32 %v1836, %v2022
      %v2045 = vmul.f32 %v1838, %v2023
      %2046 = vset.pattern.permute.xlu0 3
      %2047 = vperm.xlu0 %2046, %v1875
      %v2048 = vpop.permute.xlu0 %2047
      %2050 = vset.pattern.permute.xlu0 3
      %2051 = vperm.xlu0 %2050, %v1876
      %v2052 = vpop.permute.xlu0 %2051
      %v2054 = vlaneseq
      %v2055 = vshrl.u32 %v2054, 7
      %v2056 = vsub.s32 3, %v2055
      %v2057 = vrot.slane %v1855, %v2056
      %v2058 = vmul.f32 %v2048, %v2057
      %v2059 = vmul.f32 %v2052, %v2057
      %v2060 = vadd.f32 %v2044, %v2058
      %v2061 = vadd.f32 %v2045, %v2059
      %2062 = vset.pattern.permute.xlu0 3
      %2063 = vperm.xlu0 %2062, %v1910
      %v2064 = vpop.permute.xlu0 %2063
      %2066 = vset.pattern.permute.xlu0 3
      %2067 = vperm.xlu0 %2066, %v1911
      %v2068 = vpop.permute.xlu0 %2067
      %v2070 = vmul.f32 %v2064, %v2060
      %v2071 = vmul.f32 %v2068, %v2061
      %v2072 = vsel %vm588, %v2070, 0.0
      %v2073 = vsel %vm588, %v2071, 0.0
      %v2074 = vadd.f32 %v2072, %v2073
      %v2075 = vrot.slane %v2074, 4
      %v2076 = vadd.f32 %v2074, %v2075
      %v2077 = vrot.slane %v2076, 2
      %v2078 = vadd.f32 %v2076, %v2077
      %v2079 = vrot.slane %v2078, 1
      %v2080 = vadd.f32 %v2078, %v2079
      %v2081 = vsel %vm1132, %v2080, %v2043
      %v2082 = vmul.f32 %v1840, %v2060
      %v2083 = vmul.f32 %v1842, %v2061
      %2084 = vset.pattern.permute.xlu0 4
      %2085 = vperm.xlu0 %2084, %v1875
      %v2086 = vpop.permute.xlu0 %2085
      %2088 = vset.pattern.permute.xlu0 4
      %2089 = vperm.xlu0 %2088, %v1876
      %v2090 = vpop.permute.xlu0 %2089
      %v2092 = vlaneseq
      %v2093 = vshrl.u32 %v2092, 7
      %v2094 = vsub.s32 4, %v2093
      %v2095 = vrot.slane %v1855, %v2094
      %v2096 = vmul.f32 %v2086, %v2095
      %v2097 = vmul.f32 %v2090, %v2095
      %v2098 = vadd.f32 %v2082, %v2096
      %v2099 = vadd.f32 %v2083, %v2097
      %2100 = vset.pattern.permute.xlu0 4
      %2101 = vperm.xlu0 %2100, %v1910
      %v2102 = vpop.permute.xlu0 %2101
      %2104 = vset.pattern.permute.xlu0 4
      %2105 = vperm.xlu0 %2104, %v1911
      %v2106 = vpop.permute.xlu0 %2105
      %v2108 = vmul.f32 %v2102, %v2098
      %v2109 = vmul.f32 %v2106, %v2099
      %v2110 = vsel %vm588, %v2108, 0.0
      %v2111 = vsel %vm588, %v2109, 0.0
      %v2112 = vadd.f32 %v2110, %v2111
      %v2113 = vrot.slane %v2112, 4
      %v2114 = vadd.f32 %v2112, %v2113
      %v2115 = vrot.slane %v2114, 2
      %v2116 = vadd.f32 %v2114, %v2115
      %v2117 = vrot.slane %v2116, 1
      %v2118 = vadd.f32 %v2116, %v2117
      %v2119 = vsel %vm1171, %v2118, %v2081
      %v2120 = vmul.f32 %v1844, %v2098
      %v2121 = vmul.f32 %v1846, %v2099
      %2122 = vset.pattern.permute.xlu0 5
      %2123 = vperm.xlu0 %2122, %v1875
      %v2124 = vpop.permute.xlu0 %2123
      %2126 = vset.pattern.permute.xlu0 5
      %2127 = vperm.xlu0 %2126, %v1876
      %v2128 = vpop.permute.xlu0 %2127
      %v2130 = vlaneseq
      %v2131 = vshrl.u32 %v2130, 7
      %v2132 = vsub.s32 5, %v2131
      %v2133 = vrot.slane %v1855, %v2132
      %v2134 = vmul.f32 %v2124, %v2133
      %v2135 = vmul.f32 %v2128, %v2133
      %v2136 = vadd.f32 %v2120, %v2134
      %v2137 = vadd.f32 %v2121, %v2135
      %2138 = vset.pattern.permute.xlu0 5
      %2139 = vperm.xlu0 %2138, %v1910
      %v2140 = vpop.permute.xlu0 %2139
      %2142 = vset.pattern.permute.xlu0 5
      %2143 = vperm.xlu0 %2142, %v1911
      %v2144 = vpop.permute.xlu0 %2143
      %v2146 = vmul.f32 %v2140, %v2136
      %v2147 = vmul.f32 %v2144, %v2137
      %v2148 = vsel %vm588, %v2146, 0.0
      %v2149 = vsel %vm588, %v2147, 0.0
      %v2150 = vadd.f32 %v2148, %v2149
      %v2151 = vrot.slane %v2150, 4
      %v2152 = vadd.f32 %v2150, %v2151
      %v2153 = vrot.slane %v2152, 2
      %v2154 = vadd.f32 %v2152, %v2153
      %v2155 = vrot.slane %v2154, 1
      %v2156 = vadd.f32 %v2154, %v2155
      %v2157 = vsel %vm1210, %v2156, %v2119
      %v2158 = vmul.f32 %v1848, %v2136
      %v2159 = vmul.f32 %v1850, %v2137
      %2160 = vset.pattern.permute.xlu0 6
      %2161 = vperm.xlu0 %2160, %v1875
      %v2162 = vpop.permute.xlu0 %2161
      %2164 = vset.pattern.permute.xlu0 6
      %2165 = vperm.xlu0 %2164, %v1876
      %v2166 = vpop.permute.xlu0 %2165
      %v2168 = vlaneseq
      %v2169 = vshrl.u32 %v2168, 7
      %v2170 = vsub.s32 6, %v2169
      %v2171 = vrot.slane %v1855, %v2170
      %v2172 = vmul.f32 %v2162, %v2171
      %v2173 = vmul.f32 %v2166, %v2171
      %v2174 = vadd.f32 %v2158, %v2172
      %v2175 = vadd.f32 %v2159, %v2173
      %2176 = vset.pattern.permute.xlu0 6
      %2177 = vperm.xlu0 %2176, %v1910
      %v2178 = vpop.permute.xlu0 %2177
      %2180 = vset.pattern.permute.xlu0 6
      %2181 = vperm.xlu0 %2180, %v1911
      %v2182 = vpop.permute.xlu0 %2181
      %v2184 = vmul.f32 %v2178, %v2174
      %v2185 = vmul.f32 %v2182, %v2175
      %v2186 = vsel %vm588, %v2184, 0.0
      %v2187 = vsel %vm588, %v2185, 0.0
      %v2188 = vadd.f32 %v2186, %v2187
      %v2189 = vrot.slane %v2188, 4
      %v2190 = vadd.f32 %v2188, %v2189
      %v2191 = vrot.slane %v2190, 2
      %v2192 = vadd.f32 %v2190, %v2191
      %v2193 = vrot.slane %v2192, 1
      %v2194 = vadd.f32 %v2192, %v2193
      %v2195 = vsel %vm1249, %v2194, %v2157
      %v2196 = vmul.f32 %v1852, %v2174
      %v2197 = vmul.f32 %v1854, %v2175
      %2198 = vset.pattern.permute.xlu0 7
      %2199 = vperm.xlu0 %2198, %v1875
      %v2200 = vpop.permute.xlu0 %2199
      %2202 = vset.pattern.permute.xlu0 7
      %2203 = vperm.xlu0 %2202, %v1876
      %v2204 = vpop.permute.xlu0 %2203
      %v2206 = vlaneseq
      %v2207 = vshrl.u32 %v2206, 7
      %v2208 = vsub.s32 7, %v2207
      %v2209 = vrot.slane %v1855, %v2208
      %v2210 = vmul.f32 %v2200, %v2209
      %v2211 = vmul.f32 %v2204, %v2209
      %v2212 = vadd.f32 %v2196, %v2210
      %v2213 = vadd.f32 %v2197, %v2211
      %2214 = vset.pattern.permute.xlu0 7
      %2215 = vperm.xlu0 %2214, %v1910
      %v2216 = vpop.permute.xlu0 %2215
      %2218 = vset.pattern.permute.xlu0 7
      %2219 = vperm.xlu0 %2218, %v1911
      %v2220 = vpop.permute.xlu0 %2219
      %v2222 = vmul.f32 %v2216, %v2212
      %v2223 = vmul.f32 %v2220, %v2213
      %v2224 = vsel %vm588, %v2222, 0.0
      %v2225 = vsel %vm588, %v2223, 0.0
      %v2226 = vadd.f32 %v2224, %v2225
      %v2227 = vrot.slane %v2226, 4
      %v2228 = vadd.f32 %v2226, %v2227
      %v2229 = vrot.slane %v2228, 2
      %v2230 = vadd.f32 %v2228, %v2229
      %v2231 = vrot.slane %v2230, 1
      %v2232 = vadd.f32 %v2230, %v2231
      %v2233 = vsel %vm1288, %v2232, %v2195
      %s2234 = scalar_lea.vmem %s9, 1
      %v2235 = vld [vmem:[%s2234] sm:$0x1]
      %v2237 = vlaneseq
      %v2238 = vshrl.u32 %v2237, 7
      %v2239 = vsub.s32 0, %v2238
      %v2240 = vrot.slane %v2235, %v2239
      %v2242 = vmul.f32 %v1530, %v2240
      %v2243 = vadd.f32 %v2233, %v2242
      %v2244 = vmul.f32 %v1483, 0.5
      %v2245 = vtanh.pop %v2244
      %v2246 = vadd.f32 %v2245, 1.0
      %v2247 = vmul.f32 %v2246, 0.5
      %v2248 = vmul.f32 %v1483, %v2247
      %2250 = vrot.lane.b32.xlu0 %v2248, 64
      %v2251 = vpop.permute.xlu0 %2250
      %v2253 = vmul.f32 %v2243, %v2251
      %s2254 = scalar_lea.vmem %s10, 64
      %v2255 = vld [vmem:[%s2254] sm:$0xff]
      %v2256 = vld [vmem:[%s2254 + $0x8] sm:$0xff]
      %v2257 = vld [vmem:[%s2254 + $0x10] sm:$0xff]
      %v2258 = vld [vmem:[%s2254 + $0x18] sm:$0xff]
      %v2259 = vld [vmem:[%s2254 + $0x20] sm:$0xff]
      %v2260 = vld [vmem:[%s2254 + $0x28] sm:$0xff]
      %v2261 = vld [vmem:[%s2254 + $0x30] sm:$0xff]
      %v2262 = vld [vmem:[%s2254 + $0x38] sm:$0xff]
      %v2264 = vsel %vm588, %v2253, 0
      %2266 = vmatprep.subr.mxu0 0.0
      %2267 = vmatpush1.msra.mxu0 %v2255
      %2268 = vmatprep.subr.mxu0 0.0
      %2269 = vmatpush1.msra.mxu0 %v2256
      %2270 = vmatprep.subr.mxu0 0.0
      %2271 = vmatpush1.msra.mxu0 %v2257
      %2272 = vmatprep.subr.mxu0 0.0
      %2273 = vmatpush1.msra.mxu0 %v2258
      %2274 = vmatprep.subr.mxu0 0.0
      %2275 = vmatpush1.msra.mxu0 %v2259
      %2276 = vmatprep.subr.mxu0 0.0
      %2277 = vmatpush1.msra.mxu0 %v2260
      %2278 = vmatprep.subr.mxu0 0.0
      %2279 = vmatpush1.msra.mxu0 %v2261
      %2280 = vmatprep.subr.mxu0 0.0
      %2281 = vmatpush1.msra.mxu0 %v2262
      %2282 = vmatprep.subr.mxu0 0.0
      %2283 = vmatpush1.msra.mxu0 0.0
      %2284 = vmatprep.subr.mxu0 0.0
      %2285 = vmatpush1.msra.mxu0 0.0
      %2286 = vmatprep.subr.mxu0 0.0
      %2287 = vmatpush1.msra.mxu0 0.0
      %2288 = vmatprep.subr.mxu0 0.0
      %2289 = vmatpush1.msra.mxu0 0.0
      %2290 = vmatprep.subr.mxu0 0.0
      %2291 = vmatpush1.msra.mxu0 0.0
      %2292 = vmatprep.subr.mxu0 0.0
      %2293 = vmatpush1.msra.mxu0 0.0
      %2294 = vmatprep.subr.mxu0 0.0
      %2295 = vmatpush1.msra.mxu0 0.0
      %2296 = vmatprep.subr.mxu0 0.0
      %2297 = vmatpush1.msra.mxu0 0.0
      %2298 = vmatprep.subr.mxu0 0.0
      %2299 = vmatpush1.msra.mxu0 0.0
      %2300 = vmatprep.subr.mxu0 0.0
      %2301 = vmatpush1.msra.mxu0 0.0
      %2302 = vmatprep.subr.mxu0 0.0
      %2303 = vmatpush1.msra.mxu0 0.0
      %2304 = vmatprep.subr.mxu0 0.0
      %2305 = vmatpush1.msra.mxu0 0.0
      %2306 = vmatprep.subr.mxu0 0.0
      %2307 = vmatpush1.msra.mxu0 0.0
      %2308 = vmatprep.subr.mxu0 0.0
      %2309 = vmatpush1.msra.mxu0 0.0
      %2310 = vmatprep.subr.mxu0 0.0
      %2311 = vmatpush1.msra.mxu0 0.0
      %2312 = vmatprep.subr.mxu0 0.0
      %2313 = vmatpush1.msra.mxu0 0.0
      %2314 = vmatprep.subr.mxu0 0.0
      %2315 = vmatpush1.msra.mxu0 0.0
      %2316 = vmatprep.subr.mxu0 0.0
      %2317 = vmatpush1.msra.mxu0 0.0
      %2318 = vmatprep.subr.mxu0 0.0
      %2319 = vmatpush1.msra.mxu0 0.0
      %2320 = vmatprep.subr.mxu0 0.0
      %2321 = vmatpush1.msra.mxu0 0.0
      %2322 = vmatprep.subr.mxu0 0.0
      %2323 = vmatpush1.msra.mxu0 0.0
      %2324 = vmatprep.subr.mxu0 0.0
      %2325 = vmatpush1.msra.mxu0 0.0
      %2326 = vmatprep.subr.mxu0 0.0
      %2327 = vmatpush1.msra.mxu0 0.0
      %2328 = vmatprep.subr.mxu0 0.0
      %2329 = vmatpush1.msra.mxu0 0.0
      %2330 = vmatprep.mubr.f32.mxu0 0.0
      %2331 = vmatmul.mubr.f32.gmra.mrb[0].mxu0 %v2264
      %v2332 = vpop.f32.mrb[0].mxu0
      %v2333 = vadd.f32 0.0, %v2332
      %v2334 = vpop.f32.mrb[0].mxu0
      %2335 = vdwg.mxu0
      %v2336 = vadd.f32 %v1390, %v2333
      %v2337 = vld [vmem:[%s11] sm:$0xff]
      %v2338 = vld [vmem:[%s11 + $0x8] sm:$0xff]
      %v2339 = vld [vmem:[%s11 + $0x10] sm:$0xff]
      %v2340 = vld [vmem:[%s11 + $0x18] sm:$0xff]
      %v2341 = vld [vmem:[%s12] sm:$0x1]
      %v2343 = vlaneseq
      %v2344 = vshrl.u32 %v2343, 7
      %v2345 = vsub.s32 0, %v2344
      %v2346 = vrot.slane %v2341, %v2345
      %v2349 = vsel %vm440, %v2336, 0
      %2351 = vmatprep.subr.mxu0 0.0
      %2352 = vmatpush1.msra.mxu0 %v2337
      %2353 = vmatprep.subr.mxu0 0.0
      %2354 = vmatpush1.msra.mxu0 %v2338
      %2355 = vmatprep.subr.mxu0 0.0
      %2356 = vmatpush1.msra.mxu0 %v2339
      %2357 = vmatprep.subr.mxu0 0.0
      %2358 = vmatpush1.msra.mxu0 %v2340
      %2359 = vmatprep.subr.mxu0 0.0
      %2360 = vmatpush1.msra.mxu0 0.0
      %2361 = vmatprep.subr.mxu0 0.0
      %2362 = vmatpush1.msra.mxu0 0.0
      %2363 = vmatprep.subr.mxu0 0.0
      %2364 = vmatpush1.msra.mxu0 0.0
      %2365 = vmatprep.subr.mxu0 0.0
      %2366 = vmatpush1.msra.mxu0 0.0
      %2367 = vmatprep.subr.mxu0 0.0
      %2368 = vmatpush1.msra.mxu0 0.0
      %2369 = vmatprep.subr.mxu0 0.0
      %2370 = vmatpush1.msra.mxu0 0.0
      %2371 = vmatprep.subr.mxu0 0.0
      %2372 = vmatpush1.msra.mxu0 0.0
      %2373 = vmatprep.subr.mxu0 0.0
      %2374 = vmatpush1.msra.mxu0 0.0
      %2375 = vmatprep.subr.mxu0 0.0
      %2376 = vmatpush1.msra.mxu0 0.0
      %2377 = vmatprep.subr.mxu0 0.0
      %2378 = vmatpush1.msra.mxu0 0.0
      %2379 = vmatprep.subr.mxu0 0.0
      %2380 = vmatpush1.msra.mxu0 0.0
      %2381 = vmatprep.subr.mxu0 0.0
      %2382 = vmatpush1.msra.mxu0 0.0
      %2383 = vmatprep.subr.mxu0 0.0
      %2384 = vmatpush1.msra.mxu0 0.0
      %2385 = vmatprep.subr.mxu0 0.0
      %2386 = vmatpush1.msra.mxu0 0.0
      %2387 = vmatprep.subr.mxu0 0.0
      %2388 = vmatpush1.msra.mxu0 0.0
      %2389 = vmatprep.subr.mxu0 0.0
      %2390 = vmatpush1.msra.mxu0 0.0
      %2391 = vmatprep.subr.mxu0 0.0
      %2392 = vmatpush1.msra.mxu0 0.0
      %2393 = vmatprep.subr.mxu0 0.0
      %2394 = vmatpush1.msra.mxu0 0.0
      %2395 = vmatprep.subr.mxu0 0.0
      %2396 = vmatpush1.msra.mxu0 0.0
      %2397 = vmatprep.subr.mxu0 0.0
      %2398 = vmatpush1.msra.mxu0 0.0
      %2399 = vmatprep.subr.mxu0 0.0
      %2400 = vmatpush1.msra.mxu0 0.0
      %2401 = vmatprep.subr.mxu0 0.0
      %2402 = vmatpush1.msra.mxu0 0.0
      %2403 = vmatprep.subr.mxu0 0.0
      %2404 = vmatpush1.msra.mxu0 0.0
      %2405 = vmatprep.subr.mxu0 0.0
      %2406 = vmatpush1.msra.mxu0 0.0
      %2407 = vmatprep.subr.mxu0 0.0
      %2408 = vmatpush1.msra.mxu0 0.0
      %2409 = vmatprep.subr.mxu0 0.0
      %2410 = vmatpush1.msra.mxu0 0.0
      %2411 = vmatprep.subr.mxu0 0.0
      %2412 = vmatpush1.msra.mxu0 0.0
      %2413 = vmatprep.subr.mxu0 0.0
      %2414 = vmatpush1.msra.mxu0 0.0
      %2415 = vmatprep.mubr.f32.mxu0 0.0
      %2416 = vmatmul.mubr.f32.gmra.mrb[0].mxu0 %v2349
      %v2417 = vpop.f32.mrb[0].mxu0
      %v2418 = vadd.f32 %v2346, %v2417
      %v2419 = vpop.f32.mrb[0].mxu0
      %2420 = vdwg.mxu0
      %2421 = vst [vmem:[%s435] sm:$0xff] %v2418
      %p2422 = scmp.lt.s32.totalorder %s24, 1
      %s2423 = scalar_select %p2422, %s24, 1
      %s2424 = smul.addr %s2423, 8
      %s2425 = scalar_lea.vmem %s13, %s2424
      // Predicated region
      $region73: #{forward.1} parent=71 // pred_check
        %p2426 = pneg %p320
      $region74: #{forward.1} parent=71 // pred_check_branch
        %2428 = sbr.rel (%p2426) target = $region76
      $region75: #{forward.1} parent=71 // pred_region
        _
      $region76: #{forward.1} parent=71 // pred_fallthru
        _
    $region72: #{forward.1} parent=5 // pred_fallthru
      _
    %p2429 = scmp.le.s32.totalorder 2, %s19
    // Predicated region
    $region77: #{forward.1} parent=5 // pred_check
      %p2430 = pneg %p2429
    $region78: #{forward.1} parent=5 // pred_check_branch
      %2432 = sbr.rel (%p2430) target = $region80
    $region79: #{forward.1} parent=5 // pred_region
      %s2433 = ssub.s32 %s19, 2
      // Predicated region
      $region81: #{forward.1} parent=79 // pred_check
        %p2434 = pneg %p326
      $region82: #{forward.1} parent=79 // pred_check_branch
        %2436 = sbr.rel (%p2434) target = $region84
      $region83: #{forward.1} parent=79 // pred_region
        %p2437 = scmp.lt.s32.totalorder %s25, 1
        %s2438 = scalar_select %p2437, %s25, 1
        %s2439 = smul.addr %s2438, 8
        %s2440 = scalar_lea.vmem %s13, %s2439
      $region84: #{forward.1} parent=79 // pred_fallthru
        _
    $region80: #{forward.1} parent=5 // pred_fallthru
      _
  $region6: #{forward.1} parent=0 // loop_footer
    %s23 = sadd.s32 1, %s19
  $region7: #{forward.1} parent=0 // loop_footer_branch
    %18 = sbr.rel target = $region3
  $region8: #{forward.1} parent=0 // loop_exit
    _

</llo_original>
